<compile_context>
chip_gen: v6e
topology: v6e:2x2x1
jax: 0.10.0
libtpu: 0.0.40
codegen_flags: <defaults>
</compile_context>

<pallas_src>
import math

import jax
import jax.numpy as jnp
from jax.experimental import pallas as pl

SpecialToken = {"PAD": 0, "MASK": 3}

# --- small, deterministic hyperparameters (consistent with MSBERT.__init__) ---
VOCAB = 64
HIDDEN = 32
N_LAYERS = 2
HEADS = 4
D_K = HIDDEN // HEADS
D_FF = HIDDEN * 4
MAX_LEN = 8
MAX_PRED = 4
B = 2
S = MAX_LEN
BRANCHES = 2                          # the two Mask() branches in MSBERT.forward
ROWS = BRANCHES * B * S               # 32: both branches' activations stacked on rows
OUT_ROWS = BRANCHES * B * MAX_PRED    # 16 masked-LM rows (pool rides in the same slab)
OUT_LANES = 128                       # lane-dense packed output width
LN_EPS = 1e-5
NEG_INF = -1e9

LAYER_KEYS = ("ln1g", "ln1b", "wq", "bq", "wk", "bk", "wv", "bv",
              "wo", "bo", "ln2g", "ln2b", "w1", "b1", "w2", "b2")


# ---------------------------------------------------------------------------
# In-kernel math helpers (only ops with guaranteed Mosaic lowerings)
# ---------------------------------------------------------------------------
def _erf(x):
    # Abramowitz & Stegun 7.1.26 rational approximation, |err| < 1.5e-7.
    a1, a2, a3, a4, a5 = (0.254829592, -0.284496736, 1.421413741,
                          -1.453152027, 1.061405429)
    p = 0.3275911
    sgn = jnp.where(x < 0.0, -1.0, 1.0)
    ax = jnp.abs(x)
    t = 1.0 / (1.0 + p * ax)
    poly = ((((a5 * t + a4) * t + a3) * t + a2) * t + a1) * t
    return sgn * (1.0 - poly * jnp.exp(-ax * ax))


def _gelu(x):
    # exact (erf-based) GELU, matching torch.nn.GELU default
    return 0.5 * x * (1.0 + _erf(x * (1.0 / math.sqrt(2.0))))


def _layer_norm(v, g, b):
    mu = jnp.mean(v, axis=-1, keepdims=True)
    d = v - mu
    var = jnp.mean(d * d, axis=-1, keepdims=True)
    return d * jax.lax.rsqrt(var + LN_EPS) * g + b


# ---------------------------------------------------------------------------
# The single fused kernel: whole model, both branches, one invocation
# ---------------------------------------------------------------------------
def msbert_kernel(xin_ref, emb_ref, bias_ref, rep_ref, rept_ref, hmask_ref,
                  poolw_ref, sel_ref, linw_ref, linb_ref, fc2w_ref, place_ref,
                  ln1g_ref, ln1b_ref, wq_ref, bq_ref, wk_ref, bk_ref,
                  wv_ref, bv_ref, wo_ref, bo_ref, ln2g_ref, ln2b_ref,
                  w1_ref, b1_ref, w2_ref, b2_ref,
                  out_ref):
    f32 = jnp.float32

    # embedding + intensity_linear fused into one lane-dense matmul
    x = jnp.dot(xin_ref[...], emb_ref[...], preferred_element_type=f32)   # (ROWS, H)

    rep = rep_ref[...]        # (HEADS*ROWS, ROWS)   head replication
    rept = rept_ref[...]      # (ROWS, HEADS*ROWS)   head collapse (= rep.T)
    hmask = hmask_ref[...]    # (HEADS*ROWS, HIDDEN) per-head column mask
    bias = bias_ref[...]      # (HEADS*ROWS, ROWS)   additive attention bias (0 / -1e9)

    for l in range(N_LAYERS):
        # --- self-attention sublayer: x + Wo(MHA(LN(x))) ---
        xn = _layer_norm(x, ln1g_ref[l], ln1b_ref[l])
        q = jnp.dot(xn, wq_ref[l], preferred_element_type=f32) + bq_ref[l]   # 1/sqrt(dk) folded
        k = jnp.dot(xn, wk_ref[l], preferred_element_type=f32) + bk_ref[l]
        v = jnp.dot(xn, wv_ref[l], preferred_element_type=f32) + bv_ref[l]

        # heads stacked along sublanes: ONE score matmul + ONE softmax per layer
        q_stack = jnp.dot(rep, q, preferred_element_type=f32) * hmask        # (H*R, H)
        s = jax.lax.dot_general(q_stack, k, (((1,), (1,)), ((), ())),
                                preferred_element_type=f32) + bias           # (H*R, R)
        m = jnp.max(s, axis=-1, keepdims=True)
        e = jnp.exp(s - m)
        p = e / jnp.sum(e, axis=-1, keepdims=True)                           # exact softmax
        ctx_stack = jnp.dot(p, v, preferred_element_type=f32) * hmask        # (H*R, H)
        ctx = jnp.dot(rept, ctx_stack, preferred_element_type=f32)           # (R, H) concat heads
        x = x + jnp.dot(ctx, wo_ref[l], preferred_element_type=f32) + bo_ref[l]

        # --- feed-forward sublayer: x + W2(GELU(W1(LN(x)))) ---
        xn2 = _layer_norm(x, ln2g_ref[l], ln2b_ref[l])
        h1 = _gelu(jnp.dot(xn2, w1_ref[l], preferred_element_type=f32) + b1_ref[l])
        x = x + jnp.dot(h1, w2_ref[l], preferred_element_type=f32) + b2_ref[l]

    # --- epilogue: intensity pooling + masked-LM head, one dense (16,128) store ---
    pool16 = jnp.dot(poolw_ref[...], x, preferred_element_type=f32)          # rows >= 2*B are 0
    hm_in = jnp.dot(sel_ref[...], x, preferred_element_type=f32)             # one-hot gather
    hm = _gelu(jnp.dot(hm_in, linw_ref[...], preferred_element_type=f32) + linb_ref[...])
    out_ref[...] = (jnp.dot(hm, fc2w_ref[...], preferred_element_type=f32)    # logits -> lanes 0:64
                    + jnp.dot(pool16, place_ref[...], preferred_element_type=f32))  # pool -> 64:96


# ---------------------------------------------------------------------------
# pallas_call wrapper: no grid, all (tiny) operands whole-array VMEM resident
# ---------------------------------------------------------------------------
def msbert_fused(params, xin, bias_stack, poolw, sel):
    L = params["layers"]
    return pl.pallas_call(
        msbert_kernel,
        out_shape=jax.ShapeDtypeStruct((OUT_ROWS, OUT_LANES), jnp.float32),
    )(xin, params["emb_aug"], bias_stack, params["rep"], params["rep_t"],
      params["hmask"], poolw, sel, params["lin_w"], params["lin_b"],
      params["fc2_wide"], params["place"],
      *[L[name] for name in LAYER_KEYS])


# ---------------------------------------------------------------------------
# Parameters (deterministic synthetic init; scale folded, constants prebuilt)
# ---------------------------------------------------------------------------
def init_params(key):
    keys = jax.random.split(key, 6 + N_LAYERS)

    def normal(k, shape, scale=0.02):
        return (scale * jax.random.normal(k, shape)).astype(jnp.float32)

    params = {}

    # token embedding (padding_idx=0) + intensity_linear fused into a 128-row table
    emb = normal(keys[0], (VOCAB, HIDDEN)).at[SpecialToken["PAD"]].set(0.0)
    int_w = normal(keys[1], (HIDDEN,))            # intensity_linear weight (in_features=1)
    int_b = normal(keys[2], (HIDDEN,))
    emb_aug = jnp.zeros((128, HIDDEN), jnp.float32)
    params["emb_aug"] = (emb_aug.at[:VOCAB].set(emb)
                         .at[VOCAB].set(int_w)
                         .at[VOCAB + 1].set(int_b))

    params["lin_w"] = normal(keys[3], (HIDDEN, HIDDEN))
    params["lin_b"] = normal(keys[4], (1, HIDDEN))
    fc2 = normal(keys[5], (HIDDEN, VOCAB))        # bias=False
    params["fc2_wide"] = jnp.zeros((HIDDEN, OUT_LANES), jnp.float32).at[:, :VOCAB].set(fc2)

    # constant relayout matrices: head replication/collapse, per-head column mask,
    # and pool placement into lanes [VOCAB, VOCAB+HIDDEN) of the packed output.
    hr = jnp.arange(HEADS * ROWS)
    params["rep"] = (hr[:, None] % ROWS == jnp.arange(ROWS)[None, :]).astype(jnp.float32)
    params["rep_t"] = params["rep"].T
    params["hmask"] = (hr[:, None] // ROWS ==
                       jnp.arange(HIDDEN)[None, :] // D_K).astype(jnp.float32)
    params["place"] = jnp.zeros((HIDDEN, OUT_LANES), jnp.float32).at[
        jnp.arange(HIDDEN), VOCAB + jnp.arange(HIDDEN)].set(1.0)

    scale = 1.0 / math.sqrt(D_K)                  # folded into Wq / bq
    layer = {k: [] for k in LAYER_KEYS}
    for l in range(N_LAYERS):
        lk = jax.random.split(keys[6 + l], 10)
        layer["ln1g"].append(jnp.ones((1, HIDDEN), jnp.float32))
        layer["ln1b"].append(jnp.zeros((1, HIDDEN), jnp.float32))
        layer["wq"].append(normal(lk[0], (HIDDEN, HIDDEN)) * scale)
        layer["bq"].append(normal(lk[1], (1, HIDDEN)) * scale)
        layer["wk"].append(normal(lk[2], (HIDDEN, HIDDEN)))
        layer["bk"].append(normal(lk[3], (1, HIDDEN)))
        layer["wv"].append(normal(lk[4], (HIDDEN, HIDDEN)))
        layer["bv"].append(normal(lk[5], (1, HIDDEN)))
        layer["wo"].append(normal(lk[6], (HIDDEN, HIDDEN)))
        layer["bo"].append(normal(lk[7], (1, HIDDEN)))
        layer["ln2g"].append(jnp.ones((1, HIDDEN), jnp.float32))
        layer["ln2b"].append(jnp.zeros((1, HIDDEN), jnp.float32))
        layer["w1"].append(normal(lk[8], (HIDDEN, D_FF)))
        layer["b1"].append(jnp.zeros((1, D_FF), jnp.float32))
        layer["w2"].append(normal(lk[9], (D_FF, HIDDEN)))
        layer["b2"].append(jnp.zeros((1, HIDDEN), jnp.float32))
    params["layers"] = {k: jnp.stack(v) for k, v in layer.items()}
    return params


# ---------------------------------------------------------------------------
# Mask module (random masking; plain-JAX glue mirroring the torch loop)
# ---------------------------------------------------------------------------
def mask_module(key, input_id, intensity):
    inten = intensity[:, 0, :]                                  # (B, S)
    mask_x_l, tok_l, pos_l = [], [], []
    len_mask = 2
    for p in range(B):
        key, k1 = jax.random.split(key)
        order = jnp.argsort(-inten[p])                          # descending argsort
        pick = jax.random.permutation(k1, 5)[:len_mask]         # 2 of the top-5 peaks
        pos = order[pick].astype(jnp.int32)
        mbool = jnp.zeros((S,), jnp.bool_).at[pos].set(True)
        mask_x_l.append(jnp.where(mbool, SpecialToken["MASK"], input_id[p]))
        tok = input_id[p][pos]
        n_pad = MAX_PRED - len_mask
        tok_l.append(jnp.concatenate([tok, jnp.zeros((n_pad,), input_id.dtype)]))
        pos_l.append(jnp.concatenate([pos, jnp.zeros((n_pad,), jnp.int32)]))
    return (jnp.stack(mask_x_l), jnp.stack(tok_l).astype(jnp.int32),
            jnp.stack(pos_l), key)


# ---------------------------------------------------------------------------
# Full MSBERT forward: all model compute happens inside ONE pallas_call
# ---------------------------------------------------------------------------
def msbert_forward(params, input_id, intensity, key):
    mask_x1, tok1, pos1, key = mask_module(key, input_id, intensity)
    mask_x2, tok2, pos2, key = mask_module(key, input_id, intensity)

    # Both branches stacked on the row axis: row = g*B*S + b*S + t
    ids_flat = jnp.stack([mask_x1, mask_x2]).astype(jnp.int32).reshape(ROWS)
    pos_all = jnp.stack([pos1, pos2])                                   # (2, B, MAX_PRED)
    inten_row = intensity[:, 0, :]                                      # (B, S)
    inten_flat = jnp.tile(inten_row.reshape(-1), (BRANCHES,))           # (ROWS,)

    # lane-dense embedding input: [one-hot(64) | intensity | 1 | 0-pad] -> (ROWS, 128)
    onehot = (ids_flat[:, None] == jnp.arange(VOCAB)[None, :]).astype(jnp.float32)
    xin = jnp.zeros((ROWS, OUT_LANES), jnp.float32)
    xin = xin.at[:, :VOCAB].set(onehot)
    xin = xin.at[:, VOCAB].set(inten_flat)
    xin = xin.at[:, VOCAB + 1].set(1.0)

    # additive attention bias: PAD keys, cross-batch and cross-branch blocks -> -1e9
    grp = jnp.arange(ROWS) // S
    blocked = (grp[:, None] != grp[None, :]) | (ids_flat == SpecialToken["PAD"])[None, :]
    bias = jnp.where(blocked, NEG_INF, 0.0).astype(jnp.float32)         # (ROWS, ROWS)
    bias_stack = jnp.tile(bias, (HEADS, 1))                             # (HEADS*ROWS, ROWS)

    # intensity pooling weights (rows 0..2*B-1 live, rest zero); /intensity.shape[1] folded in
    inten_div = inten_flat / float(intensity.shape[1])
    poolw = ((jnp.arange(ROWS)[None, :] // S) == jnp.arange(OUT_ROWS)[:, None]
             ).astype(jnp.float32) * inten_div[None, :]                 # (OUT_ROWS, ROWS)

    # masked-position one-hot gather matrix (replaces the in-kernel pl.ds gather)
    row_base = (jnp.arange(BRANCHES)[:, None, None] * (B * S)
                + jnp.arange(B)[None, :, None] * S)
    src_rows = (row_base + pos_all).reshape(OUT_ROWS)
    sel = (jnp.arange(ROWS)[None, :] == src_rows[:, None]).astype(jnp.float32)

    out = msbert_fused(params, xin, bias_stack, poolw, sel)             # (16, 128)

    logits = out[:, :VOCAB].reshape(BRANCHES, B, MAX_PRED, VOCAB)
    pool = out[:BRANCHES * B, VOCAB:VOCAB + HIDDEN].reshape(BRANCHES, B, HIDDEN)
    return logits[0], tok1, pool[0], logits[1], tok2, pool[1]


if __name__ == "__main__":
    key = jax.random.PRNGKey(0)
    kp, kid, kint, kmask = jax.random.split(key, 4)
    params = init_params(kp)

    input_id = jax.random.randint(kid, (B, S), 4, VOCAB, dtype=jnp.int32)
    input_id = input_id.at[:, -1].set(SpecialToken["PAD"])      # some padding
    intensity = jax.random.uniform(kint, (B, 1, S), dtype=jnp.float32)

    fwd = jax.jit(msbert_forward)
    outs = jax.block_until_ready(fwd(params, input_id, intensity, kmask))

    logits1, tok1, pool1, logits2, tok2, pool2 = outs
    assert logits1.shape == (B, MAX_PRED, VOCAB)
    assert tok1.shape == (B, MAX_PRED)
    assert pool1.shape == (B, HIDDEN)
    assert logits2.shape == (B, MAX_PRED, VOCAB)
    assert tok2.shape == (B, MAX_PRED)
    assert pool2.shape == (B, HIDDEN)
    for t in (logits1, pool1, logits2, pool2):
        assert bool(jnp.all(jnp.isfinite(t)))
    print("KERNEL_OK")
</pallas_src>

<mosaic_0001>
module attributes {stable_mosaic.version = 11 : i64} {
  func.func @msbert_kernel(%arg0: memref<32x128xf32, #tpu.memory_space<vmem>>, %arg1: memref<128x32xf32, #tpu.memory_space<vmem>>, %arg2: memref<128x32xf32, #tpu.memory_space<vmem>>, %arg3: memref<128x32xf32, #tpu.memory_space<vmem>>, %arg4: memref<32x128xf32, #tpu.memory_space<vmem>>, %arg5: memref<128x32xf32, #tpu.memory_space<vmem>>, %arg6: memref<16x32xf32, #tpu.memory_space<vmem>>, %arg7: memref<16x32xf32, #tpu.memory_space<vmem>>, %arg8: memref<32x32xf32, #tpu.memory_space<vmem>>, %arg9: memref<1x32xf32, #tpu.memory_space<vmem>>, %arg10: memref<32x128xf32, #tpu.memory_space<vmem>>, %arg11: memref<32x128xf32, #tpu.memory_space<vmem>>, %arg12: memref<2x1x32xf32, #tpu.memory_space<vmem>>, %arg13: memref<2x1x32xf32, #tpu.memory_space<vmem>>, %arg14: memref<2x32x32xf32, #tpu.memory_space<vmem>>, %arg15: memref<2x1x32xf32, #tpu.memory_space<vmem>>, %arg16: memref<2x32x32xf32, #tpu.memory_space<vmem>>, %arg17: memref<2x1x32xf32, #tpu.memory_space<vmem>>, %arg18: memref<2x32x32xf32, #tpu.memory_space<vmem>>, %arg19: memref<2x1x32xf32, #tpu.memory_space<vmem>>, %arg20: memref<2x32x32xf32, #tpu.memory_space<vmem>>, %arg21: memref<2x1x32xf32, #tpu.memory_space<vmem>>, %arg22: memref<2x1x32xf32, #tpu.memory_space<vmem>>, %arg23: memref<2x1x32xf32, #tpu.memory_space<vmem>>, %arg24: memref<2x32x128xf32, #tpu.memory_space<vmem>>, %arg25: memref<2x1x128xf32, #tpu.memory_space<vmem>>, %arg26: memref<2x128x32xf32, #tpu.memory_space<vmem>>, %arg27: memref<2x1x32xf32, #tpu.memory_space<vmem>>, %arg28: memref<16x128xf32, #tpu.memory_space<vmem>>) attributes {dimension_semantics = [], scalar_prefetch = 0 : i64, scratch_operands = 0 : i64, tpu.core_type = #tpu.core_type<tc>} {
    %c0 = arith.constant 0 : index
    %c0_0 = arith.constant 0 : index
    %0 = vector.load %arg0[%c0, %c0_0] : memref<32x128xf32, #tpu.memory_space<vmem>>, vector<32x128xf32>
    %c0_1 = arith.constant 0 : index
    %c0_2 = arith.constant 0 : index
    %1 = vector.load %arg1[%c0_1, %c0_2] : memref<128x32xf32, #tpu.memory_space<vmem>>, vector<128x32xf32>
    %cst = arith.constant dense<0.000000e+00> : vector<32x32xf32>
    %2 = tpu.matmul %0, %1, %cst {dimension_numbers = #tpu.dot_dimension_numbers<[1], [0], [0], [1], [0, 0, 1, 1], [], []>} : vector<32x128xf32>, vector<128x32xf32>, vector<32x32xf32> -> vector<32x32xf32>
    %c0_3 = arith.constant 0 : index
    %c0_4 = arith.constant 0 : index
    %3 = vector.load %arg3[%c0_3, %c0_4] : memref<128x32xf32, #tpu.memory_space<vmem>>, vector<128x32xf32>
    %c0_5 = arith.constant 0 : index
    %c0_6 = arith.constant 0 : index
    %4 = vector.load %arg4[%c0_5, %c0_6] : memref<32x128xf32, #tpu.memory_space<vmem>>, vector<32x128xf32>
    %c0_7 = arith.constant 0 : index
    %c0_8 = arith.constant 0 : index
    %5 = vector.load %arg5[%c0_7, %c0_8] : memref<128x32xf32, #tpu.memory_space<vmem>>, vector<128x32xf32>
    %c0_9 = arith.constant 0 : index
    %c0_10 = arith.constant 0 : index
    %6 = vector.load %arg2[%c0_9, %c0_10] : memref<128x32xf32, #tpu.memory_space<vmem>>, vector<128x32xf32>
    %c0_11 = arith.constant 0 : index
    %c0_12 = arith.constant 0 : index
    %c0_13 = arith.constant 0 : index
    %7 = vector.load %arg12[%c0_11, %c0_12, %c0_13] : memref<2x1x32xf32, #tpu.memory_space<vmem>>, vector<1x1x32xf32>
    %8 = vector.shape_cast %7 : vector<1x1x32xf32> to vector<1x32xf32>
    %c0_14 = arith.constant 0 : index
    %c0_15 = arith.constant 0 : index
    %c0_16 = arith.constant 0 : index
    %9 = vector.load %arg13[%c0_14, %c0_15, %c0_16] : memref<2x1x32xf32, #tpu.memory_space<vmem>>, vector<1x1x32xf32>
    %10 = vector.shape_cast %9 : vector<1x1x32xf32> to vector<1x32xf32>
    %cst_17 = arith.constant dense<0.000000e+00> : vector<32xf32>
    %11 = vector.multi_reduction <add>, %2, %cst_17 [1] : vector<32x32xf32> to vector<32xf32>
    %12 = vector.shape_cast %11 : vector<32xf32> to vector<32x1xf32>
    %cst_18 = arith.constant 3.200000e+01 : f32
    %13 = vector.broadcast %cst_18 : f32 to vector<32x1xf32>
    %14 = arith.divf %12, %13 : vector<32x1xf32>
    %15 = vector.broadcast %14 : vector<32x1xf32> to vector<32x32xf32>
    %16 = arith.subf %2, %15 : vector<32x32xf32>
    %17 = arith.mulf %16, %16 : vector<32x32xf32>
    %cst_19 = arith.constant dense<0.000000e+00> : vector<32xf32>
    %18 = vector.multi_reduction <add>, %17, %cst_19 [1] : vector<32x32xf32> to vector<32xf32>
    %19 = vector.shape_cast %18 : vector<32xf32> to vector<32x1xf32>
    %cst_20 = arith.constant 3.200000e+01 : f32
    %20 = vector.broadcast %cst_20 : f32 to vector<32x1xf32>
    %21 = arith.divf %19, %20 : vector<32x1xf32>
    %cst_21 = arith.constant 9.99999974E-6 : f32
    %22 = vector.broadcast %cst_21 : f32 to vector<32x1xf32>
    %23 = arith.addf %21, %22 : vector<32x1xf32>
    %24 = math.rsqrt %23 : vector<32x1xf32>
    %25 = vector.broadcast %24 : vector<32x1xf32> to vector<32x32xf32>
    %26 = arith.mulf %16, %25 : vector<32x32xf32>
    %27 = vector.broadcast %8 : vector<1x32xf32> to vector<32x32xf32>
    %28 = arith.mulf %26, %27 : vector<32x32xf32>
    %29 = vector.broadcast %10 : vector<1x32xf32> to vector<32x32xf32>
    %30 = arith.addf %28, %29 : vector<32x32xf32>
    %c0_22 = arith.constant 0 : index
    %c0_23 = arith.constant 0 : index
    %c0_24 = arith.constant 0 : index
    %31 = vector.load %arg14[%c0_22, %c0_23, %c0_24] : memref<2x32x32xf32, #tpu.memory_space<vmem>>, vector<1x32x32xf32>
    %32 = vector.shape_cast %31 : vector<1x32x32xf32> to vector<32x32xf32>
    %cst_25 = arith.constant dense<0.000000e+00> : vector<32x32xf32>
    %33 = tpu.matmul %30, %32, %cst_25 {dimension_numbers = #tpu.dot_dimension_numbers<[1], [0], [0], [1], [0, 0, 1, 1], [], []>} : vector<32x32xf32>, vector<32x32xf32>, vector<32x32xf32> -> vector<32x32xf32>
    %c0_26 = arith.constant 0 : index
    %c0_27 = arith.constant 0 : index
    %c0_28 = arith.constant 0 : index
    %34 = vector.load %arg15[%c0_26, %c0_27, %c0_28] : memref<2x1x32xf32, #tpu.memory_space<vmem>>, vector<1x1x32xf32>
    %35 = vector.shape_cast %34 : vector<1x1x32xf32> to vector<1x32xf32>
    %36 = vector.broadcast %35 : vector<1x32xf32> to vector<32x32xf32>
    %37 = arith.addf %33, %36 : vector<32x32xf32>
    %c0_29 = arith.constant 0 : index
    %c0_30 = arith.constant 0 : index
    %c0_31 = arith.constant 0 : index
    %38 = vector.load %arg16[%c0_29, %c0_30, %c0_31] : memref<2x32x32xf32, #tpu.memory_space<vmem>>, vector<1x32x32xf32>
    %39 = vector.shape_cast %38 : vector<1x32x32xf32> to vector<32x32xf32>
    %cst_32 = arith.constant dense<0.000000e+00> : vector<32x32xf32>
    %40 = tpu.matmul %30, %39, %cst_32 {dimension_numbers = #tpu.dot_dimension_numbers<[1], [0], [0], [1], [0, 0, 1, 1], [], []>} : vector<32x32xf32>, vector<32x32xf32>, vector<32x32xf32> -> vector<32x32xf32>
    %c0_33 = arith.constant 0 : index
    %c0_34 = arith.constant 0 : index
    %c0_35 = arith.constant 0 : index
    %41 = vector.load %arg17[%c0_33, %c0_34, %c0_35] : memref<2x1x32xf32, #tpu.memory_space<vmem>>, vector<1x1x32xf32>
    %42 = vector.shape_cast %41 : vector<1x1x32xf32> to vector<1x32xf32>
    %43 = vector.broadcast %42 : vector<1x32xf32> to vector<32x32xf32>
    %44 = arith.addf %40, %43 : vector<32x32xf32>
    %c0_36 = arith.constant 0 : index
    %c0_37 = arith.constant 0 : index
    %c0_38 = arith.constant 0 : index
    %45 = vector.load %arg18[%c0_36, %c0_37, %c0_38] : memref<2x32x32xf32, #tpu.memory_space<vmem>>, vector<1x32x32xf32>
    %46 = vector.shape_cast %45 : vector<1x32x32xf32> to vector<32x32xf32>
    %cst_39 = arith.constant dense<0.000000e+00> : vector<32x32xf32>
    %47 = tpu.matmul %30, %46, %cst_39 {dimension_numbers = #tpu.dot_dimension_numbers<[1], [0], [0], [1], [0, 0, 1, 1], [], []>} : vector<32x32xf32>, vector<32x32xf32>, vector<32x32xf32> -> vector<32x32xf32>
    %c0_40 = arith.constant 0 : index
    %c0_41 = arith.constant 0 : index
    %c0_42 = arith.constant 0 : index
    %48 = vector.load %arg19[%c0_40, %c0_41, %c0_42] : memref<2x1x32xf32, #tpu.memory_space<vmem>>, vector<1x1x32xf32>
    %49 = vector.shape_cast %48 : vector<1x1x32xf32> to vector<1x32xf32>
    %50 = vector.broadcast %49 : vector<1x32xf32> to vector<32x32xf32>
    %51 = arith.addf %47, %50 : vector<32x32xf32>
    %cst_43 = arith.constant dense<0.000000e+00> : vector<128x32xf32>
    %52 = tpu.matmul %3, %37, %cst_43 {dimension_numbers = #tpu.dot_dimension_numbers<[1], [0], [0], [1], [0, 0, 1, 1], [], []>} : vector<128x32xf32>, vector<32x32xf32>, vector<128x32xf32> -> vector<128x32xf32>
    %53 = arith.mulf %52, %5 : vector<128x32xf32>
    %cst_44 = arith.constant dense<0.000000e+00> : vector<128x32xf32>
    %54 = tpu.matmul %53, %44, %cst_44 {dimension_numbers = #tpu.dot_dimension_numbers<[1], [1], [0], [0], [0, 0, 1, 0], [], []>} : vector<128x32xf32>, vector<32x32xf32>, vector<128x32xf32> -> vector<128x32xf32>
    %55 = arith.addf %54, %6 : vector<128x32xf32>
    %cst_45 = arith.constant dense<0xFF800000> : vector<128xf32>
    %56 = vector.multi_reduction <maximumf>, %55, %cst_45 [1] : vector<128x32xf32> to vector<128xf32>
    %57 = vector.shape_cast %56 : vector<128xf32> to vector<128x1xf32>
    %58 = vector.broadcast %57 : vector<128x1xf32> to vector<128x32xf32>
    %59 = arith.subf %55, %58 : vector<128x32xf32>
    %60 = math.exp %59 : vector<128x32xf32>
    %cst_46 = arith.constant dense<0.000000e+00> : vector<128xf32>
    %61 = vector.multi_reduction <add>, %60, %cst_46 [1] : vector<128x32xf32> to vector<128xf32>
    %62 = vector.shape_cast %61 : vector<128xf32> to vector<128x1xf32>
    %63 = vector.broadcast %62 : vector<128x1xf32> to vector<128x32xf32>
    %64 = arith.divf %60, %63 : vector<128x32xf32>
    %cst_47 = arith.constant dense<0.000000e+00> : vector<128x32xf32>
    %65 = tpu.matmul %64, %51, %cst_47 {dimension_numbers = #tpu.dot_dimension_numbers<[1], [0], [0], [1], [0, 0, 1, 1], [], []>} : vector<128x32xf32>, vector<32x32xf32>, vector<128x32xf32> -> vector<128x32xf32>
    %66 = arith.mulf %65, %5 : vector<128x32xf32>
    %cst_48 = arith.constant dense<0.000000e+00> : vector<32x32xf32>
    %67 = tpu.matmul %4, %66, %cst_48 {dimension_numbers = #tpu.dot_dimension_numbers<[1], [0], [0], [1], [0, 0, 1, 1], [], []>} : vector<32x128xf32>, vector<128x32xf32>, vector<32x32xf32> -> vector<32x32xf32>
    %c0_49 = arith.constant 0 : index
    %c0_50 = arith.constant 0 : index
    %c0_51 = arith.constant 0 : index
    %68 = vector.load %arg20[%c0_49, %c0_50, %c0_51] : memref<2x32x32xf32, #tpu.memory_space<vmem>>, vector<1x32x32xf32>
    %69 = vector.shape_cast %68 : vector<1x32x32xf32> to vector<32x32xf32>
    %cst_52 = arith.constant dense<0.000000e+00> : vector<32x32xf32>
    %70 = tpu.matmul %67, %69, %cst_52 {dimension_numbers = #tpu.dot_dimension_numbers<[1], [0], [0], [1], [0, 0, 1, 1], [], []>} : vector<32x32xf32>, vector<32x32xf32>, vector<32x32xf32> -> vector<32x32xf32>
    %71 = arith.addf %2, %70 : vector<32x32xf32>
    %c0_53 = arith.constant 0 : index
    %c0_54 = arith.constant 0 : index
    %c0_55 = arith.constant 0 : index
    %72 = vector.load %arg21[%c0_53, %c0_54, %c0_55] : memref<2x1x32xf32, #tpu.memory_space<vmem>>, vector<1x1x32xf32>
    %73 = vector.shape_cast %72 : vector<1x1x32xf32> to vector<1x32xf32>
    %74 = vector.broadcast %73 : vector<1x32xf32> to vector<32x32xf32>
    %75 = arith.addf %71, %74 : vector<32x32xf32>
    %c0_56 = arith.constant 0 : index
    %c0_57 = arith.constant 0 : index
    %c0_58 = arith.constant 0 : index
    %76 = vector.load %arg22[%c0_56, %c0_57, %c0_58] : memref<2x1x32xf32, #tpu.memory_space<vmem>>, vector<1x1x32xf32>
    %77 = vector.shape_cast %76 : vector<1x1x32xf32> to vector<1x32xf32>
    %c0_59 = arith.constant 0 : index
    %c0_60 = arith.constant 0 : index
    %c0_61 = arith.constant 0 : index
    %78 = vector.load %arg23[%c0_59, %c0_60, %c0_61] : memref<2x1x32xf32, #tpu.memory_space<vmem>>, vector<1x1x32xf32>
    %79 = vector.shape_cast %78 : vector<1x1x32xf32> to vector<1x32xf32>
    %cst_62 = arith.constant dense<0.000000e+00> : vector<32xf32>
    %80 = vector.multi_reduction <add>, %75, %cst_62 [1] : vector<32x32xf32> to vector<32xf32>
    %81 = vector.shape_cast %80 : vector<32xf32> to vector<32x1xf32>
    %cst_63 = arith.constant 3.200000e+01 : f32
    %82 = vector.broadcast %cst_63 : f32 to vector<32x1xf32>
    %83 = arith.divf %81, %82 : vector<32x1xf32>
    %84 = vector.broadcast %83 : vector<32x1xf32> to vector<32x32xf32>
    %85 = arith.subf %75, %84 : vector<32x32xf32>
    %86 = arith.mulf %85, %85 : vector<32x32xf32>
    %cst_64 = arith.constant dense<0.000000e+00> : vector<32xf32>
    %87 = vector.multi_reduction <add>, %86, %cst_64 [1] : vector<32x32xf32> to vector<32xf32>
    %88 = vector.shape_cast %87 : vector<32xf32> to vector<32x1xf32>
    %cst_65 = arith.constant 3.200000e+01 : f32
    %89 = vector.broadcast %cst_65 : f32 to vector<32x1xf32>
    %90 = arith.divf %88, %89 : vector<32x1xf32>
    %cst_66 = arith.constant 9.99999974E-6 : f32
    %91 = vector.broadcast %cst_66 : f32 to vector<32x1xf32>
    %92 = arith.addf %90, %91 : vector<32x1xf32>
    %93 = math.rsqrt %92 : vector<32x1xf32>
    %94 = vector.broadcast %93 : vector<32x1xf32> to vector<32x32xf32>
    %95 = arith.mulf %85, %94 : vector<32x32xf32>
    %96 = vector.broadcast %77 : vector<1x32xf32> to vector<32x32xf32>
    %97 = arith.mulf %95, %96 : vector<32x32xf32>
    %98 = vector.broadcast %79 : vector<1x32xf32> to vector<32x32xf32>
    %99 = arith.addf %97, %98 : vector<32x32xf32>
    %c0_67 = arith.constant 0 : index
    %c0_68 = arith.constant 0 : index
    %c0_69 = arith.constant 0 : index
    %100 = vector.load %arg24[%c0_67, %c0_68, %c0_69] : memref<2x32x128xf32, #tpu.memory_space<vmem>>, vector<1x32x128xf32>
    %101 = vector.shape_cast %100 : vector<1x32x128xf32> to vector<32x128xf32>
    %cst_70 = arith.constant dense<0.000000e+00> : vector<32x128xf32>
    %102 = tpu.matmul %99, %101, %cst_70 {dimension_numbers = #tpu.dot_dimension_numbers<[1], [0], [0], [1], [0, 0, 1, 1], [], []>} : vector<32x32xf32>, vector<32x128xf32>, vector<32x128xf32> -> vector<32x128xf32>
    %c0_71 = arith.constant 0 : index
    %c0_72 = arith.constant 0 : index
    %c0_73 = arith.constant 0 : index
    %103 = vector.load %arg25[%c0_71, %c0_72, %c0_73] : memref<2x1x128xf32, #tpu.memory_space<vmem>>, vector<1x1x128xf32>
    %104 = vector.shape_cast %103 : vector<1x1x128xf32> to vector<1x128xf32>
    %105 = vector.broadcast %104 : vector<1x128xf32> to vector<32x128xf32>
    %106 = arith.addf %102, %105 : vector<32x128xf32>
    %cst_74 = arith.constant 5.000000e-01 : f32
    %107 = vector.broadcast %cst_74 : f32 to vector<32x128xf32>
    %108 = arith.mulf %107, %106 : vector<32x128xf32>
    %cst_75 = arith.constant 0.707106769 : f32
    %109 = vector.broadcast %cst_75 : f32 to vector<32x128xf32>
    %110 = arith.mulf %106, %109 : vector<32x128xf32>
    %cst_76 = arith.constant 0.000000e+00 : f32
    %111 = vector.broadcast %cst_76 : f32 to vector<32x128xf32>
    %112 = arith.cmpf olt, %110, %111 : vector<32x128xf32>
    %cst_77 = arith.constant -1.000000e+00 : f32
    %cst_78 = arith.constant 1.000000e+00 : f32
    %113 = vector.broadcast %cst_77 : f32 to vector<32x128xf32>
    %114 = vector.broadcast %cst_78 : f32 to vector<32x128xf32>
    %115 = arith.select %112, %113, %114 : vector<32x128xi1>, vector<32x128xf32>
    %116 = math.absf %110 : vector<32x128xf32>
    %cst_79 = arith.constant 0.327591091 : f32
    %117 = vector.broadcast %cst_79 : f32 to vector<32x128xf32>
    %118 = arith.mulf %117, %116 : vector<32x128xf32>
    %cst_80 = arith.constant 1.000000e+00 : f32
    %119 = vector.broadcast %cst_80 : f32 to vector<32x128xf32>
    %120 = arith.addf %119, %118 : vector<32x128xf32>
    %cst_81 = arith.constant 1.000000e+00 : f32
    %121 = vector.broadcast %cst_81 : f32 to vector<32x128xf32>
    %122 = arith.divf %121, %120 : vector<32x128xf32>
    %cst_82 = arith.constant 1.06140542 : f32
    %123 = vector.broadcast %cst_82 : f32 to vector<32x128xf32>
    %124 = arith.mulf %123, %122 : vector<32x128xf32>
    %cst_83 = arith.constant -1.45315206 : f32
    %125 = vector.broadcast %cst_83 : f32 to vector<32x128xf32>
    %126 = arith.addf %124, %125 : vector<32x128xf32>
    %127 = arith.mulf %126, %122 : vector<32x128xf32>
    %cst_84 = arith.constant 1.42141378 : f32
    %128 = vector.broadcast %cst_84 : f32 to vector<32x128xf32>
    %129 = arith.addf %127, %128 : vector<32x128xf32>
    %130 = arith.mulf %129, %122 : vector<32x128xf32>
    %cst_85 = arith.constant -0.284496725 : f32
    %131 = vector.broadcast %cst_85 : f32 to vector<32x128xf32>
    %132 = arith.addf %130, %131 : vector<32x128xf32>
    %133 = arith.mulf %132, %122 : vector<32x128xf32>
    %cst_86 = arith.constant 0.254829586 : f32
    %134 = vector.broadcast %cst_86 : f32 to vector<32x128xf32>
    %135 = arith.addf %133, %134 : vector<32x128xf32>
    %136 = arith.mulf %135, %122 : vector<32x128xf32>
    %cst_87 = arith.constant 0.000000e+00 : f32
    %137 = vector.broadcast %cst_87 : f32 to vector<32x128xf32>
    %138 = arith.subf %137, %116 : vector<32x128xf32>
    %139 = arith.mulf %138, %116 : vector<32x128xf32>
    %140 = math.exp %139 : vector<32x128xf32>
    %141 = arith.mulf %136, %140 : vector<32x128xf32>
    %cst_88 = arith.constant 1.000000e+00 : f32
    %142 = vector.broadcast %cst_88 : f32 to vector<32x128xf32>
    %143 = arith.subf %142, %141 : vector<32x128xf32>
    %144 = arith.mulf %115, %143 : vector<32x128xf32>
    %cst_89 = arith.constant 1.000000e+00 : f32
    %145 = vector.broadcast %cst_89 : f32 to vector<32x128xf32>
    %146 = arith.addf %145, %144 : vector<32x128xf32>
    %147 = arith.mulf %108, %146 : vector<32x128xf32>
    %c0_90 = arith.constant 0 : index
    %c0_91 = arith.constant 0 : index
    %c0_92 = arith.constant 0 : index
    %148 = vector.load %arg26[%c0_90, %c0_91, %c0_92] : memref<2x128x32xf32, #tpu.memory_space<vmem>>, vector<1x128x32xf32>
    %149 = vector.shape_cast %148 : vector<1x128x32xf32> to vector<128x32xf32>
    %cst_93 = arith.constant dense<0.000000e+00> : vector<32x32xf32>
    %150 = tpu.matmul %147, %149, %cst_93 {dimension_numbers = #tpu.dot_dimension_numbers<[1], [0], [0], [1], [0, 0, 1, 1], [], []>} : vector<32x128xf32>, vector<128x32xf32>, vector<32x32xf32> -> vector<32x32xf32>
    %151 = arith.addf %75, %150 : vector<32x32xf32>
    %c0_94 = arith.constant 0 : index
    %c0_95 = arith.constant 0 : index
    %c0_96 = arith.constant 0 : index
    %152 = vector.load %arg27[%c0_94, %c0_95, %c0_96] : memref<2x1x32xf32, #tpu.memory_space<vmem>>, vector<1x1x32xf32>
    %153 = vector.shape_cast %152 : vector<1x1x32xf32> to vector<1x32xf32>
    %154 = vector.broadcast %153 : vector<1x32xf32> to vector<32x32xf32>
    %155 = arith.addf %151, %154 : vector<32x32xf32>
    %c1 = arith.constant 1 : index
    %c0_97 = arith.constant 0 : index
    %c0_98 = arith.constant 0 : index
    %156 = vector.load %arg12[%c1, %c0_97, %c0_98] : memref<2x1x32xf32, #tpu.memory_space<vmem>>, vector<1x1x32xf32>
    %157 = vector.shape_cast %156 : vector<1x1x32xf32> to vector<1x32xf32>
    %c1_99 = arith.constant 1 : index
    %c0_100 = arith.constant 0 : index
    %c0_101 = arith.constant 0 : index
    %158 = vector.load %arg13[%c1_99, %c0_100, %c0_101] : memref<2x1x32xf32, #tpu.memory_space<vmem>>, vector<1x1x32xf32>
    %159 = vector.shape_cast %158 : vector<1x1x32xf32> to vector<1x32xf32>
    %cst_102 = arith.constant dense<0.000000e+00> : vector<32xf32>
    %160 = vector.multi_reduction <add>, %155, %cst_102 [1] : vector<32x32xf32> to vector<32xf32>
    %161 = vector.shape_cast %160 : vector<32xf32> to vector<32x1xf32>
    %cst_103 = arith.constant 3.200000e+01 : f32
    %162 = vector.broadcast %cst_103 : f32 to vector<32x1xf32>
    %163 = arith.divf %161, %162 : vector<32x1xf32>
    %164 = vector.broadcast %163 : vector<32x1xf32> to vector<32x32xf32>
    %165 = arith.subf %155, %164 : vector<32x32xf32>
    %166 = arith.mulf %165, %165 : vector<32x32xf32>
    %cst_104 = arith.constant dense<0.000000e+00> : vector<32xf32>
    %167 = vector.multi_reduction <add>, %166, %cst_104 [1] : vector<32x32xf32> to vector<32xf32>
    %168 = vector.shape_cast %167 : vector<32xf32> to vector<32x1xf32>
    %cst_105 = arith.constant 3.200000e+01 : f32
    %169 = vector.broadcast %cst_105 : f32 to vector<32x1xf32>
    %170 = arith.divf %168, %169 : vector<32x1xf32>
    %cst_106 = arith.constant 9.99999974E-6 : f32
    %171 = vector.broadcast %cst_106 : f32 to vector<32x1xf32>
    %172 = arith.addf %170, %171 : vector<32x1xf32>
    %173 = math.rsqrt %172 : vector<32x1xf32>
    %174 = vector.broadcast %173 : vector<32x1xf32> to vector<32x32xf32>
    %175 = arith.mulf %165, %174 : vector<32x32xf32>
    %176 = vector.broadcast %157 : vector<1x32xf32> to vector<32x32xf32>
    %177 = arith.mulf %175, %176 : vector<32x32xf32>
    %178 = vector.broadcast %159 : vector<1x32xf32> to vector<32x32xf32>
    %179 = arith.addf %177, %178 : vector<32x32xf32>
    %c1_107 = arith.constant 1 : index
    %c0_108 = arith.constant 0 : index
    %c0_109 = arith.constant 0 : index
    %180 = vector.load %arg14[%c1_107, %c0_108, %c0_109] : memref<2x32x32xf32, #tpu.memory_space<vmem>>, vector<1x32x32xf32>
    %181 = vector.shape_cast %180 : vector<1x32x32xf32> to vector<32x32xf32>
    %cst_110 = arith.constant dense<0.000000e+00> : vector<32x32xf32>
    %182 = tpu.matmul %179, %181, %cst_110 {dimension_numbers = #tpu.dot_dimension_numbers<[1], [0], [0], [1], [0, 0, 1, 1], [], []>} : vector<32x32xf32>, vector<32x32xf32>, vector<32x32xf32> -> vector<32x32xf32>
    %c1_111 = arith.constant 1 : index
    %c0_112 = arith.constant 0 : index
    %c0_113 = arith.constant 0 : index
    %183 = vector.load %arg15[%c1_111, %c0_112, %c0_113] : memref<2x1x32xf32, #tpu.memory_space<vmem>>, vector<1x1x32xf32>
    %184 = vector.shape_cast %183 : vector<1x1x32xf32> to vector<1x32xf32>
    %185 = vector.broadcast %184 : vector<1x32xf32> to vector<32x32xf32>
    %186 = arith.addf %182, %185 : vector<32x32xf32>
    %c1_114 = arith.constant 1 : index
    %c0_115 = arith.constant 0 : index
    %c0_116 = arith.constant 0 : index
    %187 = vector.load %arg16[%c1_114, %c0_115, %c0_116] : memref<2x32x32xf32, #tpu.memory_space<vmem>>, vector<1x32x32xf32>
    %188 = vector.shape_cast %187 : vector<1x32x32xf32> to vector<32x32xf32>
    %cst_117 = arith.constant dense<0.000000e+00> : vector<32x32xf32>
    %189 = tpu.matmul %179, %188, %cst_117 {dimension_numbers = #tpu.dot_dimension_numbers<[1], [0], [0], [1], [0, 0, 1, 1], [], []>} : vector<32x32xf32>, vector<32x32xf32>, vector<32x32xf32> -> vector<32x32xf32>
    %c1_118 = arith.constant 1 : index
    %c0_119 = arith.constant 0 : index
    %c0_120 = arith.constant 0 : index
    %190 = vector.load %arg17[%c1_118, %c0_119, %c0_120] : memref<2x1x32xf32, #tpu.memory_space<vmem>>, vector<1x1x32xf32>
    %191 = vector.shape_cast %190 : vector<1x1x32xf32> to vector<1x32xf32>
    %192 = vector.broadcast %191 : vector<1x32xf32> to vector<32x32xf32>
    %193 = arith.addf %189, %192 : vector<32x32xf32>
    %c1_121 = arith.constant 1 : index
    %c0_122 = arith.constant 0 : index
    %c0_123 = arith.constant 0 : index
    %194 = vector.load %arg18[%c1_121, %c0_122, %c0_123] : memref<2x32x32xf32, #tpu.memory_space<vmem>>, vector<1x32x32xf32>
    %195 = vector.shape_cast %194 : vector<1x32x32xf32> to vector<32x32xf32>
    %cst_124 = arith.constant dense<0.000000e+00> : vector<32x32xf32>
    %196 = tpu.matmul %179, %195, %cst_124 {dimension_numbers = #tpu.dot_dimension_numbers<[1], [0], [0], [1], [0, 0, 1, 1], [], []>} : vector<32x32xf32>, vector<32x32xf32>, vector<32x32xf32> -> vector<32x32xf32>
    %c1_125 = arith.constant 1 : index
    %c0_126 = arith.constant 0 : index
    %c0_127 = arith.constant 0 : index
    %197 = vector.load %arg19[%c1_125, %c0_126, %c0_127] : memref<2x1x32xf32, #tpu.memory_space<vmem>>, vector<1x1x32xf32>
    %198 = vector.shape_cast %197 : vector<1x1x32xf32> to vector<1x32xf32>
    %199 = vector.broadcast %198 : vector<1x32xf32> to vector<32x32xf32>
    %200 = arith.addf %196, %199 : vector<32x32xf32>
    %cst_128 = arith.constant dense<0.000000e+00> : vector<128x32xf32>
    %201 = tpu.matmul %3, %186, %cst_128 {dimension_numbers = #tpu.dot_dimension_numbers<[1], [0], [0], [1], [0, 0, 1, 1], [], []>} : vector<128x32xf32>, vector<32x32xf32>, vector<128x32xf32> -> vector<128x32xf32>
    %202 = arith.mulf %201, %5 : vector<128x32xf32>
    %cst_129 = arith.constant dense<0.000000e+00> : vector<128x32xf32>
    %203 = tpu.matmul %202, %193, %cst_129 {dimension_numbers = #tpu.dot_dimension_numbers<[1], [1], [0], [0], [0, 0, 1, 0], [], []>} : vector<128x32xf32>, vector<32x32xf32>, vector<128x32xf32> -> vector<128x32xf32>
    %204 = arith.addf %203, %6 : vector<128x32xf32>
    %cst_130 = arith.constant dense<0xFF800000> : vector<128xf32>
    %205 = vector.multi_reduction <maximumf>, %204, %cst_130 [1] : vector<128x32xf32> to vector<128xf32>
    %206 = vector.shape_cast %205 : vector<128xf32> to vector<128x1xf32>
    %207 = vector.broadcast %206 : vector<128x1xf32> to vector<128x32xf32>
    %208 = arith.subf %204, %207 : vector<128x32xf32>
    %209 = math.exp %208 : vector<128x32xf32>
    %cst_131 = arith.constant dense<0.000000e+00> : vector<128xf32>
    %210 = vector.multi_reduction <add>, %209, %cst_131 [1] : vector<128x32xf32> to vector<128xf32>
    %211 = vector.shape_cast %210 : vector<128xf32> to vector<128x1xf32>
    %212 = vector.broadcast %211 : vector<128x1xf32> to vector<128x32xf32>
    %213 = arith.divf %209, %212 : vector<128x32xf32>
    %cst_132 = arith.constant dense<0.000000e+00> : vector<128x32xf32>
    %214 = tpu.matmul %213, %200, %cst_132 {dimension_numbers = #tpu.dot_dimension_numbers<[1], [0], [0], [1], [0, 0, 1, 1], [], []>} : vector<128x32xf32>, vector<32x32xf32>, vector<128x32xf32> -> vector<128x32xf32>
    %215 = arith.mulf %214, %5 : vector<128x32xf32>
    %cst_133 = arith.constant dense<0.000000e+00> : vector<32x32xf32>
    %216 = tpu.matmul %4, %215, %cst_133 {dimension_numbers = #tpu.dot_dimension_numbers<[1], [0], [0], [1], [0, 0, 1, 1], [], []>} : vector<32x128xf32>, vector<128x32xf32>, vector<32x32xf32> -> vector<32x32xf32>
    %c1_134 = arith.constant 1 : index
    %c0_135 = arith.constant 0 : index
    %c0_136 = arith.constant 0 : index
    %217 = vector.load %arg20[%c1_134, %c0_135, %c0_136] : memref<2x32x32xf32, #tpu.memory_space<vmem>>, vector<1x32x32xf32>
    %218 = vector.shape_cast %217 : vector<1x32x32xf32> to vector<32x32xf32>
    %cst_137 = arith.constant dense<0.000000e+00> : vector<32x32xf32>
    %219 = tpu.matmul %216, %218, %cst_137 {dimension_numbers = #tpu.dot_dimension_numbers<[1], [0], [0], [1], [0, 0, 1, 1], [], []>} : vector<32x32xf32>, vector<32x32xf32>, vector<32x32xf32> -> vector<32x32xf32>
    %220 = arith.addf %155, %219 : vector<32x32xf32>
    %c1_138 = arith.constant 1 : index
    %c0_139 = arith.constant 0 : index
    %c0_140 = arith.constant 0 : index
    %221 = vector.load %arg21[%c1_138, %c0_139, %c0_140] : memref<2x1x32xf32, #tpu.memory_space<vmem>>, vector<1x1x32xf32>
    %222 = vector.shape_cast %221 : vector<1x1x32xf32> to vector<1x32xf32>
    %223 = vector.broadcast %222 : vector<1x32xf32> to vector<32x32xf32>
    %224 = arith.addf %220, %223 : vector<32x32xf32>
    %c1_141 = arith.constant 1 : index
    %c0_142 = arith.constant 0 : index
    %c0_143 = arith.constant 0 : index
    %225 = vector.load %arg22[%c1_141, %c0_142, %c0_143] : memref<2x1x32xf32, #tpu.memory_space<vmem>>, vector<1x1x32xf32>
    %226 = vector.shape_cast %225 : vector<1x1x32xf32> to vector<1x32xf32>
    %c1_144 = arith.constant 1 : index
    %c0_145 = arith.constant 0 : index
    %c0_146 = arith.constant 0 : index
    %227 = vector.load %arg23[%c1_144, %c0_145, %c0_146] : memref<2x1x32xf32, #tpu.memory_space<vmem>>, vector<1x1x32xf32>
    %228 = vector.shape_cast %227 : vector<1x1x32xf32> to vector<1x32xf32>
    %cst_147 = arith.constant dense<0.000000e+00> : vector<32xf32>
    %229 = vector.multi_reduction <add>, %224, %cst_147 [1] : vector<32x32xf32> to vector<32xf32>
    %230 = vector.shape_cast %229 : vector<32xf32> to vector<32x1xf32>
    %cst_148 = arith.constant 3.200000e+01 : f32
    %231 = vector.broadcast %cst_148 : f32 to vector<32x1xf32>
    %232 = arith.divf %230, %231 : vector<32x1xf32>
    %233 = vector.broadcast %232 : vector<32x1xf32> to vector<32x32xf32>
    %234 = arith.subf %224, %233 : vector<32x32xf32>
    %235 = arith.mulf %234, %234 : vector<32x32xf32>
    %cst_149 = arith.constant dense<0.000000e+00> : vector<32xf32>
    %236 = vector.multi_reduction <add>, %235, %cst_149 [1] : vector<32x32xf32> to vector<32xf32>
    %237 = vector.shape_cast %236 : vector<32xf32> to vector<32x1xf32>
    %cst_150 = arith.constant 3.200000e+01 : f32
    %238 = vector.broadcast %cst_150 : f32 to vector<32x1xf32>
    %239 = arith.divf %237, %238 : vector<32x1xf32>
    %cst_151 = arith.constant 9.99999974E-6 : f32
    %240 = vector.broadcast %cst_151 : f32 to vector<32x1xf32>
    %241 = arith.addf %239, %240 : vector<32x1xf32>
    %242 = math.rsqrt %241 : vector<32x1xf32>
    %243 = vector.broadcast %242 : vector<32x1xf32> to vector<32x32xf32>
    %244 = arith.mulf %234, %243 : vector<32x32xf32>
    %245 = vector.broadcast %226 : vector<1x32xf32> to vector<32x32xf32>
    %246 = arith.mulf %244, %245 : vector<32x32xf32>
    %247 = vector.broadcast %228 : vector<1x32xf32> to vector<32x32xf32>
    %248 = arith.addf %246, %247 : vector<32x32xf32>
    %c1_152 = arith.constant 1 : index
    %c0_153 = arith.constant 0 : index
    %c0_154 = arith.constant 0 : index
    %249 = vector.load %arg24[%c1_152, %c0_153, %c0_154] : memref<2x32x128xf32, #tpu.memory_space<vmem>>, vector<1x32x128xf32>
    %250 = vector.shape_cast %249 : vector<1x32x128xf32> to vector<32x128xf32>
    %cst_155 = arith.constant dense<0.000000e+00> : vector<32x128xf32>
    %251 = tpu.matmul %248, %250, %cst_155 {dimension_numbers = #tpu.dot_dimension_numbers<[1], [0], [0], [1], [0, 0, 1, 1], [], []>} : vector<32x32xf32>, vector<32x128xf32>, vector<32x128xf32> -> vector<32x128xf32>
    %c1_156 = arith.constant 1 : index
    %c0_157 = arith.constant 0 : index
    %c0_158 = arith.constant 0 : index
    %252 = vector.load %arg25[%c1_156, %c0_157, %c0_158] : memref<2x1x128xf32, #tpu.memory_space<vmem>>, vector<1x1x128xf32>
    %253 = vector.shape_cast %252 : vector<1x1x128xf32> to vector<1x128xf32>
    %254 = vector.broadcast %253 : vector<1x128xf32> to vector<32x128xf32>
    %255 = arith.addf %251, %254 : vector<32x128xf32>
    %cst_159 = arith.constant 5.000000e-01 : f32
    %256 = vector.broadcast %cst_159 : f32 to vector<32x128xf32>
    %257 = arith.mulf %256, %255 : vector<32x128xf32>
    %cst_160 = arith.constant 0.707106769 : f32
    %258 = vector.broadcast %cst_160 : f32 to vector<32x128xf32>
    %259 = arith.mulf %255, %258 : vector<32x128xf32>
    %cst_161 = arith.constant 0.000000e+00 : f32
    %260 = vector.broadcast %cst_161 : f32 to vector<32x128xf32>
    %261 = arith.cmpf olt, %259, %260 : vector<32x128xf32>
    %cst_162 = arith.constant -1.000000e+00 : f32
    %cst_163 = arith.constant 1.000000e+00 : f32
    %262 = vector.broadcast %cst_162 : f32 to vector<32x128xf32>
    %263 = vector.broadcast %cst_163 : f32 to vector<32x128xf32>
    %264 = arith.select %261, %262, %263 : vector<32x128xi1>, vector<32x128xf32>
    %265 = math.absf %259 : vector<32x128xf32>
    %cst_164 = arith.constant 0.327591091 : f32
    %266 = vector.broadcast %cst_164 : f32 to vector<32x128xf32>
    %267 = arith.mulf %266, %265 : vector<32x128xf32>
    %cst_165 = arith.constant 1.000000e+00 : f32
    %268 = vector.broadcast %cst_165 : f32 to vector<32x128xf32>
    %269 = arith.addf %268, %267 : vector<32x128xf32>
    %cst_166 = arith.constant 1.000000e+00 : f32
    %270 = vector.broadcast %cst_166 : f32 to vector<32x128xf32>
    %271 = arith.divf %270, %269 : vector<32x128xf32>
    %cst_167 = arith.constant 1.06140542 : f32
    %272 = vector.broadcast %cst_167 : f32 to vector<32x128xf32>
    %273 = arith.mulf %272, %271 : vector<32x128xf32>
    %cst_168 = arith.constant -1.45315206 : f32
    %274 = vector.broadcast %cst_168 : f32 to vector<32x128xf32>
    %275 = arith.addf %273, %274 : vector<32x128xf32>
    %276 = arith.mulf %275, %271 : vector<32x128xf32>
    %cst_169 = arith.constant 1.42141378 : f32
    %277 = vector.broadcast %cst_169 : f32 to vector<32x128xf32>
    %278 = arith.addf %276, %277 : vector<32x128xf32>
    %279 = arith.mulf %278, %271 : vector<32x128xf32>
    %cst_170 = arith.constant -0.284496725 : f32
    %280 = vector.broadcast %cst_170 : f32 to vector<32x128xf32>
    %281 = arith.addf %279, %280 : vector<32x128xf32>
    %282 = arith.mulf %281, %271 : vector<32x128xf32>
    %cst_171 = arith.constant 0.254829586 : f32
    %283 = vector.broadcast %cst_171 : f32 to vector<32x128xf32>
    %284 = arith.addf %282, %283 : vector<32x128xf32>
    %285 = arith.mulf %284, %271 : vector<32x128xf32>
    %cst_172 = arith.constant 0.000000e+00 : f32
    %286 = vector.broadcast %cst_172 : f32 to vector<32x128xf32>
    %287 = arith.subf %286, %265 : vector<32x128xf32>
    %288 = arith.mulf %287, %265 : vector<32x128xf32>
    %289 = math.exp %288 : vector<32x128xf32>
    %290 = arith.mulf %285, %289 : vector<32x128xf32>
    %cst_173 = arith.constant 1.000000e+00 : f32
    %291 = vector.broadcast %cst_173 : f32 to vector<32x128xf32>
    %292 = arith.subf %291, %290 : vector<32x128xf32>
    %293 = arith.mulf %264, %292 : vector<32x128xf32>
    %cst_174 = arith.constant 1.000000e+00 : f32
    %294 = vector.broadcast %cst_174 : f32 to vector<32x128xf32>
    %295 = arith.addf %294, %293 : vector<32x128xf32>
    %296 = arith.mulf %257, %295 : vector<32x128xf32>
    %c1_175 = arith.constant 1 : index
    %c0_176 = arith.constant 0 : index
    %c0_177 = arith.constant 0 : index
    %297 = vector.load %arg26[%c1_175, %c0_176, %c0_177] : memref<2x128x32xf32, #tpu.memory_space<vmem>>, vector<1x128x32xf32>
    %298 = vector.shape_cast %297 : vector<1x128x32xf32> to vector<128x32xf32>
    %cst_178 = arith.constant dense<0.000000e+00> : vector<32x32xf32>
    %299 = tpu.matmul %296, %298, %cst_178 {dimension_numbers = #tpu.dot_dimension_numbers<[1], [0], [0], [1], [0, 0, 1, 1], [], []>} : vector<32x128xf32>, vector<128x32xf32>, vector<32x32xf32> -> vector<32x32xf32>
    %300 = arith.addf %224, %299 : vector<32x32xf32>
    %c1_179 = arith.constant 1 : index
    %c0_180 = arith.constant 0 : index
    %c0_181 = arith.constant 0 : index
    %301 = vector.load %arg27[%c1_179, %c0_180, %c0_181] : memref<2x1x32xf32, #tpu.memory_space<vmem>>, vector<1x1x32xf32>
    %302 = vector.shape_cast %301 : vector<1x1x32xf32> to vector<1x32xf32>
    %303 = vector.broadcast %302 : vector<1x32xf32> to vector<32x32xf32>
    %304 = arith.addf %300, %303 : vector<32x32xf32>
    %c0_182 = arith.constant 0 : index
    %c0_183 = arith.constant 0 : index
    %305 = vector.load %arg6[%c0_182, %c0_183] : memref<16x32xf32, #tpu.memory_space<vmem>>, vector<16x32xf32>
    %cst_184 = arith.constant dense<0.000000e+00> : vector<16x32xf32>
    %306 = tpu.matmul %305, %304, %cst_184 {dimension_numbers = #tpu.dot_dimension_numbers<[1], [0], [0], [1], [0, 0, 1, 1], [], []>} : vector<16x32xf32>, vector<32x32xf32>, vector<16x32xf32> -> vector<16x32xf32>
    %c0_185 = arith.constant 0 : index
    %c0_186 = arith.constant 0 : index
    %307 = vector.load %arg7[%c0_185, %c0_186] : memref<16x32xf32, #tpu.memory_space<vmem>>, vector<16x32xf32>
    %cst_187 = arith.constant dense<0.000000e+00> : vector<16x32xf32>
    %308 = tpu.matmul %307, %304, %cst_187 {dimension_numbers = #tpu.dot_dimension_numbers<[1], [0], [0], [1], [0, 0, 1, 1], [], []>} : vector<16x32xf32>, vector<32x32xf32>, vector<16x32xf32> -> vector<16x32xf32>
    %c0_188 = arith.constant 0 : index
    %c0_189 = arith.constant 0 : index
    %309 = vector.load %arg8[%c0_188, %c0_189] : memref<32x32xf32, #tpu.memory_space<vmem>>, vector<32x32xf32>
    %cst_190 = arith.constant dense<0.000000e+00> : vector<16x32xf32>
    %310 = tpu.matmul %308, %309, %cst_190 {dimension_numbers = #tpu.dot_dimension_numbers<[1], [0], [0], [1], [0, 0, 1, 1], [], []>} : vector<16x32xf32>, vector<32x32xf32>, vector<16x32xf32> -> vector<16x32xf32>
    %c0_191 = arith.constant 0 : index
    %c0_192 = arith.constant 0 : index
    %311 = vector.load %arg9[%c0_191, %c0_192] : memref<1x32xf32, #tpu.memory_space<vmem>>, vector<1x32xf32>
    %312 = vector.broadcast %311 : vector<1x32xf32> to vector<16x32xf32>
    %313 = arith.addf %310, %312 : vector<16x32xf32>
    %cst_193 = arith.constant 5.000000e-01 : f32
    %314 = vector.broadcast %cst_193 : f32 to vector<16x32xf32>
    %315 = arith.mulf %314, %313 : vector<16x32xf32>
    %cst_194 = arith.constant 0.707106769 : f32
    %316 = vector.broadcast %cst_194 : f32 to vector<16x32xf32>
    %317 = arith.mulf %313, %316 : vector<16x32xf32>
    %cst_195 = arith.constant 0.000000e+00 : f32
    %318 = vector.broadcast %cst_195 : f32 to vector<16x32xf32>
    %319 = arith.cmpf olt, %317, %318 : vector<16x32xf32>
    %cst_196 = arith.constant -1.000000e+00 : f32
    %cst_197 = arith.constant 1.000000e+00 : f32
    %320 = vector.broadcast %cst_196 : f32 to vector<16x32xf32>
    %321 = vector.broadcast %cst_197 : f32 to vector<16x32xf32>
    %322 = arith.select %319, %320, %321 : vector<16x32xi1>, vector<16x32xf32>
    %323 = math.absf %317 : vector<16x32xf32>
    %cst_198 = arith.constant 0.327591091 : f32
    %324 = vector.broadcast %cst_198 : f32 to vector<16x32xf32>
    %325 = arith.mulf %324, %323 : vector<16x32xf32>
    %cst_199 = arith.constant 1.000000e+00 : f32
    %326 = vector.broadcast %cst_199 : f32 to vector<16x32xf32>
    %327 = arith.addf %326, %325 : vector<16x32xf32>
    %cst_200 = arith.constant 1.000000e+00 : f32
    %328 = vector.broadcast %cst_200 : f32 to vector<16x32xf32>
    %329 = arith.divf %328, %327 : vector<16x32xf32>
    %cst_201 = arith.constant 1.06140542 : f32
    %330 = vector.broadcast %cst_201 : f32 to vector<16x32xf32>
    %331 = arith.mulf %330, %329 : vector<16x32xf32>
    %cst_202 = arith.constant -1.45315206 : f32
    %332 = vector.broadcast %cst_202 : f32 to vector<16x32xf32>
    %333 = arith.addf %331, %332 : vector<16x32xf32>
    %334 = arith.mulf %333, %329 : vector<16x32xf32>
    %cst_203 = arith.constant 1.42141378 : f32
    %335 = vector.broadcast %cst_203 : f32 to vector<16x32xf32>
    %336 = arith.addf %334, %335 : vector<16x32xf32>
    %337 = arith.mulf %336, %329 : vector<16x32xf32>
    %cst_204 = arith.constant -0.284496725 : f32
    %338 = vector.broadcast %cst_204 : f32 to vector<16x32xf32>
    %339 = arith.addf %337, %338 : vector<16x32xf32>
    %340 = arith.mulf %339, %329 : vector<16x32xf32>
    %cst_205 = arith.constant 0.254829586 : f32
    %341 = vector.broadcast %cst_205 : f32 to vector<16x32xf32>
    %342 = arith.addf %340, %341 : vector<16x32xf32>
    %343 = arith.mulf %342, %329 : vector<16x32xf32>
    %cst_206 = arith.constant 0.000000e+00 : f32
    %344 = vector.broadcast %cst_206 : f32 to vector<16x32xf32>
    %345 = arith.subf %344, %323 : vector<16x32xf32>
    %346 = arith.mulf %345, %323 : vector<16x32xf32>
    %347 = math.exp %346 : vector<16x32xf32>
    %348 = arith.mulf %343, %347 : vector<16x32xf32>
    %cst_207 = arith.constant 1.000000e+00 : f32
    %349 = vector.broadcast %cst_207 : f32 to vector<16x32xf32>
    %350 = arith.subf %349, %348 : vector<16x32xf32>
    %351 = arith.mulf %322, %350 : vector<16x32xf32>
    %cst_208 = arith.constant 1.000000e+00 : f32
    %352 = vector.broadcast %cst_208 : f32 to vector<16x32xf32>
    %353 = arith.addf %352, %351 : vector<16x32xf32>
    %354 = arith.mulf %315, %353 : vector<16x32xf32>
    %c0_209 = arith.constant 0 : index
    %c0_210 = arith.constant 0 : index
    %355 = vector.load %arg10[%c0_209, %c0_210] : memref<32x128xf32, #tpu.memory_space<vmem>>, vector<32x128xf32>
    %cst_211 = arith.constant dense<0.000000e+00> : vector<16x128xf32>
    %356 = tpu.matmul %354, %355, %cst_211 {dimension_numbers = #tpu.dot_dimension_numbers<[1], [0], [0], [1], [0, 0, 1, 1], [], []>} : vector<16x32xf32>, vector<32x128xf32>, vector<16x128xf32> -> vector<16x128xf32>
    %c0_212 = arith.constant 0 : index
    %c0_213 = arith.constant 0 : index
    %357 = vector.load %arg11[%c0_212, %c0_213] : memref<32x128xf32, #tpu.memory_space<vmem>>, vector<32x128xf32>
    %cst_214 = arith.constant dense<0.000000e+00> : vector<16x128xf32>
    %358 = tpu.matmul %306, %357, %cst_214 {dimension_numbers = #tpu.dot_dimension_numbers<[1], [0], [0], [1], [0, 0, 1, 1], [], []>} : vector<16x32xf32>, vector<32x128xf32>, vector<16x128xf32> -> vector<16x128xf32>
    %359 = arith.addf %356, %358 : vector<16x128xf32>
    %c0_215 = arith.constant 0 : index
    %c0_216 = arith.constant 0 : index
    %360 = vector.load %arg28[%c0_215, %c0_216] : memref<16x128xf32, #tpu.memory_space<vmem>>, vector<16x128xf32>
    tpu.vector_store %arg28[%c0_215, %c0_216], %359 {strides = array<i32>} : memref<16x128xf32, #tpu.memory_space<vmem>>, vector<16x128xf32>,
    return
  }
}

</mosaic_0001>

<llo_original>
// kernel: tile.10
$region0: #{tile.10}
  %s0 = inlined_call_operand.vmem [shape: f32[2,8], index: 0, kind: input, shape index: {}]
  %s1 = inlined_call_operand.vmem [shape: f32[16], index: 1, kind: output, shape index: {}]
  $region1: #{tile.10} parent=0
    #allocation0 [shape = 'u8[4096]{0}', space=vmem, size = 0x1000, scoped, tag = 'scoped mem for output reshape']
    #allocation1 [shape = 'u8[4096]{0}', space=vmem, size = 0x1000, scoped, tag = 'scoped mem for input reshape']
    %s3 = sshll.u32 1, 2
    %s4 = ssub.s32 %s3, 1
    %v5 = vld [vmem:[%s0] sm:%s4]
    %6 = vst [vmem:[#allocation1] sm:%s4] %v5
    %v7 = vld [vmem:[#allocation1] sm:$0x1]
    %vm8 = vcmask 64512
    %9 = vst.msk [vmem:[#allocation0] sm:$0x1] %vm8, %v7
    %s10 = scalar_lea.vmem [#allocation1], 1
    %v11 = vld [vmem:[%s10] sm:$0x1]
    %12 = vrot.lane.b32.xlu0 %v11, 8
    %v13 = vpop.permute.xlu0 %12
    %vm14 = vcmask 130112
    %15 = vst.msk [vmem:[#allocation0] sm:$0x1] %vm14, %v13
    %s17 = sshll.u32 1, 1
    %s18 = ssub.s32 %s17, 1
    %v20 = vld [vmem:[#allocation0] sm:%s18]
    %s21 = sshll.u32 1, 1
    %s22 = ssub.s32 %s21, 1
    %23 = vst [vmem:[%s1] sm:%s22] %v20

// kernel: tile.11
$region0: #{tile.11}
  #allocation0 [shape = 's32[1]{0}', space=sflag, size = 0x4, scoped, tag = 'scoped memory for tile.11']
  %s0 = inlined_call_operand.vmem [shape: f32[16], index: 0, kind: input, shape index: {}]
  %s1 = inlined_call_operand.vmem [shape: f32[2,16], index: 1, kind: output, shape index: {}]
  // Predicated region
  $region2: #{tile.11} parent=0 // pred_check
    _
  $region3: #{tile.11} parent=0 // pred_check_branch
    %3 = sbr.rel (0) target = $region5
  $region4: #{tile.11} parent=0 // pred_region
    _
  $region5: #{tile.11} parent=0 // pred_fallthru
    _
  %v4 = vld [vmem:[%s0] ss:$0 sm:$0xff]
  %5 = vst [vmem:[%s1] sm:$0x3] %v4

// kernel: mul.7
$region0: #{mul.7}
  %s0 = inlined_call_operand.vmem [shape: f32[2,16], index: 0, kind: input, shape index: {}]
  %s1 = inlined_call_operand.vmem [shape: f32[32], index: 1, kind: output, shape index: {}]
  $region1: #{mul.7} parent=0
    #allocation0 [shape = 'u8[4096]{0}', space=vmem, size = 0x1000, scoped, tag = 'scoped mem for output reshape']
    #allocation1 [shape = 'u8[4096]{0}', space=vmem, size = 0x1000, scoped, tag = 'scoped mem for input reshape']
    %s3 = sshll.u32 1, 2
    %s4 = ssub.s32 %s3, 1
    %v5 = vld [vmem:[%s0] sm:%s4]
    %6 = vst [vmem:[#allocation1] sm:%s4] %v5
    %v7 = vld [vmem:[#allocation1] sm:$0x1]
    %vm8 = vcmask 130048
    %9 = vst.msk [vmem:[#allocation0] sm:$0x1] %vm8, %v7
    %s10 = scalar_lea.vmem [#allocation1], 1
    %v11 = vld [vmem:[%s10] sm:$0x1]
    %12 = vrot.lane.b32.xlu0 %v11, 16
    %v13 = vpop.permute.xlu0 %12
    %vm14 = vcmask 261248
    %15 = vst.msk [vmem:[#allocation0] sm:$0x1] %vm14, %v13
    %s17 = sshll.u32 1, 1
    %s18 = ssub.s32 %s17, 1
    %v20 = vld [vmem:[#allocation0] sm:%s18]
    %s21 = sshll.u32 1, 1
    %s22 = ssub.s32 %s21, 1
    %23 = vst [vmem:[%s1] sm:%s22] %v20

// kernel: eq.29
$region0: #{eq.29}
  %s0 = inlined_call_operand.vmem [shape: s32[2,2,8], index: 0, kind: input, shape index: {}]
  %s1 = inlined_call_operand.vmem [shape: s32[32], index: 1, kind: output, shape index: {}]
  $region1: #{eq.29} parent=0
    #allocation0 [shape = 'u8[4096]{0}', space=vmem, size = 0x1000, scoped, tag = 'scoped mem for output reshape']
    #allocation1 [shape = 'u8[8192]{0}', space=vmem, size = 0x2000, scoped, tag = 'scoped mem for input reshape']
    %s3 = sshll.u32 1, 2
    %s4 = ssub.s32 %s3, 1
    %s5 = scalar_lea.vmem %s0, 2
    %v6 = vld [vmem:[%s5] sm:%s4]
    %s7 = scalar_lea.vmem [#allocation1], 8
    %8 = vst [vmem:[%s7] sm:%s4] %v6
    %v9 = vld [vmem:[%s0] sm:%s4]
    %10 = vst [vmem:[#allocation1] sm:%s4] %v9
    %v11 = vld [vmem:[#allocation1] sm:$0x1]
    %vm12 = vcmask 64512
    %13 = vst.msk [vmem:[#allocation0] sm:$0x1] %vm12, %v11
    %s14 = scalar_lea.vmem [#allocation1], 9
    %v15 = vld [vmem:[%s14] sm:$0x1]
    %16 = vrot.lane.b32.xlu0 %v15, 24
    %v17 = vpop.permute.xlu0 %16
    %vm18 = vcmask 261312
    %19 = vst.msk [vmem:[#allocation0] sm:$0x1] %vm18, %v17
    %s20 = scalar_lea.vmem [#allocation1], 8
    %v21 = vld [vmem:[%s20] sm:$0x1]
    %22 = vrot.lane.b32.xlu0 %v21, 16
    %v23 = vpop.permute.xlu0 %22
    %vm24 = vcmask 195712
    %25 = vst.msk [vmem:[#allocation0] sm:$0x1] %vm24, %v23
    %s26 = scalar_lea.vmem [#allocation1], 1
    %v27 = vld [vmem:[%s26] sm:$0x1]
    %28 = vrot.lane.b32.xlu0 %v27, 8
    %v29 = vpop.permute.xlu0 %28
    %vm30 = vcmask 130112
    %31 = vst.msk [vmem:[#allocation0] sm:$0x1] %vm30, %v29
    %s33 = sshll.u32 1, 1
    %s34 = ssub.s32 %s33, 1
    %v36 = vld [vmem:[#allocation0] sm:%s34]
    %s37 = sshll.u32 1, 1
    %s38 = ssub.s32 %s37, 1
    %39 = vst [vmem:[%s1] sm:%s38] %v36

// kernel: msbert_forward.1
$region0: #{msbert_forward.1}
  #allocation0 [shape = 'u32[]', space=smem, size = 0x4, offset = 0x4, fixed_abs, tag = 'smem constant byte address 0x4 - core index']
  #allocation1 [shape = 'u32[144,128]{1,0:T(1,128)}', space=vmem, size = 0x12000, scoped, tag = 'internal scratch']
  %s0 = inlined_call_operand.vmem [shape: f32[32,128], index: 0, kind: input, shape index: {}]
  %s1 = inlined_call_operand.vmem [shape: f32[128,32], index: 1, kind: input, shape index: {}]
  %s2 = inlined_call_operand.vmem [shape: f32[128,32], index: 2, kind: input, shape index: {}]
  %s3 = inlined_call_operand.vmem [shape: f32[128,32], index: 3, kind: input, shape index: {}]
  %s4 = inlined_call_operand.vmem [shape: f32[32,128], index: 4, kind: input, shape index: {}]
  %s5 = inlined_call_operand.vmem [shape: f32[128,32], index: 5, kind: input, shape index: {}]
  %s6 = inlined_call_operand.vmem [shape: f32[16,32], index: 6, kind: input, shape index: {}]
  %s7 = inlined_call_operand.vmem [shape: f32[16,32], index: 7, kind: input, shape index: {}]
  %s8 = inlined_call_operand.vmem [shape: f32[32,32], index: 8, kind: input, shape index: {}]
  %s9 = inlined_call_operand.vmem [shape: f32[1,32], index: 9, kind: input, shape index: {}]
  %s10 = inlined_call_operand.vmem [shape: f32[32,128], index: 10, kind: input, shape index: {}]
  %s11 = inlined_call_operand.vmem [shape: f32[32,128], index: 11, kind: input, shape index: {}]
  %s12 = inlined_call_operand.vmem [shape: f32[2,1,32], index: 12, kind: input, shape index: {}]
  %s13 = inlined_call_operand.vmem [shape: f32[2,1,32], index: 13, kind: input, shape index: {}]
  %s14 = inlined_call_operand.vmem [shape: f32[2,32,32], index: 14, kind: input, shape index: {}]
  %s15 = inlined_call_operand.vmem [shape: f32[2,1,32], index: 15, kind: input, shape index: {}]
  %s16 = inlined_call_operand.vmem [shape: f32[2,32,32], index: 16, kind: input, shape index: {}]
  %s17 = inlined_call_operand.vmem [shape: f32[2,1,32], index: 17, kind: input, shape index: {}]
  %s18 = inlined_call_operand.vmem [shape: f32[2,32,32], index: 18, kind: input, shape index: {}]
  %s19 = inlined_call_operand.vmem [shape: f32[2,1,32], index: 19, kind: input, shape index: {}]
  %s20 = inlined_call_operand.vmem [shape: f32[2,32,32], index: 20, kind: input, shape index: {}]
  %s21 = inlined_call_operand.vmem [shape: f32[2,1,32], index: 21, kind: input, shape index: {}]
  %s22 = inlined_call_operand.vmem [shape: f32[2,1,32], index: 22, kind: input, shape index: {}]
  %s23 = inlined_call_operand.vmem [shape: f32[2,1,32], index: 23, kind: input, shape index: {}]
  %s24 = inlined_call_operand.vmem [shape: f32[2,32,128], index: 24, kind: input, shape index: {}]
  %s25 = inlined_call_operand.vmem [shape: f32[2,1,128], index: 25, kind: input, shape index: {}]
  %s26 = inlined_call_operand.vmem [shape: f32[2,128,32], index: 26, kind: input, shape index: {}]
  %s27 = inlined_call_operand.vmem [shape: f32[2,1,32], index: 27, kind: input, shape index: {}]
  %s28 = inlined_call_operand.vmem [shape: f32[16,128], index: 28, kind: output, shape index: {}]
  %s29 = sld [smem:[#allocation0]]
  $region122: #{msbert_forward.1} parent=0
    _
  %s31 = ssub.s32 1, %s29
  %s32 = scalar_select 0, %s31, %s29
  // Predicated region
  $region2: #{msbert_forward.1} parent=0 // pred_check
    _
  $region3: #{msbert_forward.1} parent=0 // pred_check_branch
    %34 = sbr.rel (0) target = $region5
  $region4: #{msbert_forward.1} parent=0 // pred_region
    _
  $region5: #{msbert_forward.1} parent=0 // pred_fallthru
    _
  // Predicated region
  $region6: #{msbert_forward.1} parent=0 // pred_check
    _
  $region7: #{msbert_forward.1} parent=0 // pred_check_branch
    %36 = sbr.rel (0) target = $region9
  $region8: #{msbert_forward.1} parent=0 // pred_region
    _
  $region9: #{msbert_forward.1} parent=0 // pred_fallthru
    _
  // Predicated region
  $region10: #{msbert_forward.1} parent=0 // pred_check
    _
  $region11: #{msbert_forward.1} parent=0 // pred_check_branch
    %38 = sbr.rel (0) target = $region13
  $region12: #{msbert_forward.1} parent=0 // pred_region
    _
  $region13: #{msbert_forward.1} parent=0 // pred_fallthru
    _
  // Predicated region
  $region14: #{msbert_forward.1} parent=0 // pred_check
    _
  $region15: #{msbert_forward.1} parent=0 // pred_check_branch
    %40 = sbr.rel (0) target = $region17
  $region16: #{msbert_forward.1} parent=0 // pred_region
    _
  $region17: #{msbert_forward.1} parent=0 // pred_fallthru
    _
  // Predicated region
  $region18: #{msbert_forward.1} parent=0 // pred_check
    _
  $region19: #{msbert_forward.1} parent=0 // pred_check_branch
    %42 = sbr.rel (0) target = $region21
  $region20: #{msbert_forward.1} parent=0 // pred_region
    _
  $region21: #{msbert_forward.1} parent=0 // pred_fallthru
    _
  // Predicated region
  $region22: #{msbert_forward.1} parent=0 // pred_check
    _
  $region23: #{msbert_forward.1} parent=0 // pred_check_branch
    %44 = sbr.rel (0) target = $region25
  $region24: #{msbert_forward.1} parent=0 // pred_region
    _
  $region25: #{msbert_forward.1} parent=0 // pred_fallthru
    _
  // Predicated region
  $region26: #{msbert_forward.1} parent=0 // pred_check
    _
  $region27: #{msbert_forward.1} parent=0 // pred_check_branch
    %46 = sbr.rel (0) target = $region29
  $region28: #{msbert_forward.1} parent=0 // pred_region
    _
  $region29: #{msbert_forward.1} parent=0 // pred_fallthru
    _
  // Predicated region
  $region30: #{msbert_forward.1} parent=0 // pred_check
    _
  $region31: #{msbert_forward.1} parent=0 // pred_check_branch
    %48 = sbr.rel (0) target = $region33
  $region32: #{msbert_forward.1} parent=0 // pred_region
    _
  $region33: #{msbert_forward.1} parent=0 // pred_fallthru
    _
  // Predicated region
  $region34: #{msbert_forward.1} parent=0 // pred_check
    _
  $region35: #{msbert_forward.1} parent=0 // pred_check_branch
    %50 = sbr.rel (0) target = $region37
  $region36: #{msbert_forward.1} parent=0 // pred_region
    _
  $region37: #{msbert_forward.1} parent=0 // pred_fallthru
    _
  // Predicated region
  $region38: #{msbert_forward.1} parent=0 // pred_check
    _
  $region39: #{msbert_forward.1} parent=0 // pred_check_branch
    %52 = sbr.rel (0) target = $region41
  $region40: #{msbert_forward.1} parent=0 // pred_region
    _
  $region41: #{msbert_forward.1} parent=0 // pred_fallthru
    _
  // Predicated region
  $region42: #{msbert_forward.1} parent=0 // pred_check
    _
  $region43: #{msbert_forward.1} parent=0 // pred_check_branch
    %54 = sbr.rel (0) target = $region45
  $region44: #{msbert_forward.1} parent=0 // pred_region
    _
  $region45: #{msbert_forward.1} parent=0 // pred_fallthru
    _
  // Predicated region
  $region46: #{msbert_forward.1} parent=0 // pred_check
    _
  $region47: #{msbert_forward.1} parent=0 // pred_check_branch
    %56 = sbr.rel (0) target = $region49
  $region48: #{msbert_forward.1} parent=0 // pred_region
    _
  $region49: #{msbert_forward.1} parent=0 // pred_fallthru
    _
  // Predicated region
  $region50: #{msbert_forward.1} parent=0 // pred_check
    _
  $region51: #{msbert_forward.1} parent=0 // pred_check_branch
    %58 = sbr.rel (0) target = $region53
  $region52: #{msbert_forward.1} parent=0 // pred_region
    _
  $region53: #{msbert_forward.1} parent=0 // pred_fallthru
    _
  // Predicated region
  $region54: #{msbert_forward.1} parent=0 // pred_check
    _
  $region55: #{msbert_forward.1} parent=0 // pred_check_branch
    %60 = sbr.rel (0) target = $region57
  $region56: #{msbert_forward.1} parent=0 // pred_region
    _
  $region57: #{msbert_forward.1} parent=0 // pred_fallthru
    _
  // Predicated region
  $region58: #{msbert_forward.1} parent=0 // pred_check
    _
  $region59: #{msbert_forward.1} parent=0 // pred_check_branch
    %62 = sbr.rel (0) target = $region61
  $region60: #{msbert_forward.1} parent=0 // pred_region
    _
  $region61: #{msbert_forward.1} parent=0 // pred_fallthru
    _
  // Predicated region
  $region62: #{msbert_forward.1} parent=0 // pred_check
    _
  $region63: #{msbert_forward.1} parent=0 // pred_check_branch
    %64 = sbr.rel (0) target = $region65
  $region64: #{msbert_forward.1} parent=0 // pred_region
    _
  $region65: #{msbert_forward.1} parent=0 // pred_fallthru
    _
  // Predicated region
  $region66: #{msbert_forward.1} parent=0 // pred_check
    _
  $region67: #{msbert_forward.1} parent=0 // pred_check_branch
    %66 = sbr.rel (0) target = $region69
  $region68: #{msbert_forward.1} parent=0 // pred_region
    _
  $region69: #{msbert_forward.1} parent=0 // pred_fallthru
    _
  // Predicated region
  $region70: #{msbert_forward.1} parent=0 // pred_check
    _
  $region71: #{msbert_forward.1} parent=0 // pred_check_branch
    %68 = sbr.rel (0) target = $region73
  $region72: #{msbert_forward.1} parent=0 // pred_region
    _
  $region73: #{msbert_forward.1} parent=0 // pred_fallthru
    _
  // Predicated region
  $region74: #{msbert_forward.1} parent=0 // pred_check
    _
  $region75: #{msbert_forward.1} parent=0 // pred_check_branch
    %70 = sbr.rel (0) target = $region77
  $region76: #{msbert_forward.1} parent=0 // pred_region
    _
  $region77: #{msbert_forward.1} parent=0 // pred_fallthru
    _
  // Predicated region
  $region78: #{msbert_forward.1} parent=0 // pred_check
    _
  $region79: #{msbert_forward.1} parent=0 // pred_check_branch
    %72 = sbr.rel (0) target = $region81
  $region80: #{msbert_forward.1} parent=0 // pred_region
    _
  $region81: #{msbert_forward.1} parent=0 // pred_fallthru
    _
  // Predicated region
  $region82: #{msbert_forward.1} parent=0 // pred_check
    _
  $region83: #{msbert_forward.1} parent=0 // pred_check_branch
    %74 = sbr.rel (0) target = $region85
  $region84: #{msbert_forward.1} parent=0 // pred_region
    _
  $region85: #{msbert_forward.1} parent=0 // pred_fallthru
    _
  // Predicated region
  $region86: #{msbert_forward.1} parent=0 // pred_check
    _
  $region87: #{msbert_forward.1} parent=0 // pred_check_branch
    %76 = sbr.rel (0) target = $region89
  $region88: #{msbert_forward.1} parent=0 // pred_region
    _
  $region89: #{msbert_forward.1} parent=0 // pred_fallthru
    _
  // Predicated region
  $region90: #{msbert_forward.1} parent=0 // pred_check
    _
  $region91: #{msbert_forward.1} parent=0 // pred_check_branch
    %78 = sbr.rel (0) target = $region93
  $region92: #{msbert_forward.1} parent=0 // pred_region
    _
  $region93: #{msbert_forward.1} parent=0 // pred_fallthru
    _
  // Predicated region
  $region94: #{msbert_forward.1} parent=0 // pred_check
    _
  $region95: #{msbert_forward.1} parent=0 // pred_check_branch
    %80 = sbr.rel (0) target = $region97
  $region96: #{msbert_forward.1} parent=0 // pred_region
    _
  $region97: #{msbert_forward.1} parent=0 // pred_fallthru
    _
  // Predicated region
  $region98: #{msbert_forward.1} parent=0 // pred_check
    _
  $region99: #{msbert_forward.1} parent=0 // pred_check_branch
    %82 = sbr.rel (0) target = $region101
  $region100: #{msbert_forward.1} parent=0 // pred_region
    _
  $region101: #{msbert_forward.1} parent=0 // pred_fallthru
    _
  // Predicated region
  $region102: #{msbert_forward.1} parent=0 // pred_check
    _
  $region103: #{msbert_forward.1} parent=0 // pred_check_branch
    %84 = sbr.rel (0) target = $region105
  $region104: #{msbert_forward.1} parent=0 // pred_region
    _
  $region105: #{msbert_forward.1} parent=0 // pred_fallthru
    _
  // Predicated region
  $region106: #{msbert_forward.1} parent=0 // pred_check
    _
  $region107: #{msbert_forward.1} parent=0 // pred_check_branch
    %86 = sbr.rel (0) target = $region109
  $region108: #{msbert_forward.1} parent=0 // pred_region
    _
  $region109: #{msbert_forward.1} parent=0 // pred_fallthru
    _
  // Predicated region
  $region110: #{msbert_forward.1} parent=0 // pred_check
    _
  $region111: #{msbert_forward.1} parent=0 // pred_check_branch
    %88 = sbr.rel (0) target = $region113
  $region112: #{msbert_forward.1} parent=0 // pred_region
    _
  $region113: #{msbert_forward.1} parent=0 // pred_fallthru
    _
  %v89 = vld [vmem:[%s0] sm:$0xff]
  %v90 = vld [vmem:[%s0 + $0x8] sm:$0xff]
  %v91 = vld [vmem:[%s0 + $0x10] sm:$0xff]
  %v92 = vld [vmem:[%s0 + $0x18] sm:$0xff]
  %v93 = vld [vmem:[%s1] sm:$0xff]
  %v94 = vld [vmem:[%s1 + $0x8] sm:$0xff]
  %v95 = vld [vmem:[%s1 + $0x10] sm:$0xff]
  %v96 = vld [vmem:[%s1 + $0x18] sm:$0xff]
  %v97 = vld [vmem:[%s1 + $0x20] sm:$0xff]
  %v98 = vld [vmem:[%s1 + $0x28] sm:$0xff]
  %v99 = vld [vmem:[%s1 + $0x30] sm:$0xff]
  %v100 = vld [vmem:[%s1 + $0x38] sm:$0xff]
  %v101 = vld [vmem:[%s1 + $0x40] sm:$0xff]
  %v102 = vld [vmem:[%s1 + $0x48] sm:$0xff]
  %v103 = vld [vmem:[%s1 + $0x50] sm:$0xff]
  %v104 = vld [vmem:[%s1 + $0x58] sm:$0xff]
  %v105 = vld [vmem:[%s1 + $0x60] sm:$0xff]
  %v106 = vld [vmem:[%s1 + $0x68] sm:$0xff]
  %v107 = vld [vmem:[%s1 + $0x70] sm:$0xff]
  %v108 = vld [vmem:[%s1 + $0x78] sm:$0xff]
  %109 = vmatprep.subr.mxu0 0.0
  %110 = vmatpush1.msra.mxu0 %v108
  %111 = vmatprep.subr.mxu0 0.0
  %112 = vmatpush1.msra.mxu0 %v107
  %113 = vmatprep.subr.mxu0 0.0
  %114 = vmatpush1.msra.mxu0 %v106
  %115 = vmatprep.subr.mxu0 0.0
  %116 = vmatpush1.msra.mxu0 %v105
  %117 = vmatprep.subr.mxu0 0.0
  %118 = vmatpush1.msra.mxu0 %v104
  %119 = vmatprep.subr.mxu0 0.0
  %120 = vmatpush1.msra.mxu0 %v103
  %121 = vmatprep.subr.mxu0 0.0
  %122 = vmatpush1.msra.mxu0 %v102
  %123 = vmatprep.subr.mxu0 0.0
  %124 = vmatpush1.msra.mxu0 %v101
  %125 = vmatprep.subr.mxu0 0.0
  %126 = vmatpush1.msra.mxu0 %v100
  %127 = vmatprep.subr.mxu0 0.0
  %128 = vmatpush1.msra.mxu0 %v99
  %129 = vmatprep.subr.mxu0 0.0
  %130 = vmatpush1.msra.mxu0 %v98
  %131 = vmatprep.subr.mxu0 0.0
  %132 = vmatpush1.msra.mxu0 %v97
  %133 = vmatprep.subr.mxu0 0.0
  %134 = vmatpush1.msra.mxu0 %v96
  %135 = vmatprep.subr.mxu0 0.0
  %136 = vmatpush1.msra.mxu0 %v95
  %137 = vmatprep.subr.mxu0 0.0
  %138 = vmatpush1.msra.mxu0 %v94
  %139 = vmatprep.subr.mxu0 0.0
  %140 = vmatpush1.msra.mxu0 %v93
  %141 = vmatprep.subr.mxu0 0.0
  %142 = vmatpush2.msra.mxu0 0.0
  %143 = vmatprep.subr.mxu0 0.0
  %144 = vmatpush2.msra.mxu0 0.0
  %145 = vmatprep.subr.mxu0 0.0
  %146 = vmatpush2.msra.mxu0 0.0
  %147 = vmatprep.subr.mxu0 0.0
  %148 = vmatpush2.msra.mxu0 0.0
  %149 = vmatprep.subr.mxu0 0.0
  %150 = vmatpush2.msra.mxu0 0.0
  %151 = vmatprep.subr.mxu0 0.0
  %152 = vmatpush2.msra.mxu0 0.0
  %153 = vmatprep.subr.mxu0 0.0
  %154 = vmatpush2.msra.mxu0 0.0
  %155 = vmatprep.subr.mxu0 0.0
  %156 = vmatpush2.msra.mxu0 0.0
  %157 = vmatprep.subr.mxu0 0.0
  %158 = vmatpush2.msra.mxu0 0.0
  %159 = vmatprep.subr.mxu0 0.0
  %160 = vmatpush2.msra.mxu0 0.0
  %161 = vmatprep.subr.mxu0 0.0
  %162 = vmatpush2.msra.mxu0 0.0
  %163 = vmatprep.subr.mxu0 0.0
  %164 = vmatpush2.msra.mxu0 0.0
  %165 = vmatprep.subr.mxu0 0.0
  %166 = vmatpush2.msra.mxu0 0.0
  %167 = vmatprep.subr.mxu0 0.0
  %168 = vmatpush2.msra.mxu0 0.0
  %169 = vmatprep.subr.mxu0 0.0
  %170 = vmatpush2.msra.mxu0 0.0
  %171 = vmatprep.subr.mxu0 0.0
  %172 = vmatpush2.msra.mxu0 0.0
  %173 = vmatprep.mubr.f32.mxu0 0.0
  %174 = vmatmul.mubr.f32.gmra.mxu0 %v89
  %v175 = vpop.f32.mrf.mxu0
  %v176 = vadd.f32 0.0, %v175
  %v177 = vpop.f32.mrf.mxu0
  %178 = vmatprep.mubr.f32.mxu0 0.0
  %179 = vmatmul.mubr.f32.gmra.mxu0 %v90
  %v180 = vpop.f32.mrf.mxu0
  %v181 = vadd.f32 0.0, %v180
  %v182 = vpop.f32.mrf.mxu0
  %183 = vmatprep.mubr.f32.mxu0 0.0
  %184 = vmatmul.mubr.f32.gmra.mxu0 %v91
  %v185 = vpop.f32.mrf.mxu0
  %v186 = vadd.f32 0.0, %v185
  %v187 = vpop.f32.mrf.mxu0
  %188 = vmatprep.mubr.f32.mxu0 0.0
  %189 = vmatmul.mubr.f32.gmra.mxu0 %v92
  %v190 = vpop.f32.mrf.mxu0
  %v191 = vadd.f32 0.0, %v190
  %v192 = vpop.f32.mrf.mxu0
  %193 = vdwg.mxu0
  %v194 = vld [vmem:[%s3] sm:$0xff]
  %v195 = vld [vmem:[%s3 + $0x8] sm:$0xff]
  %v196 = vld [vmem:[%s3 + $0x10] sm:$0xff]
  %v197 = vld [vmem:[%s3 + $0x18] sm:$0xff]
  %v198 = vld [vmem:[%s3 + $0x20] sm:$0xff]
  %v199 = vld [vmem:[%s3 + $0x28] sm:$0xff]
  %v200 = vld [vmem:[%s3 + $0x30] sm:$0xff]
  %v201 = vld [vmem:[%s3 + $0x38] sm:$0xff]
  %v202 = vld [vmem:[%s3 + $0x40] sm:$0xff]
  %v203 = vld [vmem:[%s3 + $0x48] sm:$0xff]
  %v204 = vld [vmem:[%s3 + $0x50] sm:$0xff]
  %v205 = vld [vmem:[%s3 + $0x58] sm:$0xff]
  %v206 = vld [vmem:[%s3 + $0x60] sm:$0xff]
  %v207 = vld [vmem:[%s3 + $0x68] sm:$0xff]
  %v208 = vld [vmem:[%s3 + $0x70] sm:$0xff]
  %v209 = vld [vmem:[%s3 + $0x78] sm:$0xff]
  %v210 = vld [vmem:[%s4] sm:$0xff]
  %v211 = vld [vmem:[%s4 + $0x8] sm:$0xff]
  %v212 = vld [vmem:[%s4 + $0x10] sm:$0xff]
  %v213 = vld [vmem:[%s4 + $0x18] sm:$0xff]
  %v214 = vld [vmem:[%s5] sm:$0xff]
  %v215 = vld [vmem:[%s5 + $0x8] sm:$0xff]
  %v216 = vld [vmem:[%s5 + $0x10] sm:$0xff]
  %v217 = vld [vmem:[%s5 + $0x18] sm:$0xff]
  %v218 = vld [vmem:[%s5 + $0x20] sm:$0xff]
  %v219 = vld [vmem:[%s5 + $0x28] sm:$0xff]
  %v220 = vld [vmem:[%s5 + $0x30] sm:$0xff]
  %v221 = vld [vmem:[%s5 + $0x38] sm:$0xff]
  %v222 = vld [vmem:[%s5 + $0x40] sm:$0xff]
  %v223 = vld [vmem:[%s5 + $0x48] sm:$0xff]
  %v224 = vld [vmem:[%s5 + $0x50] sm:$0xff]
  %v225 = vld [vmem:[%s5 + $0x58] sm:$0xff]
  %v226 = vld [vmem:[%s5 + $0x60] sm:$0xff]
  %v227 = vld [vmem:[%s5 + $0x68] sm:$0xff]
  %v228 = vld [vmem:[%s5 + $0x70] sm:$0xff]
  %v229 = vld [vmem:[%s5 + $0x78] sm:$0xff]
  %v230 = vld [vmem:[%s2] sm:$0xff]
  %v231 = vld [vmem:[%s2 + $0x8] sm:$0xff]
  %v232 = vld [vmem:[%s2 + $0x10] sm:$0xff]
  %v233 = vld [vmem:[%s2 + $0x18] sm:$0xff]
  %v234 = vld [vmem:[%s2 + $0x20] sm:$0xff]
  %v235 = vld [vmem:[%s2 + $0x28] sm:$0xff]
  %v236 = vld [vmem:[%s2 + $0x30] sm:$0xff]
  %v237 = vld [vmem:[%s2 + $0x38] sm:$0xff]
  %v238 = vld [vmem:[%s2 + $0x40] sm:$0xff]
  %v239 = vld [vmem:[%s2 + $0x48] sm:$0xff]
  %v240 = vld [vmem:[%s2 + $0x50] sm:$0xff]
  %v241 = vld [vmem:[%s2 + $0x58] sm:$0xff]
  %v242 = vld [vmem:[%s2 + $0x60] sm:$0xff]
  %v243 = vld [vmem:[%s2 + $0x68] sm:$0xff]
  %v244 = vld [vmem:[%s2 + $0x70] sm:$0xff]
  %v245 = vld [vmem:[%s2 + $0x78] sm:$0xff]
  %v246 = vld [vmem:[%s12] sm:$0x1]
  %v247 = vld [vmem:[%s13] sm:$0x1]
  %vm248 = vcmask 261120
  %v249 = vsel %vm248, %v176, 0.0
  %250 = vadd.xlane.f32.xlu0 %v249
  %v251 = vpop.xlane.xlu0 %250
  %v252 = vsel %vm248, %v181, 0.0
  %253 = vadd.xlane.f32.xlu0 %v252
  %v254 = vpop.xlane.xlu0 %253
  %v255 = vsel %vm248, %v186, 0.0
  %256 = vadd.xlane.f32.xlu0 %v255
  %v257 = vpop.xlane.xlu0 %256
  %v258 = vsel %vm248, %v191, 0.0
  %259 = vadd.xlane.f32.xlu0 %v258
  %v260 = vpop.xlane.xlu0 %259
  %v261 = vrcp.pop 32.0
  %v262 = vmul.f32 %v251, %v261
  %v263 = vmul.f32 %v254, %v261
  %v264 = vmul.f32 %v257, %v261
  %v265 = vmul.f32 %v260, %v261
  %v266 = vsub.f32 %v176, %v262
  %v267 = vsub.f32 %v181, %v263
  %v268 = vsub.f32 %v186, %v264
  %v269 = vsub.f32 %v191, %v265
  %v270 = vmul.f32 %v266, %v266
  %v271 = vmul.f32 %v267, %v267
  %v272 = vmul.f32 %v268, %v268
  %v273 = vmul.f32 %v269, %v269
  %v274 = vsel %vm248, %v270, 0.0
  %275 = vadd.xlane.f32.xlu0 %v274
  %v276 = vpop.xlane.xlu0 %275
  %v277 = vsel %vm248, %v271, 0.0
  %278 = vadd.xlane.f32.xlu0 %v277
  %v279 = vpop.xlane.xlu0 %278
  %v280 = vsel %vm248, %v272, 0.0
  %281 = vadd.xlane.f32.xlu0 %v280
  %v282 = vpop.xlane.xlu0 %281
  %v283 = vsel %vm248, %v273, 0.0
  %284 = vadd.xlane.f32.xlu0 %v283
  %v285 = vpop.xlane.xlu0 %284
  %v286 = vmul.f32 %v276, %v261
  %v287 = vmul.f32 %v279, %v261
  %v288 = vmul.f32 %v282, %v261
  %v289 = vmul.f32 %v285, %v261
  %v290 = vadd.f32 %v286, 1e-05
  %v291 = vadd.f32 %v287, 1e-05
  %v292 = vadd.f32 %v288, 1e-05
  %v293 = vadd.f32 %v289, 1e-05
  %v294 = vrsqrt.pop %v290
  %v295 = vrsqrt.pop %v291
  %v296 = vrsqrt.pop %v292
  %v297 = vrsqrt.pop %v293
  %v298 = vmul.f32 %v266, %v294
  %v299 = vmul.f32 %v267, %v295
  %v300 = vmul.f32 %v268, %v296
  %v301 = vmul.f32 %v269, %v297
  %v303 = vlaneseq
  %v304 = vshrl.u32 %v303, 7
  %v305 = vsub.s32 0, %v304
  %v306 = vrot.slane %v246, %v305
  %v308 = vmul.f32 %v298, %v306
  %v309 = vmul.f32 %v299, %v306
  %v310 = vmul.f32 %v300, %v306
  %v311 = vmul.f32 %v301, %v306
  %v313 = vlaneseq
  %v314 = vshrl.u32 %v313, 7
  %v315 = vsub.s32 0, %v314
  %v316 = vrot.slane %v247, %v315
  %v318 = vadd.f32 %v308, %v316
  %v319 = vadd.f32 %v309, %v316
  %v320 = vadd.f32 %v310, %v316
  %v321 = vadd.f32 %v311, %v316
  %v322 = vld [vmem:[%s14] sm:$0xff]
  %v323 = vld [vmem:[%s14 + $0x8] sm:$0xff]
  %v324 = vld [vmem:[%s14 + $0x10] sm:$0xff]
  %v325 = vld [vmem:[%s14 + $0x18] sm:$0xff]
  %v326 = vld [vmem:[%s15] sm:$0x1]
  %v328 = vlaneseq
  %v329 = vshrl.u32 %v328, 7
  %v330 = vsub.s32 0, %v329
  %v331 = vrot.slane %v326, %v330
  %v334 = vsel %vm248, %v318, 0
  %v337 = vsel %vm248, %v319, 0
  %v340 = vsel %vm248, %v320, 0
  %v343 = vsel %vm248, %v321, 0
  %345 = vmatprep.subr.mxu0 0.0
  %346 = vmatpush1.msra.mxu0 0.0
  %347 = vmatprep.subr.mxu0 0.0
  %348 = vmatpush1.msra.mxu0 0.0
  %349 = vmatprep.subr.mxu0 0.0
  %350 = vmatpush1.msra.mxu0 0.0
  %351 = vmatprep.subr.mxu0 0.0
  %352 = vmatpush1.msra.mxu0 0.0
  %353 = vmatprep.subr.mxu0 0.0
  %354 = vmatpush1.msra.mxu0 0.0
  %355 = vmatprep.subr.mxu0 0.0
  %356 = vmatpush1.msra.mxu0 0.0
  %357 = vmatprep.subr.mxu0 0.0
  %358 = vmatpush1.msra.mxu0 0.0
  %359 = vmatprep.subr.mxu0 0.0
  %360 = vmatpush1.msra.mxu0 0.0
  %361 = vmatprep.subr.mxu0 0.0
  %362 = vmatpush1.msra.mxu0 0.0
  %363 = vmatprep.subr.mxu0 0.0
  %364 = vmatpush1.msra.mxu0 0.0
  %365 = vmatprep.subr.mxu0 0.0
  %366 = vmatpush1.msra.mxu0 0.0
  %367 = vmatprep.subr.mxu0 0.0
  %368 = vmatpush1.msra.mxu0 0.0
  %369 = vmatprep.subr.mxu0 0.0
  %370 = vmatpush1.msra.mxu0 %v325
  %371 = vmatprep.subr.mxu0 0.0
  %372 = vmatpush1.msra.mxu0 %v324
  %373 = vmatprep.subr.mxu0 0.0
  %374 = vmatpush1.msra.mxu0 %v323
  %375 = vmatprep.subr.mxu0 0.0
  %376 = vmatpush1.msra.mxu0 %v322
  %377 = vmatprep.subr.mxu0 0.0
  %378 = vmatpush2.msra.mxu0 0.0
  %379 = vmatprep.subr.mxu0 0.0
  %380 = vmatpush2.msra.mxu0 0.0
  %381 = vmatprep.subr.mxu0 0.0
  %382 = vmatpush2.msra.mxu0 0.0
  %383 = vmatprep.subr.mxu0 0.0
  %384 = vmatpush2.msra.mxu0 0.0
  %385 = vmatprep.subr.mxu0 0.0
  %386 = vmatpush2.msra.mxu0 0.0
  %387 = vmatprep.subr.mxu0 0.0
  %388 = vmatpush2.msra.mxu0 0.0
  %389 = vmatprep.subr.mxu0 0.0
  %390 = vmatpush2.msra.mxu0 0.0
  %391 = vmatprep.subr.mxu0 0.0
  %392 = vmatpush2.msra.mxu0 0.0
  %393 = vmatprep.subr.mxu0 0.0
  %394 = vmatpush2.msra.mxu0 0.0
  %395 = vmatprep.subr.mxu0 0.0
  %396 = vmatpush2.msra.mxu0 0.0
  %397 = vmatprep.subr.mxu0 0.0
  %398 = vmatpush2.msra.mxu0 0.0
  %399 = vmatprep.subr.mxu0 0.0
  %400 = vmatpush2.msra.mxu0 0.0
  %401 = vmatprep.subr.mxu0 0.0
  %402 = vmatpush2.msra.mxu0 0.0
  %403 = vmatprep.subr.mxu0 0.0
  %404 = vmatpush2.msra.mxu0 0.0
  %405 = vmatprep.subr.mxu0 0.0
  %406 = vmatpush2.msra.mxu0 0.0
  %407 = vmatprep.subr.mxu0 0.0
  %408 = vmatpush2.msra.mxu0 0.0
  %409 = vmatprep.mubr.f32.mxu0 0.0
  %410 = vmatmul.mubr.f32.gmra.mxu0 %v334
  %v411 = vpop.f32.mrf.mxu0
  %v412 = vadd.f32 %v331, %v411
  %v413 = vpop.f32.mrf.mxu0
  %414 = vmatprep.mubr.f32.mxu0 0.0
  %415 = vmatmul.mubr.f32.gmra.mxu0 %v337
  %v416 = vpop.f32.mrf.mxu0
  %v417 = vadd.f32 %v331, %v416
  %v418 = vpop.f32.mrf.mxu0
  %419 = vmatprep.mubr.f32.mxu0 0.0
  %420 = vmatmul.mubr.f32.gmra.mxu0 %v340
  %v421 = vpop.f32.mrf.mxu0
  %v422 = vadd.f32 %v331, %v421
  %v423 = vpop.f32.mrf.mxu0
  %424 = vmatprep.mubr.f32.mxu0 0.0
  %425 = vmatmul.mubr.f32.gmra.mxu0 %v343
  %v426 = vpop.f32.mrf.mxu0
  %v427 = vadd.f32 %v331, %v426
  %v428 = vpop.f32.mrf.mxu0
  %429 = vdwg.mxu0
  %v430 = vld [vmem:[%s16] sm:$0xff]
  %v431 = vld [vmem:[%s16 + $0x8] sm:$0xff]
  %v432 = vld [vmem:[%s16 + $0x10] sm:$0xff]
  %v433 = vld [vmem:[%s16 + $0x18] sm:$0xff]
  %v434 = vld [vmem:[%s17] sm:$0x1]
  %v436 = vlaneseq
  %v437 = vshrl.u32 %v436, 7
  %v438 = vsub.s32 0, %v437
  %v439 = vrot.slane %v434, %v438
  %441 = vmatprep.subr.mxu0 0.0
  %442 = vmatpush1.msra.mxu0 0.0
  %443 = vmatprep.subr.mxu0 0.0
  %444 = vmatpush1.msra.mxu0 0.0
  %445 = vmatprep.subr.mxu0 0.0
  %446 = vmatpush1.msra.mxu0 0.0
  %447 = vmatprep.subr.mxu0 0.0
  %448 = vmatpush1.msra.mxu0 0.0
  %449 = vmatprep.subr.mxu0 0.0
  %450 = vmatpush1.msra.mxu0 0.0
  %451 = vmatprep.subr.mxu0 0.0
  %452 = vmatpush1.msra.mxu0 0.0
  %453 = vmatprep.subr.mxu0 0.0
  %454 = vmatpush1.msra.mxu0 0.0
  %455 = vmatprep.subr.mxu0 0.0
  %456 = vmatpush1.msra.mxu0 0.0
  %457 = vmatprep.subr.mxu0 0.0
  %458 = vmatpush1.msra.mxu0 0.0
  %459 = vmatprep.subr.mxu0 0.0
  %460 = vmatpush1.msra.mxu0 0.0
  %461 = vmatprep.subr.mxu0 0.0
  %462 = vmatpush1.msra.mxu0 0.0
  %463 = vmatprep.subr.mxu0 0.0
  %464 = vmatpush1.msra.mxu0 0.0
  %465 = vmatprep.subr.mxu0 0.0
  %466 = vmatpush1.msra.mxu0 %v433
  %467 = vmatprep.subr.mxu0 0.0
  %468 = vmatpush1.msra.mxu0 %v432
  %469 = vmatprep.subr.mxu0 0.0
  %470 = vmatpush1.msra.mxu0 %v431
  %471 = vmatprep.subr.mxu0 0.0
  %472 = vmatpush1.msra.mxu0 %v430
  %473 = vmatprep.subr.mxu0 0.0
  %474 = vmatpush2.msra.mxu0 0.0
  %475 = vmatprep.subr.mxu0 0.0
  %476 = vmatpush2.msra.mxu0 0.0
  %477 = vmatprep.subr.mxu0 0.0
  %478 = vmatpush2.msra.mxu0 0.0
  %479 = vmatprep.subr.mxu0 0.0
  %480 = vmatpush2.msra.mxu0 0.0
  %481 = vmatprep.subr.mxu0 0.0
  %482 = vmatpush2.msra.mxu0 0.0
  %483 = vmatprep.subr.mxu0 0.0
  %484 = vmatpush2.msra.mxu0 0.0
  %485 = vmatprep.subr.mxu0 0.0
  %486 = vmatpush2.msra.mxu0 0.0
  %487 = vmatprep.subr.mxu0 0.0
  %488 = vmatpush2.msra.mxu0 0.0
  %489 = vmatprep.subr.mxu0 0.0
  %490 = vmatpush2.msra.mxu0 0.0
  %491 = vmatprep.subr.mxu0 0.0
  %492 = vmatpush2.msra.mxu0 0.0
  %493 = vmatprep.subr.mxu0 0.0
  %494 = vmatpush2.msra.mxu0 0.0
  %495 = vmatprep.subr.mxu0 0.0
  %496 = vmatpush2.msra.mxu0 0.0
  %497 = vmatprep.subr.mxu0 0.0
  %498 = vmatpush2.msra.mxu0 0.0
  %499 = vmatprep.subr.mxu0 0.0
  %500 = vmatpush2.msra.mxu0 0.0
  %501 = vmatprep.subr.mxu0 0.0
  %502 = vmatpush2.msra.mxu0 0.0
  %503 = vmatprep.subr.mxu0 0.0
  %504 = vmatpush2.msra.mxu0 0.0
  %505 = vmatprep.mubr.f32.mxu0 0.0
  %506 = vmatmul.mubr.f32.gmra.mxu0 %v334
  %v507 = vpop.f32.mrf.mxu0
  %v508 = vadd.f32 %v439, %v507
  %v509 = vpop.f32.mrf.mxu0
  %510 = vmatprep.mubr.f32.mxu0 0.0
  %511 = vmatmul.mubr.f32.gmra.mxu0 %v337
  %v512 = vpop.f32.mrf.mxu0
  %v513 = vadd.f32 %v439, %v512
  %v514 = vpop.f32.mrf.mxu0
  %515 = vmatprep.mubr.f32.mxu0 0.0
  %516 = vmatmul.mubr.f32.gmra.mxu0 %v340
  %v517 = vpop.f32.mrf.mxu0
  %v518 = vadd.f32 %v439, %v517
  %v519 = vpop.f32.mrf.mxu0
  %520 = vmatprep.mubr.f32.mxu0 0.0
  %521 = vmatmul.mubr.f32.gmra.mxu0 %v343
  %v522 = vpop.f32.mrf.mxu0
  %v523 = vadd.f32 %v439, %v522
  %v524 = vpop.f32.mrf.mxu0
  %525 = vdwg.mxu0
  %v526 = vld [vmem:[%s18] sm:$0xff]
  %v527 = vld [vmem:[%s18 + $0x8] sm:$0xff]
  %v528 = vld [vmem:[%s18 + $0x10] sm:$0xff]
  %v529 = vld [vmem:[%s18 + $0x18] sm:$0xff]
  %v530 = vld [vmem:[%s19] sm:$0x1]
  %v532 = vlaneseq
  %v533 = vshrl.u32 %v532, 7
  %v534 = vsub.s32 0, %v533
  %v535 = vrot.slane %v530, %v534
  %537 = vmatprep.subr.mxu0 0.0
  %538 = vmatpush1.msra.mxu0 0.0
  %539 = vmatprep.subr.mxu0 0.0
  %540 = vmatpush1.msra.mxu0 0.0
  %541 = vmatprep.subr.mxu0 0.0
  %542 = vmatpush1.msra.mxu0 0.0
  %543 = vmatprep.subr.mxu0 0.0
  %544 = vmatpush1.msra.mxu0 0.0
  %545 = vmatprep.subr.mxu0 0.0
  %546 = vmatpush1.msra.mxu0 0.0
  %547 = vmatprep.subr.mxu0 0.0
  %548 = vmatpush1.msra.mxu0 0.0
  %549 = vmatprep.subr.mxu0 0.0
  %550 = vmatpush1.msra.mxu0 0.0
  %551 = vmatprep.subr.mxu0 0.0
  %552 = vmatpush1.msra.mxu0 0.0
  %553 = vmatprep.subr.mxu0 0.0
  %554 = vmatpush1.msra.mxu0 0.0
  %555 = vmatprep.subr.mxu0 0.0
  %556 = vmatpush1.msra.mxu0 0.0
  %557 = vmatprep.subr.mxu0 0.0
  %558 = vmatpush1.msra.mxu0 0.0
  %559 = vmatprep.subr.mxu0 0.0
  %560 = vmatpush1.msra.mxu0 0.0
  %561 = vmatprep.subr.mxu0 0.0
  %562 = vmatpush1.msra.mxu0 %v529
  %563 = vmatprep.subr.mxu0 0.0
  %564 = vmatpush1.msra.mxu0 %v528
  %565 = vmatprep.subr.mxu0 0.0
  %566 = vmatpush1.msra.mxu0 %v527
  %567 = vmatprep.subr.mxu0 0.0
  %568 = vmatpush1.msra.mxu0 %v526
  %569 = vmatprep.subr.mxu0 0.0
  %570 = vmatpush2.msra.mxu0 0.0
  %571 = vmatprep.subr.mxu0 0.0
  %572 = vmatpush2.msra.mxu0 0.0
  %573 = vmatprep.subr.mxu0 0.0
  %574 = vmatpush2.msra.mxu0 0.0
  %575 = vmatprep.subr.mxu0 0.0
  %576 = vmatpush2.msra.mxu0 0.0
  %577 = vmatprep.subr.mxu0 0.0
  %578 = vmatpush2.msra.mxu0 0.0
  %579 = vmatprep.subr.mxu0 0.0
  %580 = vmatpush2.msra.mxu0 0.0
  %581 = vmatprep.subr.mxu0 0.0
  %582 = vmatpush2.msra.mxu0 0.0
  %583 = vmatprep.subr.mxu0 0.0
  %584 = vmatpush2.msra.mxu0 0.0
  %585 = vmatprep.subr.mxu0 0.0
  %586 = vmatpush2.msra.mxu0 0.0
  %587 = vmatprep.subr.mxu0 0.0
  %588 = vmatpush2.msra.mxu0 0.0
  %589 = vmatprep.subr.mxu0 0.0
  %590 = vmatpush2.msra.mxu0 0.0
  %591 = vmatprep.subr.mxu0 0.0
  %592 = vmatpush2.msra.mxu0 0.0
  %593 = vmatprep.subr.mxu0 0.0
  %594 = vmatpush2.msra.mxu0 0.0
  %595 = vmatprep.subr.mxu0 0.0
  %596 = vmatpush2.msra.mxu0 0.0
  %597 = vmatprep.subr.mxu0 0.0
  %598 = vmatpush2.msra.mxu0 0.0
  %599 = vmatprep.subr.mxu0 0.0
  %600 = vmatpush2.msra.mxu0 0.0
  %601 = vmatprep.mubr.f32.mxu0 0.0
  %602 = vmatmul.mubr.f32.gmra.mxu0 %v334
  %v603 = vpop.f32.mrf.mxu0
  %v604 = vadd.f32 %v535, %v603
  %v605 = vpop.f32.mrf.mxu0
  %606 = vmatprep.mubr.f32.mxu0 0.0
  %607 = vmatmul.mubr.f32.gmra.mxu0 %v337
  %v608 = vpop.f32.mrf.mxu0
  %v609 = vadd.f32 %v535, %v608
  %v610 = vpop.f32.mrf.mxu0
  %611 = vmatprep.mubr.f32.mxu0 0.0
  %612 = vmatmul.mubr.f32.gmra.mxu0 %v340
  %v613 = vpop.f32.mrf.mxu0
  %v614 = vadd.f32 %v535, %v613
  %v615 = vpop.f32.mrf.mxu0
  %616 = vmatprep.mubr.f32.mxu0 0.0
  %617 = vmatmul.mubr.f32.gmra.mxu0 %v343
  %v618 = vpop.f32.mrf.mxu0
  %v619 = vadd.f32 %v535, %v618
  %v620 = vpop.f32.mrf.mxu0
  %621 = vdwg.mxu0
  %v623 = vsel %vm248, %v194, 0
  %v626 = vsel %vm248, %v195, 0
  %v629 = vsel %vm248, %v196, 0
  %v632 = vsel %vm248, %v197, 0
  %v635 = vsel %vm248, %v198, 0
  %v638 = vsel %vm248, %v199, 0
  %v641 = vsel %vm248, %v200, 0
  %v644 = vsel %vm248, %v201, 0
  %v647 = vsel %vm248, %v202, 0
  %v650 = vsel %vm248, %v203, 0
  %v653 = vsel %vm248, %v204, 0
  %v656 = vsel %vm248, %v205, 0
  %v659 = vsel %vm248, %v206, 0
  %v662 = vsel %vm248, %v207, 0
  %v665 = vsel %vm248, %v208, 0
  %v668 = vsel %vm248, %v209, 0
  %670 = vmatprep.subr.mxu0 0.0
  %671 = vmatpush1.msra.mxu0 0.0
  %672 = vmatprep.subr.mxu0 0.0
  %673 = vmatpush1.msra.mxu0 0.0
  %674 = vmatprep.subr.mxu0 0.0
  %675 = vmatpush1.msra.mxu0 0.0
  %676 = vmatprep.subr.mxu0 0.0
  %677 = vmatpush1.msra.mxu0 0.0
  %678 = vmatprep.subr.mxu0 0.0
  %679 = vmatpush1.msra.mxu0 0.0
  %680 = vmatprep.subr.mxu0 0.0
  %681 = vmatpush1.msra.mxu0 0.0
  %682 = vmatprep.subr.mxu0 0.0
  %683 = vmatpush1.msra.mxu0 0.0
  %684 = vmatprep.subr.mxu0 0.0
  %685 = vmatpush1.msra.mxu0 0.0
  %686 = vmatprep.subr.mxu0 0.0
  %687 = vmatpush1.msra.mxu0 0.0
  %688 = vmatprep.subr.mxu0 0.0
  %689 = vmatpush1.msra.mxu0 0.0
  %690 = vmatprep.subr.mxu0 0.0
  %691 = vmatpush1.msra.mxu0 0.0
  %692 = vmatprep.subr.mxu0 0.0
  %693 = vmatpush1.msra.mxu0 0.0
  %694 = vmatprep.subr.mxu0 0.0
  %695 = vmatpush1.msra.mxu0 %v427
  %696 = vmatprep.subr.mxu0 0.0
  %697 = vmatpush1.msra.mxu0 %v422
  %698 = vmatprep.subr.mxu0 0.0
  %699 = vmatpush1.msra.mxu0 %v417
  %700 = vmatprep.subr.mxu0 0.0
  %701 = vmatpush1.msra.mxu0 %v412
  %702 = vmatprep.subr.mxu0 0.0
  %703 = vmatpush2.msra.mxu0 0.0
  %704 = vmatprep.subr.mxu0 0.0
  %705 = vmatpush2.msra.mxu0 0.0
  %706 = vmatprep.subr.mxu0 0.0
  %707 = vmatpush2.msra.mxu0 0.0
  %708 = vmatprep.subr.mxu0 0.0
  %709 = vmatpush2.msra.mxu0 0.0
  %710 = vmatprep.subr.mxu0 0.0
  %711 = vmatpush2.msra.mxu0 0.0
  %712 = vmatprep.subr.mxu0 0.0
  %713 = vmatpush2.msra.mxu0 0.0
  %714 = vmatprep.subr.mxu0 0.0
  %715 = vmatpush2.msra.mxu0 0.0
  %716 = vmatprep.subr.mxu0 0.0
  %717 = vmatpush2.msra.mxu0 0.0
  %718 = vmatprep.subr.mxu0 0.0
  %719 = vmatpush2.msra.mxu0 0.0
  %720 = vmatprep.subr.mxu0 0.0
  %721 = vmatpush2.msra.mxu0 0.0
  %722 = vmatprep.subr.mxu0 0.0
  %723 = vmatpush2.msra.mxu0 0.0
  %724 = vmatprep.subr.mxu0 0.0
  %725 = vmatpush2.msra.mxu0 0.0
  %726 = vmatprep.subr.mxu0 0.0
  %727 = vmatpush2.msra.mxu0 0.0
  %728 = vmatprep.subr.mxu0 0.0
  %729 = vmatpush2.msra.mxu0 0.0
  %730 = vmatprep.subr.mxu0 0.0
  %731 = vmatpush2.msra.mxu0 0.0
  %732 = vmatprep.subr.mxu0 0.0
  %733 = vmatpush2.msra.mxu0 0.0
  %734 = vmatprep.mubr.f32.mxu0 0.0
  %735 = vmatmul.mubr.f32.gmra.mxu0 %v623
  %v736 = vpop.f32.mrf.mxu0
  %v737 = vadd.f32 0.0, %v736
  %v738 = vpop.f32.mrf.mxu0
  %739 = vmatprep.mubr.f32.mxu0 0.0
  %740 = vmatmul.mubr.f32.gmra.mxu0 %v626
  %v741 = vpop.f32.mrf.mxu0
  %v742 = vadd.f32 0.0, %v741
  %v743 = vpop.f32.mrf.mxu0
  %744 = vmatprep.mubr.f32.mxu0 0.0
  %745 = vmatmul.mubr.f32.gmra.mxu0 %v629
  %v746 = vpop.f32.mrf.mxu0
  %v747 = vadd.f32 0.0, %v746
  %v748 = vpop.f32.mrf.mxu0
  %749 = vmatprep.mubr.f32.mxu0 0.0
  %750 = vmatmul.mubr.f32.gmra.mxu0 %v632
  %v751 = vpop.f32.mrf.mxu0
  %v752 = vadd.f32 0.0, %v751
  %v753 = vpop.f32.mrf.mxu0
  %754 = vmatprep.mubr.f32.mxu0 0.0
  %755 = vmatmul.mubr.f32.gmra.mxu0 %v635
  %v756 = vpop.f32.mrf.mxu0
  %v757 = vadd.f32 0.0, %v756
  %v758 = vpop.f32.mrf.mxu0
  %759 = vmatprep.mubr.f32.mxu0 0.0
  %760 = vmatmul.mubr.f32.gmra.mxu0 %v638
  %v761 = vpop.f32.mrf.mxu0
  %v762 = vadd.f32 0.0, %v761
  %v763 = vpop.f32.mrf.mxu0
  %764 = vmatprep.mubr.f32.mxu0 0.0
  %765 = vmatmul.mubr.f32.gmra.mxu0 %v641
  %v766 = vpop.f32.mrf.mxu0
  %v767 = vadd.f32 0.0, %v766
  %v768 = vpop.f32.mrf.mxu0
  %769 = vmatprep.mubr.f32.mxu0 0.0
  %770 = vmatmul.mubr.f32.gmra.mxu0 %v644
  %v771 = vpop.f32.mrf.mxu0
  %v772 = vadd.f32 0.0, %v771
  %v773 = vpop.f32.mrf.mxu0
  %774 = vmatprep.mubr.f32.mxu0 0.0
  %775 = vmatmul.mubr.f32.gmra.mxu0 %v647
  %v776 = vpop.f32.mrf.mxu0
  %v777 = vadd.f32 0.0, %v776
  %v778 = vpop.f32.mrf.mxu0
  %779 = vmatprep.mubr.f32.mxu0 0.0
  %780 = vmatmul.mubr.f32.gmra.mxu0 %v650
  %v781 = vpop.f32.mrf.mxu0
  %v782 = vadd.f32 0.0, %v781
  %v783 = vpop.f32.mrf.mxu0
  %784 = vmatprep.mubr.f32.mxu0 0.0
  %785 = vmatmul.mubr.f32.gmra.mxu0 %v653
  %v786 = vpop.f32.mrf.mxu0
  %v787 = vadd.f32 0.0, %v786
  %v788 = vpop.f32.mrf.mxu0
  %789 = vmatprep.mubr.f32.mxu0 0.0
  %790 = vmatmul.mubr.f32.gmra.mxu0 %v656
  %v791 = vpop.f32.mrf.mxu0
  %v792 = vadd.f32 0.0, %v791
  %v793 = vpop.f32.mrf.mxu0
  %794 = vmatprep.mubr.f32.mxu0 0.0
  %795 = vmatmul.mubr.f32.gmra.mxu0 %v659
  %v796 = vpop.f32.mrf.mxu0
  %v797 = vadd.f32 0.0, %v796
  %v798 = vpop.f32.mrf.mxu0
  %799 = vmatprep.mubr.f32.mxu0 0.0
  %800 = vmatmul.mubr.f32.gmra.mxu0 %v662
  %v801 = vpop.f32.mrf.mxu0
  %v802 = vadd.f32 0.0, %v801
  %v803 = vpop.f32.mrf.mxu0
  %804 = vmatprep.mubr.f32.mxu0 0.0
  %805 = vmatmul.mubr.f32.gmra.mxu0 %v665
  %v806 = vpop.f32.mrf.mxu0
  %v807 = vadd.f32 0.0, %v806
  %v808 = vpop.f32.mrf.mxu0
  %809 = vmatprep.mubr.f32.mxu0 0.0
  %810 = vmatmul.mubr.f32.gmra.mxu0 %v668
  %v811 = vpop.f32.mrf.mxu0
  %v812 = vadd.f32 0.0, %v811
  %v813 = vpop.f32.mrf.mxu0
  %814 = vdwg.mxu0
  %v815 = vmul.f32 %v737, %v214
  %v816 = vmul.f32 %v742, %v215
  %v817 = vmul.f32 %v747, %v216
  %v818 = vmul.f32 %v752, %v217
  %v819 = vmul.f32 %v757, %v218
  %v820 = vmul.f32 %v762, %v219
  %v821 = vmul.f32 %v767, %v220
  %v822 = vmul.f32 %v772, %v221
  %v823 = vmul.f32 %v777, %v222
  %v824 = vmul.f32 %v782, %v223
  %v825 = vmul.f32 %v787, %v224
  %v826 = vmul.f32 %v792, %v225
  %v827 = vmul.f32 %v797, %v226
  %v828 = vmul.f32 %v802, %v227
  %v829 = vmul.f32 %v807, %v228
  %v830 = vmul.f32 %v812, %v229
  %v832 = vsel %vm248, %v815, 0
  %v835 = vsel %vm248, %v816, 0
  %v838 = vsel %vm248, %v817, 0
  %v841 = vsel %vm248, %v818, 0
  %v844 = vsel %vm248, %v819, 0
  %v847 = vsel %vm248, %v820, 0
  %v850 = vsel %vm248, %v821, 0
  %v853 = vsel %vm248, %v822, 0
  %v856 = vsel %vm248, %v823, 0
  %v859 = vsel %vm248, %v824, 0
  %v862 = vsel %vm248, %v825, 0
  %v865 = vsel %vm248, %v826, 0
  %v868 = vsel %vm248, %v827, 0
  %v871 = vsel %vm248, %v828, 0
  %v874 = vsel %vm248, %v829, 0
  %v877 = vsel %vm248, %v830, 0
  %v880 = vsel %vm248, %v508, 0
  %v883 = vsel %vm248, %v513, 0
  %v886 = vsel %vm248, %v518, 0
  %v889 = vsel %vm248, %v523, 0
  %891 = vmatprep.subr.mxu0 0.0
  %892 = vmatpush1.xpose.msra.mxu0 0.0
  %893 = vmatprep.subr.mxu0 0.0
  %894 = vmatpush1.xpose.msra.mxu0 0.0
  %895 = vmatprep.subr.mxu0 0.0
  %896 = vmatpush1.xpose.msra.mxu0 0.0
  %897 = vmatprep.subr.mxu0 0.0
  %898 = vmatpush1.xpose.msra.mxu0 0.0
  %899 = vmatprep.subr.mxu0 0.0
  %900 = vmatpush1.xpose.msra.mxu0 0.0
  %901 = vmatprep.subr.mxu0 0.0
  %902 = vmatpush1.xpose.msra.mxu0 0.0
  %903 = vmatprep.subr.mxu0 0.0
  %904 = vmatpush1.xpose.msra.mxu0 0.0
  %905 = vmatprep.subr.mxu0 0.0
  %906 = vmatpush1.xpose.msra.mxu0 0.0
  %907 = vmatprep.subr.mxu0 0.0
  %908 = vmatpush1.xpose.msra.mxu0 0.0
  %909 = vmatprep.subr.mxu0 0.0
  %910 = vmatpush1.xpose.msra.mxu0 0.0
  %911 = vmatprep.subr.mxu0 0.0
  %912 = vmatpush1.xpose.msra.mxu0 0.0
  %913 = vmatprep.subr.mxu0 0.0
  %914 = vmatpush1.xpose.msra.mxu0 0.0
  %915 = vmatprep.subr.mxu0 0.0
  %916 = vmatpush1.xpose.msra.mxu0 %v889
  %917 = vmatprep.subr.mxu0 0.0
  %918 = vmatpush1.xpose.msra.mxu0 %v886
  %919 = vmatprep.subr.mxu0 0.0
  %920 = vmatpush1.xpose.msra.mxu0 %v883
  %921 = vmatprep.subr.mxu0 0.0
  %922 = vmatpush1.xpose.msra.mxu0 %v880
  %923 = vmatprep.subr.mxu0 0.0
  %924 = vmatpush2.xpose.msra.mxu0 0.0
  %925 = vmatprep.subr.mxu0 0.0
  %926 = vmatpush2.xpose.msra.mxu0 0.0
  %927 = vmatprep.subr.mxu0 0.0
  %928 = vmatpush2.xpose.msra.mxu0 0.0
  %929 = vmatprep.subr.mxu0 0.0
  %930 = vmatpush2.xpose.msra.mxu0 0.0
  %931 = vmatprep.subr.mxu0 0.0
  %932 = vmatpush2.xpose.msra.mxu0 0.0
  %933 = vmatprep.subr.mxu0 0.0
  %934 = vmatpush2.xpose.msra.mxu0 0.0
  %935 = vmatprep.subr.mxu0 0.0
  %936 = vmatpush2.xpose.msra.mxu0 0.0
  %937 = vmatprep.subr.mxu0 0.0
  %938 = vmatpush2.xpose.msra.mxu0 0.0
  %939 = vmatprep.subr.mxu0 0.0
  %940 = vmatpush2.xpose.msra.mxu0 0.0
  %941 = vmatprep.subr.mxu0 0.0
  %942 = vmatpush2.xpose.msra.mxu0 0.0
  %943 = vmatprep.subr.mxu0 0.0
  %944 = vmatpush2.xpose.msra.mxu0 0.0
  %945 = vmatprep.subr.mxu0 0.0
  %946 = vmatpush2.xpose.msra.mxu0 0.0
  %947 = vmatprep.subr.mxu0 0.0
  %948 = vmatpush2.xpose.msra.mxu0 0.0
  %949 = vmatprep.subr.mxu0 0.0
  %950 = vmatpush2.xpose.msra.mxu0 0.0
  %951 = vmatprep.subr.mxu0 0.0
  %952 = vmatpush2.xpose.msra.mxu0 0.0
  %953 = vmatprep.subr.mxu0 0.0
  %954 = vmatpush2.xpose.msra.mxu0 0.0
  %955 = vmatprep.mubr.f32.mxu0 0.0
  %956 = vmatmul.mubr.f32.gmra.mxu0 %v832
  %v957 = vpop.f32.mrf.mxu0
  %v958 = vadd.f32 %v230, %v957
  %v959 = vpop.f32.mrf.mxu0
  %960 = vmatprep.mubr.f32.mxu0 0.0
  %961 = vmatmul.mubr.f32.gmra.mxu0 %v835
  %v962 = vpop.f32.mrf.mxu0
  %v963 = vadd.f32 %v231, %v962
  %v964 = vpop.f32.mrf.mxu0
  %965 = vmatprep.mubr.f32.mxu0 0.0
  %966 = vmatmul.mubr.f32.gmra.mxu0 %v838
  %v967 = vpop.f32.mrf.mxu0
  %v968 = vadd.f32 %v232, %v967
  %v969 = vpop.f32.mrf.mxu0
  %970 = vmatprep.mubr.f32.mxu0 0.0
  %971 = vmatmul.mubr.f32.gmra.mxu0 %v841
  %v972 = vpop.f32.mrf.mxu0
  %v973 = vadd.f32 %v233, %v972
  %v974 = vpop.f32.mrf.mxu0
  %975 = vmatprep.mubr.f32.mxu0 0.0
  %976 = vmatmul.mubr.f32.gmra.mxu0 %v844
  %v977 = vpop.f32.mrf.mxu0
  %v978 = vadd.f32 %v234, %v977
  %v979 = vpop.f32.mrf.mxu0
  %980 = vmatprep.mubr.f32.mxu0 0.0
  %981 = vmatmul.mubr.f32.gmra.mxu0 %v847
  %v982 = vpop.f32.mrf.mxu0
  %v983 = vadd.f32 %v235, %v982
  %v984 = vpop.f32.mrf.mxu0
  %985 = vmatprep.mubr.f32.mxu0 0.0
  %986 = vmatmul.mubr.f32.gmra.mxu0 %v850
  %v987 = vpop.f32.mrf.mxu0
  %v988 = vadd.f32 %v236, %v987
  %v989 = vpop.f32.mrf.mxu0
  %990 = vmatprep.mubr.f32.mxu0 0.0
  %991 = vmatmul.mubr.f32.gmra.mxu0 %v853
  %v992 = vpop.f32.mrf.mxu0
  %v993 = vadd.f32 %v237, %v992
  %v994 = vpop.f32.mrf.mxu0
  %995 = vmatprep.mubr.f32.mxu0 0.0
  %996 = vmatmul.mubr.f32.gmra.mxu0 %v856
  %v997 = vpop.f32.mrf.mxu0
  %v998 = vadd.f32 %v238, %v997
  %v999 = vpop.f32.mrf.mxu0
  %1000 = vmatprep.mubr.f32.mxu0 0.0
  %1001 = vmatmul.mubr.f32.gmra.mxu0 %v859
  %v1002 = vpop.f32.mrf.mxu0
  %v1003 = vadd.f32 %v239, %v1002
  %v1004 = vpop.f32.mrf.mxu0
  %1005 = vmatprep.mubr.f32.mxu0 0.0
  %1006 = vmatmul.mubr.f32.gmra.mxu0 %v862
  %v1007 = vpop.f32.mrf.mxu0
  %v1008 = vadd.f32 %v240, %v1007
  %v1009 = vpop.f32.mrf.mxu0
  %1010 = vmatprep.mubr.f32.mxu0 0.0
  %1011 = vmatmul.mubr.f32.gmra.mxu0 %v865
  %v1012 = vpop.f32.mrf.mxu0
  %v1013 = vadd.f32 %v241, %v1012
  %v1014 = vpop.f32.mrf.mxu0
  %1015 = vmatprep.mubr.f32.mxu0 0.0
  %1016 = vmatmul.mubr.f32.gmra.mxu0 %v868
  %v1017 = vpop.f32.mrf.mxu0
  %v1018 = vadd.f32 %v242, %v1017
  %v1019 = vpop.f32.mrf.mxu0
  %1020 = vmatprep.mubr.f32.mxu0 0.0
  %1021 = vmatmul.mubr.f32.gmra.mxu0 %v871
  %v1022 = vpop.f32.mrf.mxu0
  %v1023 = vadd.f32 %v243, %v1022
  %v1024 = vpop.f32.mrf.mxu0
  %1025 = vmatprep.mubr.f32.mxu0 0.0
  %1026 = vmatmul.mubr.f32.gmra.mxu0 %v874
  %v1027 = vpop.f32.mrf.mxu0
  %v1028 = vadd.f32 %v244, %v1027
  %v1029 = vpop.f32.mrf.mxu0
  %1030 = vmatprep.mubr.f32.mxu0 0.0
  %1031 = vmatmul.mubr.f32.gmra.mxu0 %v877
  %v1032 = vpop.f32.mrf.mxu0
  %v1033 = vadd.f32 %v245, %v1032
  %v1034 = vpop.f32.mrf.mxu0
  %1035 = vdwg.mxu0
  %v1036 = vsel %vm248, %v958, -inf
  %1037 = vmax.xlane.f32.xlu0 %v1036
  %v1038 = vpop.xlane.xlu0 %1037
  %v1039 = vsel %vm248, %v963, -inf
  %1040 = vmax.xlane.f32.xlu0 %v1039
  %v1041 = vpop.xlane.xlu0 %1040
  %v1042 = vsel %vm248, %v968, -inf
  %1043 = vmax.xlane.f32.xlu0 %v1042
  %v1044 = vpop.xlane.xlu0 %1043
  %v1045 = vsel %vm248, %v973, -inf
  %1046 = vmax.xlane.f32.xlu0 %v1045
  %v1047 = vpop.xlane.xlu0 %1046
  %v1048 = vsel %vm248, %v978, -inf
  %1049 = vmax.xlane.f32.xlu0 %v1048
  %v1050 = vpop.xlane.xlu0 %1049
  %v1051 = vsel %vm248, %v983, -inf
  %1052 = vmax.xlane.f32.xlu0 %v1051
  %v1053 = vpop.xlane.xlu0 %1052
  %v1054 = vsel %vm248, %v988, -inf
  %1055 = vmax.xlane.f32.xlu0 %v1054
  %v1056 = vpop.xlane.xlu0 %1055
  %v1057 = vsel %vm248, %v993, -inf
  %1058 = vmax.xlane.f32.xlu0 %v1057
  %v1059 = vpop.xlane.xlu0 %1058
  %v1060 = vsel %vm248, %v998, -inf
  %1061 = vmax.xlane.f32.xlu0 %v1060
  %v1062 = vpop.xlane.xlu0 %1061
  %v1063 = vsel %vm248, %v1003, -inf
  %1064 = vmax.xlane.f32.xlu0 %v1063
  %v1065 = vpop.xlane.xlu0 %1064
  %v1066 = vsel %vm248, %v1008, -inf
  %1067 = vmax.xlane.f32.xlu0 %v1066
  %v1068 = vpop.xlane.xlu0 %1067
  %v1069 = vsel %vm248, %v1013, -inf
  %1070 = vmax.xlane.f32.xlu0 %v1069
  %v1071 = vpop.xlane.xlu0 %1070
  %v1072 = vsel %vm248, %v1018, -inf
  %1073 = vmax.xlane.f32.xlu0 %v1072
  %v1074 = vpop.xlane.xlu0 %1073
  %v1075 = vsel %vm248, %v1023, -inf
  %1076 = vmax.xlane.f32.xlu0 %v1075
  %v1077 = vpop.xlane.xlu0 %1076
  %v1078 = vsel %vm248, %v1028, -inf
  %1079 = vmax.xlane.f32.xlu0 %v1078
  %v1080 = vpop.xlane.xlu0 %1079
  %v1081 = vsel %vm248, %v1033, -inf
  %1082 = vmax.xlane.f32.xlu0 %v1081
  %v1083 = vpop.xlane.xlu0 %1082
  %v1084 = vsub.f32 %v958, %v1038
  %v1085 = vsub.f32 %v963, %v1041
  %v1086 = vsub.f32 %v968, %v1044
  %v1087 = vsub.f32 %v973, %v1047
  %v1088 = vsub.f32 %v978, %v1050
  %v1089 = vsub.f32 %v983, %v1053
  %v1090 = vsub.f32 %v988, %v1056
  %v1091 = vsub.f32 %v993, %v1059
  %v1092 = vsub.f32 %v998, %v1062
  %v1093 = vsub.f32 %v1003, %v1065
  %v1094 = vsub.f32 %v1008, %v1068
  %v1095 = vsub.f32 %v1013, %v1071
  %v1096 = vsub.f32 %v1018, %v1074
  %v1097 = vsub.f32 %v1023, %v1077
  %v1098 = vsub.f32 %v1028, %v1080
  %v1099 = vsub.f32 %v1033, %v1083
  %v1100 = vmul.f32 %v1084, 1.442695
  %v1101 = vpow.pop %v1100
  %v1102 = vmul.f32 %v1085, 1.442695
  %v1103 = vpow.pop %v1102
  %v1104 = vmul.f32 %v1086, 1.442695
  %v1105 = vpow.pop %v1104
  %v1106 = vmul.f32 %v1087, 1.442695
  %v1107 = vpow.pop %v1106
  %v1108 = vmul.f32 %v1088, 1.442695
  %v1109 = vpow.pop %v1108
  %v1110 = vmul.f32 %v1089, 1.442695
  %v1111 = vpow.pop %v1110
  %v1112 = vmul.f32 %v1090, 1.442695
  %v1113 = vpow.pop %v1112
  %v1114 = vmul.f32 %v1091, 1.442695
  %v1115 = vpow.pop %v1114
  %v1116 = vmul.f32 %v1092, 1.442695
  %v1117 = vpow.pop %v1116
  %v1118 = vmul.f32 %v1093, 1.442695
  %v1119 = vpow.pop %v1118
  %v1120 = vmul.f32 %v1094, 1.442695
  %v1121 = vpow.pop %v1120
  %v1122 = vmul.f32 %v1095, 1.442695
  %v1123 = vpow.pop %v1122
  %v1124 = vmul.f32 %v1096, 1.442695
  %v1125 = vpow.pop %v1124
  %v1126 = vmul.f32 %v1097, 1.442695
  %v1127 = vpow.pop %v1126
  %v1128 = vmul.f32 %v1098, 1.442695
  %v1129 = vpow.pop %v1128
  %v1130 = vmul.f32 %v1099, 1.442695
  %v1131 = vpow.pop %v1130
  %v1132 = vsel %vm248, %v1101, 0.0
  %1133 = vadd.xlane.f32.xlu0 %v1132
  %v1134 = vpop.xlane.xlu0 %1133
  %v1135 = vsel %vm248, %v1103, 0.0
  %1136 = vadd.xlane.f32.xlu0 %v1135
  %v1137 = vpop.xlane.xlu0 %1136
  %v1138 = vsel %vm248, %v1105, 0.0
  %1139 = vadd.xlane.f32.xlu0 %v1138
  %v1140 = vpop.xlane.xlu0 %1139
  %v1141 = vsel %vm248, %v1107, 0.0
  %1142 = vadd.xlane.f32.xlu0 %v1141
  %v1143 = vpop.xlane.xlu0 %1142
  %v1144 = vsel %vm248, %v1109, 0.0
  %1145 = vadd.xlane.f32.xlu0 %v1144
  %v1146 = vpop.xlane.xlu0 %1145
  %v1147 = vsel %vm248, %v1111, 0.0
  %1148 = vadd.xlane.f32.xlu0 %v1147
  %v1149 = vpop.xlane.xlu0 %1148
  %v1150 = vsel %vm248, %v1113, 0.0
  %1151 = vadd.xlane.f32.xlu0 %v1150
  %v1152 = vpop.xlane.xlu0 %1151
  %v1153 = vsel %vm248, %v1115, 0.0
  %1154 = vadd.xlane.f32.xlu0 %v1153
  %v1155 = vpop.xlane.xlu0 %1154
  %v1156 = vsel %vm248, %v1117, 0.0
  %1157 = vadd.xlane.f32.xlu0 %v1156
  %v1158 = vpop.xlane.xlu0 %1157
  %v1159 = vsel %vm248, %v1119, 0.0
  %1160 = vadd.xlane.f32.xlu0 %v1159
  %v1161 = vpop.xlane.xlu0 %1160
  %v1162 = vsel %vm248, %v1121, 0.0
  %1163 = vadd.xlane.f32.xlu0 %v1162
  %v1164 = vpop.xlane.xlu0 %1163
  %v1165 = vsel %vm248, %v1123, 0.0
  %1166 = vadd.xlane.f32.xlu0 %v1165
  %v1167 = vpop.xlane.xlu0 %1166
  %v1168 = vsel %vm248, %v1125, 0.0
  %1169 = vadd.xlane.f32.xlu0 %v1168
  %v1170 = vpop.xlane.xlu0 %1169
  %v1171 = vsel %vm248, %v1127, 0.0
  %1172 = vadd.xlane.f32.xlu0 %v1171
  %v1173 = vpop.xlane.xlu0 %1172
  %v1174 = vsel %vm248, %v1129, 0.0
  %1175 = vadd.xlane.f32.xlu0 %v1174
  %v1176 = vpop.xlane.xlu0 %1175
  %v1177 = vsel %vm248, %v1131, 0.0
  %1178 = vadd.xlane.f32.xlu0 %v1177
  %v1179 = vpop.xlane.xlu0 %1178
  %v1180 = vrcp.pop %v1134
  %v1181 = vmul.f32 %v1101, %v1180
  %v1182 = vrcp.pop %v1137
  %v1183 = vmul.f32 %v1103, %v1182
  %v1184 = vrcp.pop %v1140
  %v1185 = vmul.f32 %v1105, %v1184
  %v1186 = vrcp.pop %v1143
  %v1187 = vmul.f32 %v1107, %v1186
  %v1188 = vrcp.pop %v1146
  %v1189 = vmul.f32 %v1109, %v1188
  %v1190 = vrcp.pop %v1149
  %v1191 = vmul.f32 %v1111, %v1190
  %v1192 = vrcp.pop %v1152
  %v1193 = vmul.f32 %v1113, %v1192
  %v1194 = vrcp.pop %v1155
  %v1195 = vmul.f32 %v1115, %v1194
  %v1196 = vrcp.pop %v1158
  %v1197 = vmul.f32 %v1117, %v1196
  %v1198 = vrcp.pop %v1161
  %v1199 = vmul.f32 %v1119, %v1198
  %v1200 = vrcp.pop %v1164
  %v1201 = vmul.f32 %v1121, %v1200
  %v1202 = vrcp.pop %v1167
  %v1203 = vmul.f32 %v1123, %v1202
  %v1204 = vrcp.pop %v1170
  %v1205 = vmul.f32 %v1125, %v1204
  %v1206 = vrcp.pop %v1173
  %v1207 = vmul.f32 %v1127, %v1206
  %v1208 = vrcp.pop %v1176
  %v1209 = vmul.f32 %v1129, %v1208
  %v1210 = vrcp.pop %v1179
  %v1211 = vmul.f32 %v1131, %v1210
  %v1213 = vsel %vm248, %v1181, 0
  %v1216 = vsel %vm248, %v1183, 0
  %v1219 = vsel %vm248, %v1185, 0
  %v1222 = vsel %vm248, %v1187, 0
  %v1225 = vsel %vm248, %v1189, 0
  %v1228 = vsel %vm248, %v1191, 0
  %v1231 = vsel %vm248, %v1193, 0
  %v1234 = vsel %vm248, %v1195, 0
  %v1237 = vsel %vm248, %v1197, 0
  %v1240 = vsel %vm248, %v1199, 0
  %v1243 = vsel %vm248, %v1201, 0
  %v1246 = vsel %vm248, %v1203, 0
  %v1249 = vsel %vm248, %v1205, 0
  %v1252 = vsel %vm248, %v1207, 0
  %v1255 = vsel %vm248, %v1209, 0
  %v1258 = vsel %vm248, %v1211, 0
  %1260 = vmatprep.subr.mxu0 0.0
  %1261 = vmatpush1.msra.mxu0 0.0
  %1262 = vmatprep.subr.mxu0 0.0
  %1263 = vmatpush1.msra.mxu0 0.0
  %1264 = vmatprep.subr.mxu0 0.0
  %1265 = vmatpush1.msra.mxu0 0.0
  %1266 = vmatprep.subr.mxu0 0.0
  %1267 = vmatpush1.msra.mxu0 0.0
  %1268 = vmatprep.subr.mxu0 0.0
  %1269 = vmatpush1.msra.mxu0 0.0
  %1270 = vmatprep.subr.mxu0 0.0
  %1271 = vmatpush1.msra.mxu0 0.0
  %1272 = vmatprep.subr.mxu0 0.0
  %1273 = vmatpush1.msra.mxu0 0.0
  %1274 = vmatprep.subr.mxu0 0.0
  %1275 = vmatpush1.msra.mxu0 0.0
  %1276 = vmatprep.subr.mxu0 0.0
  %1277 = vmatpush1.msra.mxu0 0.0
  %1278 = vmatprep.subr.mxu0 0.0
  %1279 = vmatpush1.msra.mxu0 0.0
  %1280 = vmatprep.subr.mxu0 0.0
  %1281 = vmatpush1.msra.mxu0 0.0
  %1282 = vmatprep.subr.mxu0 0.0
  %1283 = vmatpush1.msra.mxu0 0.0
  %1284 = vmatprep.subr.mxu0 0.0
  %1285 = vmatpush1.msra.mxu0 %v619
  %1286 = vmatprep.subr.mxu0 0.0
  %1287 = vmatpush1.msra.mxu0 %v614
  %1288 = vmatprep.subr.mxu0 0.0
  %1289 = vmatpush1.msra.mxu0 %v609
  %1290 = vmatprep.subr.mxu0 0.0
  %1291 = vmatpush1.msra.mxu0 %v604
  %1292 = vmatprep.subr.mxu0 0.0
  %1293 = vmatpush2.msra.mxu0 0.0
  %1294 = vmatprep.subr.mxu0 0.0
  %1295 = vmatpush2.msra.mxu0 0.0
  %1296 = vmatprep.subr.mxu0 0.0
  %1297 = vmatpush2.msra.mxu0 0.0
  %1298 = vmatprep.subr.mxu0 0.0
  %1299 = vmatpush2.msra.mxu0 0.0
  %1300 = vmatprep.subr.mxu0 0.0
  %1301 = vmatpush2.msra.mxu0 0.0
  %1302 = vmatprep.subr.mxu0 0.0
  %1303 = vmatpush2.msra.mxu0 0.0
  %1304 = vmatprep.subr.mxu0 0.0
  %1305 = vmatpush2.msra.mxu0 0.0
  %1306 = vmatprep.subr.mxu0 0.0
  %1307 = vmatpush2.msra.mxu0 0.0
  %1308 = vmatprep.subr.mxu0 0.0
  %1309 = vmatpush2.msra.mxu0 0.0
  %1310 = vmatprep.subr.mxu0 0.0
  %1311 = vmatpush2.msra.mxu0 0.0
  %1312 = vmatprep.subr.mxu0 0.0
  %1313 = vmatpush2.msra.mxu0 0.0
  %1314 = vmatprep.subr.mxu0 0.0
  %1315 = vmatpush2.msra.mxu0 0.0
  %1316 = vmatprep.subr.mxu0 0.0
  %1317 = vmatpush2.msra.mxu0 0.0
  %1318 = vmatprep.subr.mxu0 0.0
  %1319 = vmatpush2.msra.mxu0 0.0
  %1320 = vmatprep.subr.mxu0 0.0
  %1321 = vmatpush2.msra.mxu0 0.0
  %1322 = vmatprep.subr.mxu0 0.0
  %1323 = vmatpush2.msra.mxu0 0.0
  %1324 = vmatprep.mubr.f32.mxu0 0.0
  %1325 = vmatmul.mubr.f32.gmra.mxu0 %v1213
  %v1326 = vpop.f32.mrf.mxu0
  %v1327 = vadd.f32 0.0, %v1326
  %v1328 = vpop.f32.mrf.mxu0
  %1329 = vmatprep.mubr.f32.mxu0 0.0
  %1330 = vmatmul.mubr.f32.gmra.mxu0 %v1216
  %v1331 = vpop.f32.mrf.mxu0
  %v1332 = vadd.f32 0.0, %v1331
  %v1333 = vpop.f32.mrf.mxu0
  %1334 = vmatprep.mubr.f32.mxu0 0.0
  %1335 = vmatmul.mubr.f32.gmra.mxu0 %v1219
  %v1336 = vpop.f32.mrf.mxu0
  %v1337 = vadd.f32 0.0, %v1336
  %v1338 = vpop.f32.mrf.mxu0
  %1339 = vmatprep.mubr.f32.mxu0 0.0
  %1340 = vmatmul.mubr.f32.gmra.mxu0 %v1222
  %v1341 = vpop.f32.mrf.mxu0
  %v1342 = vadd.f32 0.0, %v1341
  %v1343 = vpop.f32.mrf.mxu0
  %1344 = vmatprep.mubr.f32.mxu0 0.0
  %1345 = vmatmul.mubr.f32.gmra.mxu0 %v1225
  %v1346 = vpop.f32.mrf.mxu0
  %v1347 = vadd.f32 0.0, %v1346
  %v1348 = vpop.f32.mrf.mxu0
  %1349 = vmatprep.mubr.f32.mxu0 0.0
  %1350 = vmatmul.mubr.f32.gmra.mxu0 %v1228
  %v1351 = vpop.f32.mrf.mxu0
  %v1352 = vadd.f32 0.0, %v1351
  %v1353 = vpop.f32.mrf.mxu0
  %1354 = vmatprep.mubr.f32.mxu0 0.0
  %1355 = vmatmul.mubr.f32.gmra.mxu0 %v1231
  %v1356 = vpop.f32.mrf.mxu0
  %v1357 = vadd.f32 0.0, %v1356
  %v1358 = vpop.f32.mrf.mxu0
  %1359 = vmatprep.mubr.f32.mxu0 0.0
  %1360 = vmatmul.mubr.f32.gmra.mxu0 %v1234
  %v1361 = vpop.f32.mrf.mxu0
  %v1362 = vadd.f32 0.0, %v1361
  %v1363 = vpop.f32.mrf.mxu0
  %1364 = vmatprep.mubr.f32.mxu0 0.0
  %1365 = vmatmul.mubr.f32.gmra.mxu0 %v1237
  %v1366 = vpop.f32.mrf.mxu0
  %v1367 = vadd.f32 0.0, %v1366
  %v1368 = vpop.f32.mrf.mxu0
  %1369 = vmatprep.mubr.f32.mxu0 0.0
  %1370 = vmatmul.mubr.f32.gmra.mxu0 %v1240
  %v1371 = vpop.f32.mrf.mxu0
  %v1372 = vadd.f32 0.0, %v1371
  %v1373 = vpop.f32.mrf.mxu0
  %1374 = vmatprep.mubr.f32.mxu0 0.0
  %1375 = vmatmul.mubr.f32.gmra.mxu0 %v1243
  %v1376 = vpop.f32.mrf.mxu0
  %v1377 = vadd.f32 0.0, %v1376
  %v1378 = vpop.f32.mrf.mxu0
  %1379 = vmatprep.mubr.f32.mxu0 0.0
  %1380 = vmatmul.mubr.f32.gmra.mxu0 %v1246
  %v1381 = vpop.f32.mrf.mxu0
  %v1382 = vadd.f32 0.0, %v1381
  %v1383 = vpop.f32.mrf.mxu0
  %1384 = vmatprep.mubr.f32.mxu0 0.0
  %1385 = vmatmul.mubr.f32.gmra.mxu0 %v1249
  %v1386 = vpop.f32.mrf.mxu0
  %v1387 = vadd.f32 0.0, %v1386
  %v1388 = vpop.f32.mrf.mxu0
  %1389 = vmatprep.mubr.f32.mxu0 0.0
  %1390 = vmatmul.mubr.f32.gmra.mxu0 %v1252
  %v1391 = vpop.f32.mrf.mxu0
  %v1392 = vadd.f32 0.0, %v1391
  %v1393 = vpop.f32.mrf.mxu0
  %1394 = vmatprep.mubr.f32.mxu0 0.0
  %1395 = vmatmul.mubr.f32.gmra.mxu0 %v1255
  %v1396 = vpop.f32.mrf.mxu0
  %v1397 = vadd.f32 0.0, %v1396
  %v1398 = vpop.f32.mrf.mxu0
  %1399 = vmatprep.mubr.f32.mxu0 0.0
  %1400 = vmatmul.mubr.f32.gmra.mxu0 %v1258
  %v1401 = vpop.f32.mrf.mxu0
  %v1402 = vadd.f32 0.0, %v1401
  %v1403 = vpop.f32.mrf.mxu0
  %1404 = vdwg.mxu0
  %v1405 = vmul.f32 %v1327, %v214
  %v1406 = vmul.f32 %v1332, %v215
  %v1407 = vmul.f32 %v1337, %v216
  %v1408 = vmul.f32 %v1342, %v217
  %v1409 = vmul.f32 %v1347, %v218
  %v1410 = vmul.f32 %v1352, %v219
  %v1411 = vmul.f32 %v1357, %v220
  %v1412 = vmul.f32 %v1362, %v221
  %v1413 = vmul.f32 %v1367, %v222
  %v1414 = vmul.f32 %v1372, %v223
  %v1415 = vmul.f32 %v1377, %v224
  %v1416 = vmul.f32 %v1382, %v225
  %v1417 = vmul.f32 %v1387, %v226
  %v1418 = vmul.f32 %v1392, %v227
  %v1419 = vmul.f32 %v1397, %v228
  %v1420 = vmul.f32 %v1402, %v229
  %1421 = vmatprep.subr.mxu0 0.0
  %1422 = vmatpush1.msra.mxu0 %v1420
  %1423 = vmatprep.subr.mxu0 0.0
  %1424 = vmatpush1.msra.mxu0 %v1419
  %1425 = vmatprep.subr.mxu0 0.0
  %1426 = vmatpush1.msra.mxu0 %v1418
  %1427 = vmatprep.subr.mxu0 0.0
  %1428 = vmatpush1.msra.mxu0 %v1417
  %1429 = vmatprep.subr.mxu0 0.0
  %1430 = vmatpush1.msra.mxu0 %v1416
  %1431 = vmatprep.subr.mxu0 0.0
  %1432 = vmatpush1.msra.mxu0 %v1415
  %1433 = vmatprep.subr.mxu0 0.0
  %1434 = vmatpush1.msra.mxu0 %v1414
  %1435 = vmatprep.subr.mxu0 0.0
  %1436 = vmatpush1.msra.mxu0 %v1413
  %1437 = vmatprep.subr.mxu0 0.0
  %1438 = vmatpush1.msra.mxu0 %v1412
  %1439 = vmatprep.subr.mxu0 0.0
  %1440 = vmatpush1.msra.mxu0 %v1411
  %1441 = vmatprep.subr.mxu0 0.0
  %1442 = vmatpush1.msra.mxu0 %v1410
  %1443 = vmatprep.subr.mxu0 0.0
  %1444 = vmatpush1.msra.mxu0 %v1409
  %1445 = vmatprep.subr.mxu0 0.0
  %1446 = vmatpush1.msra.mxu0 %v1408
  %1447 = vmatprep.subr.mxu0 0.0
  %1448 = vmatpush1.msra.mxu0 %v1407
  %1449 = vmatprep.subr.mxu0 0.0
  %1450 = vmatpush1.msra.mxu0 %v1406
  %1451 = vmatprep.subr.mxu0 0.0
  %1452 = vmatpush1.msra.mxu0 %v1405
  %1453 = vmatprep.subr.mxu0 0.0
  %1454 = vmatpush2.msra.mxu0 0.0
  %1455 = vmatprep.subr.mxu0 0.0
  %1456 = vmatpush2.msra.mxu0 0.0
  %1457 = vmatprep.subr.mxu0 0.0
  %1458 = vmatpush2.msra.mxu0 0.0
  %1459 = vmatprep.subr.mxu0 0.0
  %1460 = vmatpush2.msra.mxu0 0.0
  %1461 = vmatprep.subr.mxu0 0.0
  %1462 = vmatpush2.msra.mxu0 0.0
  %1463 = vmatprep.subr.mxu0 0.0
  %1464 = vmatpush2.msra.mxu0 0.0
  %1465 = vmatprep.subr.mxu0 0.0
  %1466 = vmatpush2.msra.mxu0 0.0
  %1467 = vmatprep.subr.mxu0 0.0
  %1468 = vmatpush2.msra.mxu0 0.0
  %1469 = vmatprep.subr.mxu0 0.0
  %1470 = vmatpush2.msra.mxu0 0.0
  %1471 = vmatprep.subr.mxu0 0.0
  %1472 = vmatpush2.msra.mxu0 0.0
  %1473 = vmatprep.subr.mxu0 0.0
  %1474 = vmatpush2.msra.mxu0 0.0
  %1475 = vmatprep.subr.mxu0 0.0
  %1476 = vmatpush2.msra.mxu0 0.0
  %1477 = vmatprep.subr.mxu0 0.0
  %1478 = vmatpush2.msra.mxu0 0.0
  %1479 = vmatprep.subr.mxu0 0.0
  %1480 = vmatpush2.msra.mxu0 0.0
  %1481 = vmatprep.subr.mxu0 0.0
  %1482 = vmatpush2.msra.mxu0 0.0
  %1483 = vmatprep.subr.mxu0 0.0
  %1484 = vmatpush2.msra.mxu0 0.0
  %1485 = vmatprep.mubr.f32.mxu0 0.0
  %1486 = vmatmul.mubr.f32.gmra.mxu0 %v210
  %v1487 = vpop.f32.mrf.mxu0
  %v1488 = vadd.f32 0.0, %v1487
  %v1489 = vpop.f32.mrf.mxu0
  %1490 = vmatprep.mubr.f32.mxu0 0.0
  %1491 = vmatmul.mubr.f32.gmra.mxu0 %v211
  %v1492 = vpop.f32.mrf.mxu0
  %v1493 = vadd.f32 0.0, %v1492
  %v1494 = vpop.f32.mrf.mxu0
  %1495 = vmatprep.mubr.f32.mxu0 0.0
  %1496 = vmatmul.mubr.f32.gmra.mxu0 %v212
  %v1497 = vpop.f32.mrf.mxu0
  %v1498 = vadd.f32 0.0, %v1497
  %v1499 = vpop.f32.mrf.mxu0
  %1500 = vmatprep.mubr.f32.mxu0 0.0
  %1501 = vmatmul.mubr.f32.gmra.mxu0 %v213
  %v1502 = vpop.f32.mrf.mxu0
  %v1503 = vadd.f32 0.0, %v1502
  %v1504 = vpop.f32.mrf.mxu0
  %1505 = vdwg.mxu0
  %v1506 = vld [vmem:[%s20] sm:$0xff]
  %v1507 = vld [vmem:[%s20 + $0x8] sm:$0xff]
  %v1508 = vld [vmem:[%s20 + $0x10] sm:$0xff]
  %v1509 = vld [vmem:[%s20 + $0x18] sm:$0xff]
  %v1511 = vsel %vm248, %v1488, 0
  %v1514 = vsel %vm248, %v1493, 0
  %v1517 = vsel %vm248, %v1498, 0
  %v1520 = vsel %vm248, %v1503, 0
  %1522 = vmatprep.subr.mxu0 0.0
  %1523 = vmatpush1.msra.mxu0 0.0
  %1524 = vmatprep.subr.mxu0 0.0
  %1525 = vmatpush1.msra.mxu0 0.0
  %1526 = vmatprep.subr.mxu0 0.0
  %1527 = vmatpush1.msra.mxu0 0.0
  %1528 = vmatprep.subr.mxu0 0.0
  %1529 = vmatpush1.msra.mxu0 0.0
  %1530 = vmatprep.subr.mxu0 0.0
  %1531 = vmatpush1.msra.mxu0 0.0
  %1532 = vmatprep.subr.mxu0 0.0
  %1533 = vmatpush1.msra.mxu0 0.0
  %1534 = vmatprep.subr.mxu0 0.0
  %1535 = vmatpush1.msra.mxu0 0.0
  %1536 = vmatprep.subr.mxu0 0.0
  %1537 = vmatpush1.msra.mxu0 0.0
  %1538 = vmatprep.subr.mxu0 0.0
  %1539 = vmatpush1.msra.mxu0 0.0
  %1540 = vmatprep.subr.mxu0 0.0
  %1541 = vmatpush1.msra.mxu0 0.0
  %1542 = vmatprep.subr.mxu0 0.0
  %1543 = vmatpush1.msra.mxu0 0.0
  %1544 = vmatprep.subr.mxu0 0.0
  %1545 = vmatpush1.msra.mxu0 0.0
  %1546 = vmatprep.subr.mxu0 0.0
  %1547 = vmatpush1.msra.mxu0 %v1509
  %1548 = vmatprep.subr.mxu0 0.0
  %1549 = vmatpush1.msra.mxu0 %v1508
  %1550 = vmatprep.subr.mxu0 0.0
  %1551 = vmatpush1.msra.mxu0 %v1507
  %1552 = vmatprep.subr.mxu0 0.0
  %1553 = vmatpush1.msra.mxu0 %v1506
  %1554 = vmatprep.subr.mxu0 0.0
  %1555 = vmatpush2.msra.mxu0 0.0
  %1556 = vmatprep.subr.mxu0 0.0
  %1557 = vmatpush2.msra.mxu0 0.0
  %1558 = vmatprep.subr.mxu0 0.0
  %1559 = vmatpush2.msra.mxu0 0.0
  %1560 = vmatprep.subr.mxu0 0.0
  %1561 = vmatpush2.msra.mxu0 0.0
  %1562 = vmatprep.subr.mxu0 0.0
  %1563 = vmatpush2.msra.mxu0 0.0
  %1564 = vmatprep.subr.mxu0 0.0
  %1565 = vmatpush2.msra.mxu0 0.0
  %1566 = vmatprep.subr.mxu0 0.0
  %1567 = vmatpush2.msra.mxu0 0.0
  %1568 = vmatprep.subr.mxu0 0.0
  %1569 = vmatpush2.msra.mxu0 0.0
  %1570 = vmatprep.subr.mxu0 0.0
  %1571 = vmatpush2.msra.mxu0 0.0
  %1572 = vmatprep.subr.mxu0 0.0
  %1573 = vmatpush2.msra.mxu0 0.0
  %1574 = vmatprep.subr.mxu0 0.0
  %1575 = vmatpush2.msra.mxu0 0.0
  %1576 = vmatprep.subr.mxu0 0.0
  %1577 = vmatpush2.msra.mxu0 0.0
  %1578 = vmatprep.subr.mxu0 0.0
  %1579 = vmatpush2.msra.mxu0 0.0
  %1580 = vmatprep.subr.mxu0 0.0
  %1581 = vmatpush2.msra.mxu0 0.0
  %1582 = vmatprep.subr.mxu0 0.0
  %1583 = vmatpush2.msra.mxu0 0.0
  %1584 = vmatprep.subr.mxu0 0.0
  %1585 = vmatpush2.msra.mxu0 0.0
  %1586 = vmatprep.mubr.f32.mxu0 0.0
  %1587 = vmatmul.mubr.f32.gmra.mxu0 %v1511
  %v1588 = vpop.f32.mrf.mxu0
  %v1589 = vadd.f32 0.0, %v1588
  %v1590 = vpop.f32.mrf.mxu0
  %1591 = vmatprep.mubr.f32.mxu0 0.0
  %1592 = vmatmul.mubr.f32.gmra.mxu0 %v1514
  %v1593 = vpop.f32.mrf.mxu0
  %v1594 = vadd.f32 0.0, %v1593
  %v1595 = vpop.f32.mrf.mxu0
  %1596 = vmatprep.mubr.f32.mxu0 0.0
  %1597 = vmatmul.mubr.f32.gmra.mxu0 %v1517
  %v1598 = vpop.f32.mrf.mxu0
  %v1599 = vadd.f32 0.0, %v1598
  %v1600 = vpop.f32.mrf.mxu0
  %1601 = vmatprep.mubr.f32.mxu0 0.0
  %1602 = vmatmul.mubr.f32.gmra.mxu0 %v1520
  %v1603 = vpop.f32.mrf.mxu0
  %v1604 = vadd.f32 0.0, %v1603
  %v1605 = vpop.f32.mrf.mxu0
  %1606 = vdwg.mxu0
  %v1607 = vadd.f32 %v176, %v1589
  %v1608 = vadd.f32 %v181, %v1594
  %v1609 = vadd.f32 %v186, %v1599
  %v1610 = vadd.f32 %v191, %v1604
  %v1611 = vld [vmem:[%s21] sm:$0x1]
  %v1613 = vlaneseq
  %v1614 = vshrl.u32 %v1613, 7
  %v1615 = vsub.s32 0, %v1614
  %v1616 = vrot.slane %v1611, %v1615
  %v1618 = vadd.f32 %v1607, %v1616
  %v1619 = vadd.f32 %v1608, %v1616
  %v1620 = vadd.f32 %v1609, %v1616
  %v1621 = vadd.f32 %v1610, %v1616
  %v1622 = vld [vmem:[%s22] sm:$0x1]
  %v1623 = vld [vmem:[%s23] sm:$0x1]
  %v1624 = vsel %vm248, %v1618, 0.0
  %1625 = vadd.xlane.f32.xlu0 %v1624
  %v1626 = vpop.xlane.xlu0 %1625
  %v1627 = vsel %vm248, %v1619, 0.0
  %1628 = vadd.xlane.f32.xlu0 %v1627
  %v1629 = vpop.xlane.xlu0 %1628
  %v1630 = vsel %vm248, %v1620, 0.0
  %1631 = vadd.xlane.f32.xlu0 %v1630
  %v1632 = vpop.xlane.xlu0 %1631
  %v1633 = vsel %vm248, %v1621, 0.0
  %1634 = vadd.xlane.f32.xlu0 %v1633
  %v1635 = vpop.xlane.xlu0 %1634
  %v1636 = vmul.f32 %v1626, %v261
  %v1637 = vmul.f32 %v1629, %v261
  %v1638 = vmul.f32 %v1632, %v261
  %v1639 = vmul.f32 %v1635, %v261
  %v1640 = vsub.f32 %v1618, %v1636
  %v1641 = vsub.f32 %v1619, %v1637
  %v1642 = vsub.f32 %v1620, %v1638
  %v1643 = vsub.f32 %v1621, %v1639
  %v1644 = vmul.f32 %v1640, %v1640
  %v1645 = vmul.f32 %v1641, %v1641
  %v1646 = vmul.f32 %v1642, %v1642
  %v1647 = vmul.f32 %v1643, %v1643
  %v1648 = vsel %vm248, %v1644, 0.0
  %1649 = vadd.xlane.f32.xlu0 %v1648
  %v1650 = vpop.xlane.xlu0 %1649
  %v1651 = vsel %vm248, %v1645, 0.0
  %1652 = vadd.xlane.f32.xlu0 %v1651
  %v1653 = vpop.xlane.xlu0 %1652
  %v1654 = vsel %vm248, %v1646, 0.0
  %1655 = vadd.xlane.f32.xlu0 %v1654
  %v1656 = vpop.xlane.xlu0 %1655
  %v1657 = vsel %vm248, %v1647, 0.0
  %1658 = vadd.xlane.f32.xlu0 %v1657
  %v1659 = vpop.xlane.xlu0 %1658
  %v1660 = vmul.f32 %v1650, %v261
  %v1661 = vmul.f32 %v1653, %v261
  %v1662 = vmul.f32 %v1656, %v261
  %v1663 = vmul.f32 %v1659, %v261
  %v1664 = vadd.f32 %v1660, 1e-05
  %v1665 = vadd.f32 %v1661, 1e-05
  %v1666 = vadd.f32 %v1662, 1e-05
  %v1667 = vadd.f32 %v1663, 1e-05
  %v1668 = vrsqrt.pop %v1664
  %v1669 = vrsqrt.pop %v1665
  %v1670 = vrsqrt.pop %v1666
  %v1671 = vrsqrt.pop %v1667
  %v1672 = vmul.f32 %v1640, %v1668
  %v1673 = vmul.f32 %v1641, %v1669
  %v1674 = vmul.f32 %v1642, %v1670
  %v1675 = vmul.f32 %v1643, %v1671
  %v1677 = vlaneseq
  %v1678 = vshrl.u32 %v1677, 7
  %v1679 = vsub.s32 0, %v1678
  %v1680 = vrot.slane %v1622, %v1679
  %v1682 = vmul.f32 %v1672, %v1680
  %v1683 = vmul.f32 %v1673, %v1680
  %v1684 = vmul.f32 %v1674, %v1680
  %v1685 = vmul.f32 %v1675, %v1680
  %v1687 = vlaneseq
  %v1688 = vshrl.u32 %v1687, 7
  %v1689 = vsub.s32 0, %v1688
  %v1690 = vrot.slane %v1623, %v1689
  %v1692 = vadd.f32 %v1682, %v1690
  %v1693 = vadd.f32 %v1683, %v1690
  %v1694 = vadd.f32 %v1684, %v1690
  %v1695 = vadd.f32 %v1685, %v1690
  %v1696 = vld [vmem:[%s24] sm:$0xff]
  %v1697 = vld [vmem:[%s24 + $0x8] sm:$0xff]
  %v1698 = vld [vmem:[%s24 + $0x10] sm:$0xff]
  %v1699 = vld [vmem:[%s24 + $0x18] sm:$0xff]
  %v1700 = vld [vmem:[%s25] sm:$0x1]
  %v1702 = vlaneseq
  %v1703 = vshrl.u32 %v1702, 7
  %v1704 = vsub.s32 0, %v1703
  %v1705 = vrot.slane %v1700, %v1704
  %v1708 = vsel %vm248, %v1692, 0
  %v1711 = vsel %vm248, %v1693, 0
  %v1714 = vsel %vm248, %v1694, 0
  %v1717 = vsel %vm248, %v1695, 0
  %1719 = vmatprep.subr.mxu0 0.0
  %1720 = vmatpush1.msra.mxu0 0.0
  %1721 = vmatprep.subr.mxu0 0.0
  %1722 = vmatpush1.msra.mxu0 0.0
  %1723 = vmatprep.subr.mxu0 0.0
  %1724 = vmatpush1.msra.mxu0 0.0
  %1725 = vmatprep.subr.mxu0 0.0
  %1726 = vmatpush1.msra.mxu0 0.0
  %1727 = vmatprep.subr.mxu0 0.0
  %1728 = vmatpush1.msra.mxu0 0.0
  %1729 = vmatprep.subr.mxu0 0.0
  %1730 = vmatpush1.msra.mxu0 0.0
  %1731 = vmatprep.subr.mxu0 0.0
  %1732 = vmatpush1.msra.mxu0 0.0
  %1733 = vmatprep.subr.mxu0 0.0
  %1734 = vmatpush1.msra.mxu0 0.0
  %1735 = vmatprep.subr.mxu0 0.0
  %1736 = vmatpush1.msra.mxu0 0.0
  %1737 = vmatprep.subr.mxu0 0.0
  %1738 = vmatpush1.msra.mxu0 0.0
  %1739 = vmatprep.subr.mxu0 0.0
  %1740 = vmatpush1.msra.mxu0 0.0
  %1741 = vmatprep.subr.mxu0 0.0
  %1742 = vmatpush1.msra.mxu0 0.0
  %1743 = vmatprep.subr.mxu0 0.0
  %1744 = vmatpush1.msra.mxu0 %v1699
  %1745 = vmatprep.subr.mxu0 0.0
  %1746 = vmatpush1.msra.mxu0 %v1698
  %1747 = vmatprep.subr.mxu0 0.0
  %1748 = vmatpush1.msra.mxu0 %v1697
  %1749 = vmatprep.subr.mxu0 0.0
  %1750 = vmatpush1.msra.mxu0 %v1696
  %1751 = vmatprep.subr.mxu0 0.0
  %1752 = vmatpush2.msra.mxu0 0.0
  %1753 = vmatprep.subr.mxu0 0.0
  %1754 = vmatpush2.msra.mxu0 0.0
  %1755 = vmatprep.subr.mxu0 0.0
  %1756 = vmatpush2.msra.mxu0 0.0
  %1757 = vmatprep.subr.mxu0 0.0
  %1758 = vmatpush2.msra.mxu0 0.0
  %1759 = vmatprep.subr.mxu0 0.0
  %1760 = vmatpush2.msra.mxu0 0.0
  %1761 = vmatprep.subr.mxu0 0.0
  %1762 = vmatpush2.msra.mxu0 0.0
  %1763 = vmatprep.subr.mxu0 0.0
  %1764 = vmatpush2.msra.mxu0 0.0
  %1765 = vmatprep.subr.mxu0 0.0
  %1766 = vmatpush2.msra.mxu0 0.0
  %1767 = vmatprep.subr.mxu0 0.0
  %1768 = vmatpush2.msra.mxu0 0.0
  %1769 = vmatprep.subr.mxu0 0.0
  %1770 = vmatpush2.msra.mxu0 0.0
  %1771 = vmatprep.subr.mxu0 0.0
  %1772 = vmatpush2.msra.mxu0 0.0
  %1773 = vmatprep.subr.mxu0 0.0
  %1774 = vmatpush2.msra.mxu0 0.0
  %1775 = vmatprep.subr.mxu0 0.0
  %1776 = vmatpush2.msra.mxu0 0.0
  %1777 = vmatprep.subr.mxu0 0.0
  %1778 = vmatpush2.msra.mxu0 0.0
  %1779 = vmatprep.subr.mxu0 0.0
  %1780 = vmatpush2.msra.mxu0 0.0
  %1781 = vmatprep.subr.mxu0 0.0
  %1782 = vmatpush2.msra.mxu0 0.0
  %1783 = vmatprep.mubr.f32.mxu0 0.0
  %1784 = vmatmul.mubr.f32.gmra.mxu0 %v1708
  %v1785 = vpop.f32.mrf.mxu0
  %v1786 = vadd.f32 %v1705, %v1785
  %v1787 = vpop.f32.mrf.mxu0
  %1788 = vmatprep.mubr.f32.mxu0 0.0
  %1789 = vmatmul.mubr.f32.gmra.mxu0 %v1711
  %v1790 = vpop.f32.mrf.mxu0
  %v1791 = vadd.f32 %v1705, %v1790
  %v1792 = vpop.f32.mrf.mxu0
  %1793 = vmatprep.mubr.f32.mxu0 0.0
  %1794 = vmatmul.mubr.f32.gmra.mxu0 %v1714
  %v1795 = vpop.f32.mrf.mxu0
  %v1796 = vadd.f32 %v1705, %v1795
  %v1797 = vpop.f32.mrf.mxu0
  %1798 = vmatprep.mubr.f32.mxu0 0.0
  %1799 = vmatmul.mubr.f32.gmra.mxu0 %v1717
  %v1800 = vpop.f32.mrf.mxu0
  %v1801 = vadd.f32 %v1705, %v1800
  %v1802 = vpop.f32.mrf.mxu0
  %1803 = vdwg.mxu0
  %v1804 = vmul.f32 %v1786, 0.5
  %v1805 = vmul.f32 %v1791, 0.5
  %v1806 = vmul.f32 %v1796, 0.5
  %v1807 = vmul.f32 %v1801, 0.5
  %v1808 = vmul.f32 %v1786, 0.70710677
  %v1809 = vmul.f32 %v1791, 0.70710677
  %v1810 = vmul.f32 %v1796, 0.70710677
  %v1811 = vmul.f32 %v1801, 0.70710677
  %vm1812 = vcmp.lt.f32.partialorder %v1808, 0.0
  %vm1813 = vcmp.lt.f32.partialorder %v1809, 0.0
  %vm1814 = vcmp.lt.f32.partialorder %v1810, 0.0
  %vm1815 = vcmp.lt.f32.partialorder %v1811, 0.0
  %v1816 = vsel %vm1812, -1.0, 1.0
  %v1817 = vsel %vm1813, -1.0, 1.0
  %v1818 = vsel %vm1814, -1.0, 1.0
  %v1819 = vsel %vm1815, -1.0, 1.0
  %v1820 = vand.u32 2147483647, %v1808
  %v1821 = vand.u32 2147483647, %v1809
  %v1822 = vand.u32 2147483647, %v1810
  %v1823 = vand.u32 2147483647, %v1811
  %v1824 = vmul.f32 %v1820, 0.3275911
  %v1825 = vmul.f32 %v1821, 0.3275911
  %v1826 = vmul.f32 %v1822, 0.3275911
  %v1827 = vmul.f32 %v1823, 0.3275911
  %v1828 = vadd.f32 %v1824, 1.0
  %v1829 = vadd.f32 %v1825, 1.0
  %v1830 = vadd.f32 %v1826, 1.0
  %v1831 = vadd.f32 %v1827, 1.0
  %v1832 = vrcp.pop %v1828
  %v1833 = vmul.f32 1.0, %v1832
  %v1834 = vrcp.pop %v1829
  %v1835 = vmul.f32 1.0, %v1834
  %v1836 = vrcp.pop %v1830
  %v1837 = vmul.f32 1.0, %v1836
  %v1838 = vrcp.pop %v1831
  %v1839 = vmul.f32 1.0, %v1838
  %v1840 = vmul.f32 %v1833, 1.0614054
  %v1841 = vmul.f32 %v1835, 1.0614054
  %v1842 = vmul.f32 %v1837, 1.0614054
  %v1843 = vmul.f32 %v1839, 1.0614054
  %v1844 = vadd.f32 %v1840, -1.4531521
  %v1845 = vadd.f32 %v1841, -1.4531521
  %v1846 = vadd.f32 %v1842, -1.4531521
  %v1847 = vadd.f32 %v1843, -1.4531521
  %v1848 = vmul.f32 %v1844, %v1833
  %v1849 = vmul.f32 %v1845, %v1835
  %v1850 = vmul.f32 %v1846, %v1837
  %v1851 = vmul.f32 %v1847, %v1839
  %v1852 = vadd.f32 %v1848, 1.4214138
  %v1853 = vadd.f32 %v1849, 1.4214138
  %v1854 = vadd.f32 %v1850, 1.4214138
  %v1855 = vadd.f32 %v1851, 1.4214138
  %v1856 = vmul.f32 %v1852, %v1833
  %v1857 = vmul.f32 %v1853, %v1835
  %v1858 = vmul.f32 %v1854, %v1837
  %v1859 = vmul.f32 %v1855, %v1839
  %v1860 = vadd.f32 %v1856, -0.28449672
  %v1861 = vadd.f32 %v1857, -0.28449672
  %v1862 = vadd.f32 %v1858, -0.28449672
  %v1863 = vadd.f32 %v1859, -0.28449672
  %v1864 = vmul.f32 %v1860, %v1833
  %v1865 = vmul.f32 %v1861, %v1835
  %v1866 = vmul.f32 %v1862, %v1837
  %v1867 = vmul.f32 %v1863, %v1839
  %v1868 = vadd.f32 %v1864, 0.2548296
  %v1869 = vadd.f32 %v1865, 0.2548296
  %v1870 = vadd.f32 %v1866, 0.2548296
  %v1871 = vadd.f32 %v1867, 0.2548296
  %v1872 = vmul.f32 %v1868, %v1833
  %v1873 = vmul.f32 %v1869, %v1835
  %v1874 = vmul.f32 %v1870, %v1837
  %v1875 = vmul.f32 %v1871, %v1839
  %v1876 = vsub.f32 0.0, %v1820
  %v1877 = vsub.f32 0.0, %v1821
  %v1878 = vsub.f32 0.0, %v1822
  %v1879 = vsub.f32 0.0, %v1823
  %v1880 = vmul.f32 %v1876, %v1820
  %v1881 = vmul.f32 %v1877, %v1821
  %v1882 = vmul.f32 %v1878, %v1822
  %v1883 = vmul.f32 %v1879, %v1823
  %v1884 = vmul.f32 %v1880, 1.442695
  %v1885 = vpow.pop %v1884
  %v1886 = vmul.f32 %v1881, 1.442695
  %v1887 = vpow.pop %v1886
  %v1888 = vmul.f32 %v1882, 1.442695
  %v1889 = vpow.pop %v1888
  %v1890 = vmul.f32 %v1883, 1.442695
  %v1891 = vpow.pop %v1890
  %v1892 = vmul.f32 %v1872, %v1885
  %v1893 = vmul.f32 %v1873, %v1887
  %v1894 = vmul.f32 %v1874, %v1889
  %v1895 = vmul.f32 %v1875, %v1891
  %v1896 = vsub.f32 1.0, %v1892
  %v1897 = vsub.f32 1.0, %v1893
  %v1898 = vsub.f32 1.0, %v1894
  %v1899 = vsub.f32 1.0, %v1895
  %v1900 = vmul.f32 %v1816, %v1896
  %v1901 = vmul.f32 %v1817, %v1897
  %v1902 = vmul.f32 %v1818, %v1898
  %v1903 = vmul.f32 %v1819, %v1899
  %v1904 = vadd.f32 %v1900, 1.0
  %v1905 = vadd.f32 %v1901, 1.0
  %v1906 = vadd.f32 %v1902, 1.0
  %v1907 = vadd.f32 %v1903, 1.0
  %v1908 = vmul.f32 %v1804, %v1904
  %v1909 = vmul.f32 %v1805, %v1905
  %v1910 = vmul.f32 %v1806, %v1906
  %v1911 = vmul.f32 %v1807, %v1907
  %v1912 = vld [vmem:[%s26] sm:$0xff]
  %v1913 = vld [vmem:[%s26 + $0x8] sm:$0xff]
  %v1914 = vld [vmem:[%s26 + $0x10] sm:$0xff]
  %v1915 = vld [vmem:[%s26 + $0x18] sm:$0xff]
  %v1916 = vld [vmem:[%s26 + $0x20] sm:$0xff]
  %v1917 = vld [vmem:[%s26 + $0x28] sm:$0xff]
  %v1918 = vld [vmem:[%s26 + $0x30] sm:$0xff]
  %v1919 = vld [vmem:[%s26 + $0x38] sm:$0xff]
  %v1920 = vld [vmem:[%s26 + $0x40] sm:$0xff]
  %v1921 = vld [vmem:[%s26 + $0x48] sm:$0xff]
  %v1922 = vld [vmem:[%s26 + $0x50] sm:$0xff]
  %v1923 = vld [vmem:[%s26 + $0x58] sm:$0xff]
  %v1924 = vld [vmem:[%s26 + $0x60] sm:$0xff]
  %v1925 = vld [vmem:[%s26 + $0x68] sm:$0xff]
  %v1926 = vld [vmem:[%s26 + $0x70] sm:$0xff]
  %v1927 = vld [vmem:[%s26 + $0x78] sm:$0xff]
  %1928 = vmatprep.subr.mxu0 0.0
  %1929 = vmatpush1.msra.mxu0 %v1927
  %1930 = vmatprep.subr.mxu0 0.0
  %1931 = vmatpush1.msra.mxu0 %v1926
  %1932 = vmatprep.subr.mxu0 0.0
  %1933 = vmatpush1.msra.mxu0 %v1925
  %1934 = vmatprep.subr.mxu0 0.0
  %1935 = vmatpush1.msra.mxu0 %v1924
  %1936 = vmatprep.subr.mxu0 0.0
  %1937 = vmatpush1.msra.mxu0 %v1923
  %1938 = vmatprep.subr.mxu0 0.0
  %1939 = vmatpush1.msra.mxu0 %v1922
  %1940 = vmatprep.subr.mxu0 0.0
  %1941 = vmatpush1.msra.mxu0 %v1921
  %1942 = vmatprep.subr.mxu0 0.0
  %1943 = vmatpush1.msra.mxu0 %v1920
  %1944 = vmatprep.subr.mxu0 0.0
  %1945 = vmatpush1.msra.mxu0 %v1919
  %1946 = vmatprep.subr.mxu0 0.0
  %1947 = vmatpush1.msra.mxu0 %v1918
  %1948 = vmatprep.subr.mxu0 0.0
  %1949 = vmatpush1.msra.mxu0 %v1917
  %1950 = vmatprep.subr.mxu0 0.0
  %1951 = vmatpush1.msra.mxu0 %v1916
  %1952 = vmatprep.subr.mxu0 0.0
  %1953 = vmatpush1.msra.mxu0 %v1915
  %1954 = vmatprep.subr.mxu0 0.0
  %1955 = vmatpush1.msra.mxu0 %v1914
  %1956 = vmatprep.subr.mxu0 0.0
  %1957 = vmatpush1.msra.mxu0 %v1913
  %1958 = vmatprep.subr.mxu0 0.0
  %1959 = vmatpush1.msra.mxu0 %v1912
  %1960 = vmatprep.subr.mxu0 0.0
  %1961 = vmatpush2.msra.mxu0 0.0
  %1962 = vmatprep.subr.mxu0 0.0
  %1963 = vmatpush2.msra.mxu0 0.0
  %1964 = vmatprep.subr.mxu0 0.0
  %1965 = vmatpush2.msra.mxu0 0.0
  %1966 = vmatprep.subr.mxu0 0.0
  %1967 = vmatpush2.msra.mxu0 0.0
  %1968 = vmatprep.subr.mxu0 0.0
  %1969 = vmatpush2.msra.mxu0 0.0
  %1970 = vmatprep.subr.mxu0 0.0
  %1971 = vmatpush2.msra.mxu0 0.0
  %1972 = vmatprep.subr.mxu0 0.0
  %1973 = vmatpush2.msra.mxu0 0.0
  %1974 = vmatprep.subr.mxu0 0.0
  %1975 = vmatpush2.msra.mxu0 0.0
  %1976 = vmatprep.subr.mxu0 0.0
  %1977 = vmatpush2.msra.mxu0 0.0
  %1978 = vmatprep.subr.mxu0 0.0
  %1979 = vmatpush2.msra.mxu0 0.0
  %1980 = vmatprep.subr.mxu0 0.0
  %1981 = vmatpush2.msra.mxu0 0.0
  %1982 = vmatprep.subr.mxu0 0.0
  %1983 = vmatpush2.msra.mxu0 0.0
  %1984 = vmatprep.subr.mxu0 0.0
  %1985 = vmatpush2.msra.mxu0 0.0
  %1986 = vmatprep.subr.mxu0 0.0
  %1987 = vmatpush2.msra.mxu0 0.0
  %1988 = vmatprep.subr.mxu0 0.0
  %1989 = vmatpush2.msra.mxu0 0.0
  %1990 = vmatprep.subr.mxu0 0.0
  %1991 = vmatpush2.msra.mxu0 0.0
  %1992 = vmatprep.mubr.f32.mxu0 0.0
  %1993 = vmatmul.mubr.f32.gmra.mxu0 %v1908
  %v1994 = vpop.f32.mrf.mxu0
  %v1995 = vadd.f32 0.0, %v1994
  %v1996 = vpop.f32.mrf.mxu0
  %1997 = vmatprep.mubr.f32.mxu0 0.0
  %1998 = vmatmul.mubr.f32.gmra.mxu0 %v1909
  %v1999 = vpop.f32.mrf.mxu0
  %v2000 = vadd.f32 0.0, %v1999
  %v2001 = vpop.f32.mrf.mxu0
  %2002 = vmatprep.mubr.f32.mxu0 0.0
  %2003 = vmatmul.mubr.f32.gmra.mxu0 %v1910
  %v2004 = vpop.f32.mrf.mxu0
  %v2005 = vadd.f32 0.0, %v2004
  %v2006 = vpop.f32.mrf.mxu0
  %2007 = vmatprep.mubr.f32.mxu0 0.0
  %2008 = vmatmul.mubr.f32.gmra.mxu0 %v1911
  %v2009 = vpop.f32.mrf.mxu0
  %v2010 = vadd.f32 0.0, %v2009
  %v2011 = vpop.f32.mrf.mxu0
  %2012 = vdwg.mxu0
  %v2013 = vadd.f32 %v1618, %v1995
  %v2014 = vadd.f32 %v1619, %v2000
  %v2015 = vadd.f32 %v1620, %v2005
  %v2016 = vadd.f32 %v1621, %v2010
  %v2017 = vld [vmem:[%s27] sm:$0x1]
  %v2019 = vlaneseq
  %v2020 = vshrl.u32 %v2019, 7
  %v2021 = vsub.s32 0, %v2020
  %v2022 = vrot.slane %v2017, %v2021
  %v2024 = vadd.f32 %v2013, %v2022
  %v2025 = vadd.f32 %v2014, %v2022
  %v2026 = vadd.f32 %v2015, %v2022
  %v2027 = vadd.f32 %v2016, %v2022
  %s2028 = scalar_lea.vmem %s12, 1
  %v2029 = vld [vmem:[%s2028] sm:$0x1]
  %s2030 = scalar_lea.vmem %s13, 1
  %v2031 = vld [vmem:[%s2030] sm:$0x1]
  %v2032 = vsel %vm248, %v2024, 0.0
  %2033 = vadd.xlane.f32.xlu0 %v2032
  %v2034 = vpop.xlane.xlu0 %2033
  %v2035 = vsel %vm248, %v2025, 0.0
  %2036 = vadd.xlane.f32.xlu0 %v2035
  %v2037 = vpop.xlane.xlu0 %2036
  %v2038 = vsel %vm248, %v2026, 0.0
  %2039 = vadd.xlane.f32.xlu0 %v2038
  %v2040 = vpop.xlane.xlu0 %2039
  %v2041 = vsel %vm248, %v2027, 0.0
  %2042 = vadd.xlane.f32.xlu0 %v2041
  %v2043 = vpop.xlane.xlu0 %2042
  %v2044 = vmul.f32 %v2034, %v261
  %v2045 = vmul.f32 %v2037, %v261
  %v2046 = vmul.f32 %v2040, %v261
  %v2047 = vmul.f32 %v2043, %v261
  %v2048 = vsub.f32 %v2024, %v2044
  %v2049 = vsub.f32 %v2025, %v2045
  %v2050 = vsub.f32 %v2026, %v2046
  %v2051 = vsub.f32 %v2027, %v2047
  %v2052 = vmul.f32 %v2048, %v2048
  %v2053 = vmul.f32 %v2049, %v2049
  %v2054 = vmul.f32 %v2050, %v2050
  %v2055 = vmul.f32 %v2051, %v2051
  %v2056 = vsel %vm248, %v2052, 0.0
  %2057 = vadd.xlane.f32.xlu0 %v2056
  %v2058 = vpop.xlane.xlu0 %2057
  %v2059 = vsel %vm248, %v2053, 0.0
  %2060 = vadd.xlane.f32.xlu0 %v2059
  %v2061 = vpop.xlane.xlu0 %2060
  %v2062 = vsel %vm248, %v2054, 0.0
  %2063 = vadd.xlane.f32.xlu0 %v2062
  %v2064 = vpop.xlane.xlu0 %2063
  %v2065 = vsel %vm248, %v2055, 0.0
  %2066 = vadd.xlane.f32.xlu0 %v2065
  %v2067 = vpop.xlane.xlu0 %2066
  %v2068 = vmul.f32 %v2058, %v261
  %v2069 = vmul.f32 %v2061, %v261
  %v2070 = vmul.f32 %v2064, %v261
  %v2071 = vmul.f32 %v2067, %v261
  %v2072 = vadd.f32 %v2068, 1e-05
  %v2073 = vadd.f32 %v2069, 1e-05
  %v2074 = vadd.f32 %v2070, 1e-05
  %v2075 = vadd.f32 %v2071, 1e-05
  %v2076 = vrsqrt.pop %v2072
  %v2077 = vrsqrt.pop %v2073
  %v2078 = vrsqrt.pop %v2074
  %v2079 = vrsqrt.pop %v2075
  %v2080 = vmul.f32 %v2048, %v2076
  %v2081 = vmul.f32 %v2049, %v2077
  %v2082 = vmul.f32 %v2050, %v2078
  %v2083 = vmul.f32 %v2051, %v2079
  %v2085 = vlaneseq
  %v2086 = vshrl.u32 %v2085, 7
  %v2087 = vsub.s32 0, %v2086
  %v2088 = vrot.slane %v2029, %v2087
  %v2090 = vmul.f32 %v2080, %v2088
  %v2091 = vmul.f32 %v2081, %v2088
  %v2092 = vmul.f32 %v2082, %v2088
  %v2093 = vmul.f32 %v2083, %v2088
  %v2095 = vlaneseq
  %v2096 = vshrl.u32 %v2095, 7
  %v2097 = vsub.s32 0, %v2096
  %v2098 = vrot.slane %v2031, %v2097
  %v2100 = vadd.f32 %v2090, %v2098
  %v2101 = vadd.f32 %v2091, %v2098
  %v2102 = vadd.f32 %v2092, %v2098
  %v2103 = vadd.f32 %v2093, %v2098
  %s2104 = scalar_lea.vmem %s14, 32
  %v2105 = vld [vmem:[%s2104] sm:$0xff]
  %v2106 = vld [vmem:[%s2104 + $0x8] sm:$0xff]
  %v2107 = vld [vmem:[%s2104 + $0x10] sm:$0xff]
  %v2108 = vld [vmem:[%s2104 + $0x18] sm:$0xff]
  %s2109 = scalar_lea.vmem %s15, 1
  %v2110 = vld [vmem:[%s2109] sm:$0x1]
  %v2112 = vlaneseq
  %v2113 = vshrl.u32 %v2112, 7
  %v2114 = vsub.s32 0, %v2113
  %v2115 = vrot.slane %v2110, %v2114
  %v2118 = vsel %vm248, %v2100, 0
  %v2121 = vsel %vm248, %v2101, 0
  %v2124 = vsel %vm248, %v2102, 0
  %v2127 = vsel %vm248, %v2103, 0
  %2129 = vmatprep.subr.mxu0 0.0
  %2130 = vmatpush1.msra.mxu0 0.0
  %2131 = vmatprep.subr.mxu0 0.0
  %2132 = vmatpush1.msra.mxu0 0.0
  %2133 = vmatprep.subr.mxu0 0.0
  %2134 = vmatpush1.msra.mxu0 0.0
  %2135 = vmatprep.subr.mxu0 0.0
  %2136 = vmatpush1.msra.mxu0 0.0
  %2137 = vmatprep.subr.mxu0 0.0
  %2138 = vmatpush1.msra.mxu0 0.0
  %2139 = vmatprep.subr.mxu0 0.0
  %2140 = vmatpush1.msra.mxu0 0.0
  %2141 = vmatprep.subr.mxu0 0.0
  %2142 = vmatpush1.msra.mxu0 0.0
  %2143 = vmatprep.subr.mxu0 0.0
  %2144 = vmatpush1.msra.mxu0 0.0
  %2145 = vmatprep.subr.mxu0 0.0
  %2146 = vmatpush1.msra.mxu0 0.0
  %2147 = vmatprep.subr.mxu0 0.0
  %2148 = vmatpush1.msra.mxu0 0.0
  %2149 = vmatprep.subr.mxu0 0.0
  %2150 = vmatpush1.msra.mxu0 0.0
  %2151 = vmatprep.subr.mxu0 0.0
  %2152 = vmatpush1.msra.mxu0 0.0
  %2153 = vmatprep.subr.mxu0 0.0
  %2154 = vmatpush1.msra.mxu0 %v2108
  %2155 = vmatprep.subr.mxu0 0.0
  %2156 = vmatpush1.msra.mxu0 %v2107
  %2157 = vmatprep.subr.mxu0 0.0
  %2158 = vmatpush1.msra.mxu0 %v2106
  %2159 = vmatprep.subr.mxu0 0.0
  %2160 = vmatpush1.msra.mxu0 %v2105
  %2161 = vmatprep.subr.mxu0 0.0
  %2162 = vmatpush2.msra.mxu0 0.0
  %2163 = vmatprep.subr.mxu0 0.0
  %2164 = vmatpush2.msra.mxu0 0.0
  %2165 = vmatprep.subr.mxu0 0.0
  %2166 = vmatpush2.msra.mxu0 0.0
  %2167 = vmatprep.subr.mxu0 0.0
  %2168 = vmatpush2.msra.mxu0 0.0
  %2169 = vmatprep.subr.mxu0 0.0
  %2170 = vmatpush2.msra.mxu0 0.0
  %2171 = vmatprep.subr.mxu0 0.0
  %2172 = vmatpush2.msra.mxu0 0.0
  %2173 = vmatprep.subr.mxu0 0.0
  %2174 = vmatpush2.msra.mxu0 0.0
  %2175 = vmatprep.subr.mxu0 0.0
  %2176 = vmatpush2.msra.mxu0 0.0
  %2177 = vmatprep.subr.mxu0 0.0
  %2178 = vmatpush2.msra.mxu0 0.0
  %2179 = vmatprep.subr.mxu0 0.0
  %2180 = vmatpush2.msra.mxu0 0.0
  %2181 = vmatprep.subr.mxu0 0.0
  %2182 = vmatpush2.msra.mxu0 0.0
  %2183 = vmatprep.subr.mxu0 0.0
  %2184 = vmatpush2.msra.mxu0 0.0
  %2185 = vmatprep.subr.mxu0 0.0
  %2186 = vmatpush2.msra.mxu0 0.0
  %2187 = vmatprep.subr.mxu0 0.0
  %2188 = vmatpush2.msra.mxu0 0.0
  %2189 = vmatprep.subr.mxu0 0.0
  %2190 = vmatpush2.msra.mxu0 0.0
  %2191 = vmatprep.subr.mxu0 0.0
  %2192 = vmatpush2.msra.mxu0 0.0
  %2193 = vmatprep.mubr.f32.mxu0 0.0
  %2194 = vmatmul.mubr.f32.gmra.mxu0 %v2118
  %v2195 = vpop.f32.mrf.mxu0
  %v2196 = vadd.f32 %v2115, %v2195
  %v2197 = vpop.f32.mrf.mxu0
  %2198 = vmatprep.mubr.f32.mxu0 0.0
  %2199 = vmatmul.mubr.f32.gmra.mxu0 %v2121
  %v2200 = vpop.f32.mrf.mxu0
  %v2201 = vadd.f32 %v2115, %v2200
  %v2202 = vpop.f32.mrf.mxu0
  %2203 = vmatprep.mubr.f32.mxu0 0.0
  %2204 = vmatmul.mubr.f32.gmra.mxu0 %v2124
  %v2205 = vpop.f32.mrf.mxu0
  %v2206 = vadd.f32 %v2115, %v2205
  %v2207 = vpop.f32.mrf.mxu0
  %2208 = vmatprep.mubr.f32.mxu0 0.0
  %2209 = vmatmul.mubr.f32.gmra.mxu0 %v2127
  %v2210 = vpop.f32.mrf.mxu0
  %v2211 = vadd.f32 %v2115, %v2210
  %v2212 = vpop.f32.mrf.mxu0
  %2213 = vdwg.mxu0
  %s2214 = scalar_lea.vmem %s16, 32
  %v2215 = vld [vmem:[%s2214] sm:$0xff]
  %v2216 = vld [vmem:[%s2214 + $0x8] sm:$0xff]
  %v2217 = vld [vmem:[%s2214 + $0x10] sm:$0xff]
  %v2218 = vld [vmem:[%s2214 + $0x18] sm:$0xff]
  %s2219 = scalar_lea.vmem %s17, 1
  %v2220 = vld [vmem:[%s2219] sm:$0x1]
  %v2222 = vlaneseq
  %v2223 = vshrl.u32 %v2222, 7
  %v2224 = vsub.s32 0, %v2223
  %v2225 = vrot.slane %v2220, %v2224
  %2227 = vmatprep.subr.mxu0 0.0
  %2228 = vmatpush1.msra.mxu0 0.0
  %2229 = vmatprep.subr.mxu0 0.0
  %2230 = vmatpush1.msra.mxu0 0.0
  %2231 = vmatprep.subr.mxu0 0.0
  %2232 = vmatpush1.msra.mxu0 0.0
  %2233 = vmatprep.subr.mxu0 0.0
  %2234 = vmatpush1.msra.mxu0 0.0
  %2235 = vmatprep.subr.mxu0 0.0
  %2236 = vmatpush1.msra.mxu0 0.0
  %2237 = vmatprep.subr.mxu0 0.0
  %2238 = vmatpush1.msra.mxu0 0.0
  %2239 = vmatprep.subr.mxu0 0.0
  %2240 = vmatpush1.msra.mxu0 0.0
  %2241 = vmatprep.subr.mxu0 0.0
  %2242 = vmatpush1.msra.mxu0 0.0
  %2243 = vmatprep.subr.mxu0 0.0
  %2244 = vmatpush1.msra.mxu0 0.0
  %2245 = vmatprep.subr.mxu0 0.0
  %2246 = vmatpush1.msra.mxu0 0.0
  %2247 = vmatprep.subr.mxu0 0.0
  %2248 = vmatpush1.msra.mxu0 0.0
  %2249 = vmatprep.subr.mxu0 0.0
  %2250 = vmatpush1.msra.mxu0 0.0
  %2251 = vmatprep.subr.mxu0 0.0
  %2252 = vmatpush1.msra.mxu0 %v2218
  %2253 = vmatprep.subr.mxu0 0.0
  %2254 = vmatpush1.msra.mxu0 %v2217
  %2255 = vmatprep.subr.mxu0 0.0
  %2256 = vmatpush1.msra.mxu0 %v2216
  %2257 = vmatprep.subr.mxu0 0.0
  %2258 = vmatpush1.msra.mxu0 %v2215
  %2259 = vmatprep.subr.mxu0 0.0
  %2260 = vmatpush2.msra.mxu0 0.0
  %2261 = vmatprep.subr.mxu0 0.0
  %2262 = vmatpush2.msra.mxu0 0.0
  %2263 = vmatprep.subr.mxu0 0.0
  %2264 = vmatpush2.msra.mxu0 0.0
  %2265 = vmatprep.subr.mxu0 0.0
  %2266 = vmatpush2.msra.mxu0 0.0
  %2267 = vmatprep.subr.mxu0 0.0
  %2268 = vmatpush2.msra.mxu0 0.0
  %2269 = vmatprep.subr.mxu0 0.0
  %2270 = vmatpush2.msra.mxu0 0.0
  %2271 = vmatprep.subr.mxu0 0.0
  %2272 = vmatpush2.msra.mxu0 0.0
  %2273 = vmatprep.subr.mxu0 0.0
  %2274 = vmatpush2.msra.mxu0 0.0
  %2275 = vmatprep.subr.mxu0 0.0
  %2276 = vmatpush2.msra.mxu0 0.0
  %2277 = vmatprep.subr.mxu0 0.0
  %2278 = vmatpush2.msra.mxu0 0.0
  %2279 = vmatprep.subr.mxu0 0.0
  %2280 = vmatpush2.msra.mxu0 0.0
  %2281 = vmatprep.subr.mxu0 0.0
  %2282 = vmatpush2.msra.mxu0 0.0
  %2283 = vmatprep.subr.mxu0 0.0
  %2284 = vmatpush2.msra.mxu0 0.0
  %2285 = vmatprep.subr.mxu0 0.0
  %2286 = vmatpush2.msra.mxu0 0.0
  %2287 = vmatprep.subr.mxu0 0.0
  %2288 = vmatpush2.msra.mxu0 0.0
  %2289 = vmatprep.subr.mxu0 0.0
  %2290 = vmatpush2.msra.mxu0 0.0
  %2291 = vmatprep.mubr.f32.mxu0 0.0
  %2292 = vmatmul.mubr.f32.gmra.mxu0 %v2118
  %v2293 = vpop.f32.mrf.mxu0
  %v2294 = vadd.f32 %v2225, %v2293
  %v2295 = vpop.f32.mrf.mxu0
  %2296 = vmatprep.mubr.f32.mxu0 0.0
  %2297 = vmatmul.mubr.f32.gmra.mxu0 %v2121
  %v2298 = vpop.f32.mrf.mxu0
  %v2299 = vadd.f32 %v2225, %v2298
  %v2300 = vpop.f32.mrf.mxu0
  %2301 = vmatprep.mubr.f32.mxu0 0.0
  %2302 = vmatmul.mubr.f32.gmra.mxu0 %v2124
  %v2303 = vpop.f32.mrf.mxu0
  %v2304 = vadd.f32 %v2225, %v2303
  %v2305 = vpop.f32.mrf.mxu0
  %2306 = vmatprep.mubr.f32.mxu0 0.0
  %2307 = vmatmul.mubr.f32.gmra.mxu0 %v2127
  %v2308 = vpop.f32.mrf.mxu0
  %v2309 = vadd.f32 %v2225, %v2308
  %v2310 = vpop.f32.mrf.mxu0
  %2311 = vdwg.mxu0
  %s2312 = scalar_lea.vmem %s18, 32
  %v2313 = vld [vmem:[%s2312] sm:$0xff]
  %v2314 = vld [vmem:[%s2312 + $0x8] sm:$0xff]
  %v2315 = vld [vmem:[%s2312 + $0x10] sm:$0xff]
  %v2316 = vld [vmem:[%s2312 + $0x18] sm:$0xff]
  %s2317 = scalar_lea.vmem %s19, 1
  %v2318 = vld [vmem:[%s2317] sm:$0x1]
  %v2320 = vlaneseq
  %v2321 = vshrl.u32 %v2320, 7
  %v2322 = vsub.s32 0, %v2321
  %v2323 = vrot.slane %v2318, %v2322
  %2325 = vmatprep.subr.mxu0 0.0
  %2326 = vmatpush1.msra.mxu0 0.0
  %2327 = vmatprep.subr.mxu0 0.0
  %2328 = vmatpush1.msra.mxu0 0.0
  %2329 = vmatprep.subr.mxu0 0.0
  %2330 = vmatpush1.msra.mxu0 0.0
  %2331 = vmatprep.subr.mxu0 0.0
  %2332 = vmatpush1.msra.mxu0 0.0
  %2333 = vmatprep.subr.mxu0 0.0
  %2334 = vmatpush1.msra.mxu0 0.0
  %2335 = vmatprep.subr.mxu0 0.0
  %2336 = vmatpush1.msra.mxu0 0.0
  %2337 = vmatprep.subr.mxu0 0.0
  %2338 = vmatpush1.msra.mxu0 0.0
  %2339 = vmatprep.subr.mxu0 0.0
  %2340 = vmatpush1.msra.mxu0 0.0
  %2341 = vmatprep.subr.mxu0 0.0
  %2342 = vmatpush1.msra.mxu0 0.0
  %2343 = vmatprep.subr.mxu0 0.0
  %2344 = vmatpush1.msra.mxu0 0.0
  %2345 = vmatprep.subr.mxu0 0.0
  %2346 = vmatpush1.msra.mxu0 0.0
  %2347 = vmatprep.subr.mxu0 0.0
  %2348 = vmatpush1.msra.mxu0 0.0
  %2349 = vmatprep.subr.mxu0 0.0
  %2350 = vmatpush1.msra.mxu0 %v2316
  %2351 = vmatprep.subr.mxu0 0.0
  %2352 = vmatpush1.msra.mxu0 %v2315
  %2353 = vmatprep.subr.mxu0 0.0
  %2354 = vmatpush1.msra.mxu0 %v2314
  %2355 = vmatprep.subr.mxu0 0.0
  %2356 = vmatpush1.msra.mxu0 %v2313
  %2357 = vmatprep.subr.mxu0 0.0
  %2358 = vmatpush2.msra.mxu0 0.0
  %2359 = vmatprep.subr.mxu0 0.0
  %2360 = vmatpush2.msra.mxu0 0.0
  %2361 = vmatprep.subr.mxu0 0.0
  %2362 = vmatpush2.msra.mxu0 0.0
  %2363 = vmatprep.subr.mxu0 0.0
  %2364 = vmatpush2.msra.mxu0 0.0
  %2365 = vmatprep.subr.mxu0 0.0
  %2366 = vmatpush2.msra.mxu0 0.0
  %2367 = vmatprep.subr.mxu0 0.0
  %2368 = vmatpush2.msra.mxu0 0.0
  %2369 = vmatprep.subr.mxu0 0.0
  %2370 = vmatpush2.msra.mxu0 0.0
  %2371 = vmatprep.subr.mxu0 0.0
  %2372 = vmatpush2.msra.mxu0 0.0
  %2373 = vmatprep.subr.mxu0 0.0
  %2374 = vmatpush2.msra.mxu0 0.0
  %2375 = vmatprep.subr.mxu0 0.0
  %2376 = vmatpush2.msra.mxu0 0.0
  %2377 = vmatprep.subr.mxu0 0.0
  %2378 = vmatpush2.msra.mxu0 0.0
  %2379 = vmatprep.subr.mxu0 0.0
  %2380 = vmatpush2.msra.mxu0 0.0
  %2381 = vmatprep.subr.mxu0 0.0
  %2382 = vmatpush2.msra.mxu0 0.0
  %2383 = vmatprep.subr.mxu0 0.0
  %2384 = vmatpush2.msra.mxu0 0.0
  %2385 = vmatprep.subr.mxu0 0.0
  %2386 = vmatpush2.msra.mxu0 0.0
  %2387 = vmatprep.subr.mxu0 0.0
  %2388 = vmatpush2.msra.mxu0 0.0
  %2389 = vmatprep.mubr.f32.mxu0 0.0
  %2390 = vmatmul.mubr.f32.gmra.mxu0 %v2118
  %v2391 = vpop.f32.mrf.mxu0
  %v2392 = vadd.f32 %v2323, %v2391
  %v2393 = vpop.f32.mrf.mxu0
  %2394 = vmatprep.mubr.f32.mxu0 0.0
  %2395 = vmatmul.mubr.f32.gmra.mxu0 %v2121
  %v2396 = vpop.f32.mrf.mxu0
  %v2397 = vadd.f32 %v2323, %v2396
  %v2398 = vpop.f32.mrf.mxu0
  %2399 = vmatprep.mubr.f32.mxu0 0.0
  %2400 = vmatmul.mubr.f32.gmra.mxu0 %v2124
  %v2401 = vpop.f32.mrf.mxu0
  %v2402 = vadd.f32 %v2323, %v2401
  %v2403 = vpop.f32.mrf.mxu0
  %2404 = vmatprep.mubr.f32.mxu0 0.0
  %2405 = vmatmul.mubr.f32.gmra.mxu0 %v2127
  %v2406 = vpop.f32.mrf.mxu0
  %v2407 = vadd.f32 %v2323, %v2406
  %v2408 = vpop.f32.mrf.mxu0
  %2409 = vdwg.mxu0
  %2410 = vmatprep.subr.mxu0 0.0
  %2411 = vmatpush1.msra.mxu0 0.0
  %2412 = vmatprep.subr.mxu0 0.0
  %2413 = vmatpush1.msra.mxu0 0.0
  %2414 = vmatprep.subr.mxu0 0.0
  %2415 = vmatpush1.msra.mxu0 0.0
  %2416 = vmatprep.subr.mxu0 0.0
  %2417 = vmatpush1.msra.mxu0 0.0
  %2418 = vmatprep.subr.mxu0 0.0
  %2419 = vmatpush1.msra.mxu0 0.0
  %2420 = vmatprep.subr.mxu0 0.0
  %2421 = vmatpush1.msra.mxu0 0.0
  %2422 = vmatprep.subr.mxu0 0.0
  %2423 = vmatpush1.msra.mxu0 0.0
  %2424 = vmatprep.subr.mxu0 0.0
  %2425 = vmatpush1.msra.mxu0 0.0
  %2426 = vmatprep.subr.mxu0 0.0
  %2427 = vmatpush1.msra.mxu0 0.0
  %2428 = vmatprep.subr.mxu0 0.0
  %2429 = vmatpush1.msra.mxu0 0.0
  %2430 = vmatprep.subr.mxu0 0.0
  %2431 = vmatpush1.msra.mxu0 0.0
  %2432 = vmatprep.subr.mxu0 0.0
  %2433 = vmatpush1.msra.mxu0 0.0
  %2434 = vmatprep.subr.mxu0 0.0
  %2435 = vmatpush1.msra.mxu0 %v2211
  %2436 = vmatprep.subr.mxu0 0.0
  %2437 = vmatpush1.msra.mxu0 %v2206
  %2438 = vmatprep.subr.mxu0 0.0
  %2439 = vmatpush1.msra.mxu0 %v2201
  %2440 = vmatprep.subr.mxu0 0.0
  %2441 = vmatpush1.msra.mxu0 %v2196
  %2442 = vmatprep.subr.mxu0 0.0
  %2443 = vmatpush2.msra.mxu0 0.0
  %2444 = vmatprep.subr.mxu0 0.0
  %2445 = vmatpush2.msra.mxu0 0.0
  %2446 = vmatprep.subr.mxu0 0.0
  %2447 = vmatpush2.msra.mxu0 0.0
  %2448 = vmatprep.subr.mxu0 0.0
  %2449 = vmatpush2.msra.mxu0 0.0
  %2450 = vmatprep.subr.mxu0 0.0
  %2451 = vmatpush2.msra.mxu0 0.0
  %2452 = vmatprep.subr.mxu0 0.0
  %2453 = vmatpush2.msra.mxu0 0.0
  %2454 = vmatprep.subr.mxu0 0.0
  %2455 = vmatpush2.msra.mxu0 0.0
  %2456 = vmatprep.subr.mxu0 0.0
  %2457 = vmatpush2.msra.mxu0 0.0
  %2458 = vmatprep.subr.mxu0 0.0
  %2459 = vmatpush2.msra.mxu0 0.0
  %2460 = vmatprep.subr.mxu0 0.0
  %2461 = vmatpush2.msra.mxu0 0.0
  %2462 = vmatprep.subr.mxu0 0.0
  %2463 = vmatpush2.msra.mxu0 0.0
  %2464 = vmatprep.subr.mxu0 0.0
  %2465 = vmatpush2.msra.mxu0 0.0
  %2466 = vmatprep.subr.mxu0 0.0
  %2467 = vmatpush2.msra.mxu0 0.0
  %2468 = vmatprep.subr.mxu0 0.0
  %2469 = vmatpush2.msra.mxu0 0.0
  %2470 = vmatprep.subr.mxu0 0.0
  %2471 = vmatpush2.msra.mxu0 0.0
  %2472 = vmatprep.subr.mxu0 0.0
  %2473 = vmatpush2.msra.mxu0 0.0
  %2474 = vmatprep.mubr.f32.mxu0 0.0
  %2475 = vmatmul.mubr.f32.gmra.mxu0 %v623
  %v2476 = vpop.f32.mrf.mxu0
  %v2477 = vadd.f32 0.0, %v2476
  %v2478 = vpop.f32.mrf.mxu0
  %2479 = vmatprep.mubr.f32.mxu0 0.0
  %2480 = vmatmul.mubr.f32.gmra.mxu0 %v626
  %v2481 = vpop.f32.mrf.mxu0
  %v2482 = vadd.f32 0.0, %v2481
  %v2483 = vpop.f32.mrf.mxu0
  %2484 = vmatprep.mubr.f32.mxu0 0.0
  %2485 = vmatmul.mubr.f32.gmra.mxu0 %v629
  %v2486 = vpop.f32.mrf.mxu0
  %v2487 = vadd.f32 0.0, %v2486
  %v2488 = vpop.f32.mrf.mxu0
  %2489 = vmatprep.mubr.f32.mxu0 0.0
  %2490 = vmatmul.mubr.f32.gmra.mxu0 %v632
  %v2491 = vpop.f32.mrf.mxu0
  %v2492 = vadd.f32 0.0, %v2491
  %v2493 = vpop.f32.mrf.mxu0
  %2494 = vmatprep.mubr.f32.mxu0 0.0
  %2495 = vmatmul.mubr.f32.gmra.mxu0 %v635
  %v2496 = vpop.f32.mrf.mxu0
  %v2497 = vadd.f32 0.0, %v2496
  %v2498 = vpop.f32.mrf.mxu0
  %2499 = vmatprep.mubr.f32.mxu0 0.0
  %2500 = vmatmul.mubr.f32.gmra.mxu0 %v638
  %v2501 = vpop.f32.mrf.mxu0
  %v2502 = vadd.f32 0.0, %v2501
  %v2503 = vpop.f32.mrf.mxu0
  %2504 = vmatprep.mubr.f32.mxu0 0.0
  %2505 = vmatmul.mubr.f32.gmra.mxu0 %v641
  %v2506 = vpop.f32.mrf.mxu0
  %v2507 = vadd.f32 0.0, %v2506
  %v2508 = vpop.f32.mrf.mxu0
  %2509 = vmatprep.mubr.f32.mxu0 0.0
  %2510 = vmatmul.mubr.f32.gmra.mxu0 %v644
  %v2511 = vpop.f32.mrf.mxu0
  %v2512 = vadd.f32 0.0, %v2511
  %v2513 = vpop.f32.mrf.mxu0
  %2514 = vmatprep.mubr.f32.mxu0 0.0
  %2515 = vmatmul.mubr.f32.gmra.mxu0 %v647
  %v2516 = vpop.f32.mrf.mxu0
  %v2517 = vadd.f32 0.0, %v2516
  %v2518 = vpop.f32.mrf.mxu0
  %2519 = vmatprep.mubr.f32.mxu0 0.0
  %2520 = vmatmul.mubr.f32.gmra.mxu0 %v650
  %v2521 = vpop.f32.mrf.mxu0
  %v2522 = vadd.f32 0.0, %v2521
  %v2523 = vpop.f32.mrf.mxu0
  %2524 = vmatprep.mubr.f32.mxu0 0.0
  %2525 = vmatmul.mubr.f32.gmra.mxu0 %v653
  %v2526 = vpop.f32.mrf.mxu0
  %v2527 = vadd.f32 0.0, %v2526
  %v2528 = vpop.f32.mrf.mxu0
  %2529 = vmatprep.mubr.f32.mxu0 0.0
  %2530 = vmatmul.mubr.f32.gmra.mxu0 %v656
  %v2531 = vpop.f32.mrf.mxu0
  %v2532 = vadd.f32 0.0, %v2531
  %v2533 = vpop.f32.mrf.mxu0
  %2534 = vmatprep.mubr.f32.mxu0 0.0
  %2535 = vmatmul.mubr.f32.gmra.mxu0 %v659
  %v2536 = vpop.f32.mrf.mxu0
  %v2537 = vadd.f32 0.0, %v2536
  %v2538 = vpop.f32.mrf.mxu0
  %2539 = vmatprep.mubr.f32.mxu0 0.0
  %2540 = vmatmul.mubr.f32.gmra.mxu0 %v662
  %v2541 = vpop.f32.mrf.mxu0
  %v2542 = vadd.f32 0.0, %v2541
  %v2543 = vpop.f32.mrf.mxu0
  %2544 = vmatprep.mubr.f32.mxu0 0.0
  %2545 = vmatmul.mubr.f32.gmra.mxu0 %v665
  %v2546 = vpop.f32.mrf.mxu0
  %v2547 = vadd.f32 0.0, %v2546
  %v2548 = vpop.f32.mrf.mxu0
  %2549 = vmatprep.mubr.f32.mxu0 0.0
  %2550 = vmatmul.mubr.f32.gmra.mxu0 %v668
  %v2551 = vpop.f32.mrf.mxu0
  %v2552 = vadd.f32 0.0, %v2551
  %v2553 = vpop.f32.mrf.mxu0
  %2554 = vdwg.mxu0
  %v2555 = vmul.f32 %v2477, %v214
  %v2556 = vmul.f32 %v2482, %v215
  %v2557 = vmul.f32 %v2487, %v216
  %v2558 = vmul.f32 %v2492, %v217
  %v2559 = vmul.f32 %v2497, %v218
  %v2560 = vmul.f32 %v2502, %v219
  %v2561 = vmul.f32 %v2507, %v220
  %v2562 = vmul.f32 %v2512, %v221
  %v2563 = vmul.f32 %v2517, %v222
  %v2564 = vmul.f32 %v2522, %v223
  %v2565 = vmul.f32 %v2527, %v224
  %v2566 = vmul.f32 %v2532, %v225
  %v2567 = vmul.f32 %v2537, %v226
  %v2568 = vmul.f32 %v2542, %v227
  %v2569 = vmul.f32 %v2547, %v228
  %v2570 = vmul.f32 %v2552, %v229
  %v2572 = vsel %vm248, %v2555, 0
  %v2575 = vsel %vm248, %v2556, 0
  %v2578 = vsel %vm248, %v2557, 0
  %v2581 = vsel %vm248, %v2558, 0
  %v2584 = vsel %vm248, %v2559, 0
  %v2587 = vsel %vm248, %v2560, 0
  %v2590 = vsel %vm248, %v2561, 0
  %v2593 = vsel %vm248, %v2562, 0
  %v2596 = vsel %vm248, %v2563, 0
  %v2599 = vsel %vm248, %v2564, 0
  %v2602 = vsel %vm248, %v2565, 0
  %v2605 = vsel %vm248, %v2566, 0
  %v2608 = vsel %vm248, %v2567, 0
  %v2611 = vsel %vm248, %v2568, 0
  %v2614 = vsel %vm248, %v2569, 0
  %v2617 = vsel %vm248, %v2570, 0
  %v2620 = vsel %vm248, %v2294, 0
  %v2623 = vsel %vm248, %v2299, 0
  %v2626 = vsel %vm248, %v2304, 0
  %v2629 = vsel %vm248, %v2309, 0
  %2631 = vmatprep.subr.mxu0 0.0
  %2632 = vmatpush1.xpose.msra.mxu0 0.0
  %2633 = vmatprep.subr.mxu0 0.0
  %2634 = vmatpush1.xpose.msra.mxu0 0.0
  %2635 = vmatprep.subr.mxu0 0.0
  %2636 = vmatpush1.xpose.msra.mxu0 0.0
  %2637 = vmatprep.subr.mxu0 0.0
  %2638 = vmatpush1.xpose.msra.mxu0 0.0
  %2639 = vmatprep.subr.mxu0 0.0
  %2640 = vmatpush1.xpose.msra.mxu0 0.0
  %2641 = vmatprep.subr.mxu0 0.0
  %2642 = vmatpush1.xpose.msra.mxu0 0.0
  %2643 = vmatprep.subr.mxu0 0.0
  %2644 = vmatpush1.xpose.msra.mxu0 0.0
  %2645 = vmatprep.subr.mxu0 0.0
  %2646 = vmatpush1.xpose.msra.mxu0 0.0
  %2647 = vmatprep.subr.mxu0 0.0
  %2648 = vmatpush1.xpose.msra.mxu0 0.0
  %2649 = vmatprep.subr.mxu0 0.0
  %2650 = vmatpush1.xpose.msra.mxu0 0.0
  %2651 = vmatprep.subr.mxu0 0.0
  %2652 = vmatpush1.xpose.msra.mxu0 0.0
  %2653 = vmatprep.subr.mxu0 0.0
  %2654 = vmatpush1.xpose.msra.mxu0 0.0
  %2655 = vmatprep.subr.mxu0 0.0
  %2656 = vmatpush1.xpose.msra.mxu0 %v2629
  %2657 = vmatprep.subr.mxu0 0.0
  %2658 = vmatpush1.xpose.msra.mxu0 %v2626
  %2659 = vmatprep.subr.mxu0 0.0
  %2660 = vmatpush1.xpose.msra.mxu0 %v2623
  %2661 = vmatprep.subr.mxu0 0.0
  %2662 = vmatpush1.xpose.msra.mxu0 %v2620
  %2663 = vmatprep.subr.mxu0 0.0
  %2664 = vmatpush2.xpose.msra.mxu0 0.0
  %2665 = vmatprep.subr.mxu0 0.0
  %2666 = vmatpush2.xpose.msra.mxu0 0.0
  %2667 = vmatprep.subr.mxu0 0.0
  %2668 = vmatpush2.xpose.msra.mxu0 0.0
  %2669 = vmatprep.subr.mxu0 0.0
  %2670 = vmatpush2.xpose.msra.mxu0 0.0
  %2671 = vmatprep.subr.mxu0 0.0
  %2672 = vmatpush2.xpose.msra.mxu0 0.0
  %2673 = vmatprep.subr.mxu0 0.0
  %2674 = vmatpush2.xpose.msra.mxu0 0.0
  %2675 = vmatprep.subr.mxu0 0.0
  %2676 = vmatpush2.xpose.msra.mxu0 0.0
  %2677 = vmatprep.subr.mxu0 0.0
  %2678 = vmatpush2.xpose.msra.mxu0 0.0
  %2679 = vmatprep.subr.mxu0 0.0
  %2680 = vmatpush2.xpose.msra.mxu0 0.0
  %2681 = vmatprep.subr.mxu0 0.0
  %2682 = vmatpush2.xpose.msra.mxu0 0.0
  %2683 = vmatprep.subr.mxu0 0.0
  %2684 = vmatpush2.xpose.msra.mxu0 0.0
  %2685 = vmatprep.subr.mxu0 0.0
  %2686 = vmatpush2.xpose.msra.mxu0 0.0
  %2687 = vmatprep.subr.mxu0 0.0
  %2688 = vmatpush2.xpose.msra.mxu0 0.0
  %2689 = vmatprep.subr.mxu0 0.0
  %2690 = vmatpush2.xpose.msra.mxu0 0.0
  %2691 = vmatprep.subr.mxu0 0.0
  %2692 = vmatpush2.xpose.msra.mxu0 0.0
  %2693 = vmatprep.subr.mxu0 0.0
  %2694 = vmatpush2.xpose.msra.mxu0 0.0
  %2695 = vmatprep.mubr.f32.mxu0 0.0
  %2696 = vmatmul.mubr.f32.gmra.mxu0 %v2572
  %v2697 = vpop.f32.mrf.mxu0
  %v2698 = vadd.f32 %v230, %v2697
  %v2699 = vpop.f32.mrf.mxu0
  %2700 = vmatprep.mubr.f32.mxu0 0.0
  %2701 = vmatmul.mubr.f32.gmra.mxu0 %v2575
  %v2702 = vpop.f32.mrf.mxu0
  %v2703 = vadd.f32 %v231, %v2702
  %v2704 = vpop.f32.mrf.mxu0
  %2705 = vmatprep.mubr.f32.mxu0 0.0
  %2706 = vmatmul.mubr.f32.gmra.mxu0 %v2578
  %v2707 = vpop.f32.mrf.mxu0
  %v2708 = vadd.f32 %v232, %v2707
  %v2709 = vpop.f32.mrf.mxu0
  %2710 = vmatprep.mubr.f32.mxu0 0.0
  %2711 = vmatmul.mubr.f32.gmra.mxu0 %v2581
  %v2712 = vpop.f32.mrf.mxu0
  %v2713 = vadd.f32 %v233, %v2712
  %v2714 = vpop.f32.mrf.mxu0
  %2715 = vmatprep.mubr.f32.mxu0 0.0
  %2716 = vmatmul.mubr.f32.gmra.mxu0 %v2584
  %v2717 = vpop.f32.mrf.mxu0
  %v2718 = vadd.f32 %v234, %v2717
  %v2719 = vpop.f32.mrf.mxu0
  %2720 = vmatprep.mubr.f32.mxu0 0.0
  %2721 = vmatmul.mubr.f32.gmra.mxu0 %v2587
  %v2722 = vpop.f32.mrf.mxu0
  %v2723 = vadd.f32 %v235, %v2722
  %v2724 = vpop.f32.mrf.mxu0
  %2725 = vmatprep.mubr.f32.mxu0 0.0
  %2726 = vmatmul.mubr.f32.gmra.mxu0 %v2590
  %v2727 = vpop.f32.mrf.mxu0
  %v2728 = vadd.f32 %v236, %v2727
  %v2729 = vpop.f32.mrf.mxu0
  %2730 = vmatprep.mubr.f32.mxu0 0.0
  %2731 = vmatmul.mubr.f32.gmra.mxu0 %v2593
  %v2732 = vpop.f32.mrf.mxu0
  %v2733 = vadd.f32 %v237, %v2732
  %v2734 = vpop.f32.mrf.mxu0
  %2735 = vmatprep.mubr.f32.mxu0 0.0
  %2736 = vmatmul.mubr.f32.gmra.mxu0 %v2596
  %v2737 = vpop.f32.mrf.mxu0
  %v2738 = vadd.f32 %v238, %v2737
  %v2739 = vpop.f32.mrf.mxu0
  %2740 = vmatprep.mubr.f32.mxu0 0.0
  %2741 = vmatmul.mubr.f32.gmra.mxu0 %v2599
  %v2742 = vpop.f32.mrf.mxu0
  %v2743 = vadd.f32 %v239, %v2742
  %v2744 = vpop.f32.mrf.mxu0
  %2745 = vmatprep.mubr.f32.mxu0 0.0
  %2746 = vmatmul.mubr.f32.gmra.mxu0 %v2602
  %v2747 = vpop.f32.mrf.mxu0
  %v2748 = vadd.f32 %v240, %v2747
  %v2749 = vpop.f32.mrf.mxu0
  %2750 = vmatprep.mubr.f32.mxu0 0.0
  %2751 = vmatmul.mubr.f32.gmra.mxu0 %v2605
  %v2752 = vpop.f32.mrf.mxu0
  %v2753 = vadd.f32 %v241, %v2752
  %v2754 = vpop.f32.mrf.mxu0
  %2755 = vmatprep.mubr.f32.mxu0 0.0
  %2756 = vmatmul.mubr.f32.gmra.mxu0 %v2608
  %v2757 = vpop.f32.mrf.mxu0
  %v2758 = vadd.f32 %v242, %v2757
  %v2759 = vpop.f32.mrf.mxu0
  %2760 = vmatprep.mubr.f32.mxu0 0.0
  %2761 = vmatmul.mubr.f32.gmra.mxu0 %v2611
  %v2762 = vpop.f32.mrf.mxu0
  %v2763 = vadd.f32 %v243, %v2762
  %v2764 = vpop.f32.mrf.mxu0
  %2765 = vmatprep.mubr.f32.mxu0 0.0
  %2766 = vmatmul.mubr.f32.gmra.mxu0 %v2614
  %v2767 = vpop.f32.mrf.mxu0
  %v2768 = vadd.f32 %v244, %v2767
  %v2769 = vpop.f32.mrf.mxu0
  %2770 = vmatprep.mubr.f32.mxu0 0.0
  %2771 = vmatmul.mubr.f32.gmra.mxu0 %v2617
  %v2772 = vpop.f32.mrf.mxu0
  %v2773 = vadd.f32 %v245, %v2772
  %v2774 = vpop.f32.mrf.mxu0
  %2775 = vdwg.mxu0
  %v2776 = vsel %vm248, %v2698, -inf
  %2777 = vmax.xlane.f32.xlu0 %v2776
  %v2778 = vpop.xlane.xlu0 %2777
  %v2779 = vsel %vm248, %v2703, -inf
  %2780 = vmax.xlane.f32.xlu0 %v2779
  %v2781 = vpop.xlane.xlu0 %2780
  %v2782 = vsel %vm248, %v2708, -inf
  %2783 = vmax.xlane.f32.xlu0 %v2782
  %v2784 = vpop.xlane.xlu0 %2783
  %v2785 = vsel %vm248, %v2713, -inf
  %2786 = vmax.xlane.f32.xlu0 %v2785
  %v2787 = vpop.xlane.xlu0 %2786
  %v2788 = vsel %vm248, %v2718, -inf
  %2789 = vmax.xlane.f32.xlu0 %v2788
  %v2790 = vpop.xlane.xlu0 %2789
  %v2791 = vsel %vm248, %v2723, -inf
  %2792 = vmax.xlane.f32.xlu0 %v2791
  %v2793 = vpop.xlane.xlu0 %2792
  %v2794 = vsel %vm248, %v2728, -inf
  %2795 = vmax.xlane.f32.xlu0 %v2794
  %v2796 = vpop.xlane.xlu0 %2795
  %v2797 = vsel %vm248, %v2733, -inf
  %2798 = vmax.xlane.f32.xlu0 %v2797
  %v2799 = vpop.xlane.xlu0 %2798
  %v2800 = vsel %vm248, %v2738, -inf
  %2801 = vmax.xlane.f32.xlu0 %v2800
  %v2802 = vpop.xlane.xlu0 %2801
  %v2803 = vsel %vm248, %v2743, -inf
  %2804 = vmax.xlane.f32.xlu0 %v2803
  %v2805 = vpop.xlane.xlu0 %2804
  %v2806 = vsel %vm248, %v2748, -inf
  %2807 = vmax.xlane.f32.xlu0 %v2806
  %v2808 = vpop.xlane.xlu0 %2807
  %v2809 = vsel %vm248, %v2753, -inf
  %2810 = vmax.xlane.f32.xlu0 %v2809
  %v2811 = vpop.xlane.xlu0 %2810
  %v2812 = vsel %vm248, %v2758, -inf
  %2813 = vmax.xlane.f32.xlu0 %v2812
  %v2814 = vpop.xlane.xlu0 %2813
  %v2815 = vsel %vm248, %v2763, -inf
  %2816 = vmax.xlane.f32.xlu0 %v2815
  %v2817 = vpop.xlane.xlu0 %2816
  %v2818 = vsel %vm248, %v2768, -inf
  %2819 = vmax.xlane.f32.xlu0 %v2818
  %v2820 = vpop.xlane.xlu0 %2819
  %v2821 = vsel %vm248, %v2773, -inf
  %2822 = vmax.xlane.f32.xlu0 %v2821
  %v2823 = vpop.xlane.xlu0 %2822
  %v2824 = vsub.f32 %v2698, %v2778
  %v2825 = vsub.f32 %v2703, %v2781
  %v2826 = vsub.f32 %v2708, %v2784
  %v2827 = vsub.f32 %v2713, %v2787
  %v2828 = vsub.f32 %v2718, %v2790
  %v2829 = vsub.f32 %v2723, %v2793
  %v2830 = vsub.f32 %v2728, %v2796
  %v2831 = vsub.f32 %v2733, %v2799
  %v2832 = vsub.f32 %v2738, %v2802
  %v2833 = vsub.f32 %v2743, %v2805
  %v2834 = vsub.f32 %v2748, %v2808
  %v2835 = vsub.f32 %v2753, %v2811
  %v2836 = vsub.f32 %v2758, %v2814
  %v2837 = vsub.f32 %v2763, %v2817
  %v2838 = vsub.f32 %v2768, %v2820
  %v2839 = vsub.f32 %v2773, %v2823
  %v2840 = vmul.f32 %v2824, 1.442695
  %v2841 = vpow.pop %v2840
  %v2842 = vmul.f32 %v2825, 1.442695
  %v2843 = vpow.pop %v2842
  %v2844 = vmul.f32 %v2826, 1.442695
  %v2845 = vpow.pop %v2844
  %v2846 = vmul.f32 %v2827, 1.442695
  %v2847 = vpow.pop %v2846
  %v2848 = vmul.f32 %v2828, 1.442695
  %v2849 = vpow.pop %v2848
  %v2850 = vmul.f32 %v2829, 1.442695
  %v2851 = vpow.pop %v2850
  %v2852 = vmul.f32 %v2830, 1.442695
  %v2853 = vpow.pop %v2852
  %v2854 = vmul.f32 %v2831, 1.442695
  %v2855 = vpow.pop %v2854
  %v2856 = vmul.f32 %v2832, 1.442695
  %v2857 = vpow.pop %v2856
  %v2858 = vmul.f32 %v2833, 1.442695
  %v2859 = vpow.pop %v2858
  %v2860 = vmul.f32 %v2834, 1.442695
  %v2861 = vpow.pop %v2860
  %v2862 = vmul.f32 %v2835, 1.442695
  %v2863 = vpow.pop %v2862
  %v2864 = vmul.f32 %v2836, 1.442695
  %v2865 = vpow.pop %v2864
  %v2866 = vmul.f32 %v2837, 1.442695
  %v2867 = vpow.pop %v2866
  %v2868 = vmul.f32 %v2838, 1.442695
  %v2869 = vpow.pop %v2868
  %v2870 = vmul.f32 %v2839, 1.442695
  %v2871 = vpow.pop %v2870
  %v2872 = vsel %vm248, %v2841, 0.0
  %2873 = vadd.xlane.f32.xlu0 %v2872
  %v2874 = vpop.xlane.xlu0 %2873
  %v2875 = vsel %vm248, %v2843, 0.0
  %2876 = vadd.xlane.f32.xlu0 %v2875
  %v2877 = vpop.xlane.xlu0 %2876
  %v2878 = vsel %vm248, %v2845, 0.0
  %2879 = vadd.xlane.f32.xlu0 %v2878
  %v2880 = vpop.xlane.xlu0 %2879
  %v2881 = vsel %vm248, %v2847, 0.0
  %2882 = vadd.xlane.f32.xlu0 %v2881
  %v2883 = vpop.xlane.xlu0 %2882
  %v2884 = vsel %vm248, %v2849, 0.0
  %2885 = vadd.xlane.f32.xlu0 %v2884
  %v2886 = vpop.xlane.xlu0 %2885
  %v2887 = vsel %vm248, %v2851, 0.0
  %2888 = vadd.xlane.f32.xlu0 %v2887
  %v2889 = vpop.xlane.xlu0 %2888
  %v2890 = vsel %vm248, %v2853, 0.0
  %2891 = vadd.xlane.f32.xlu0 %v2890
  %v2892 = vpop.xlane.xlu0 %2891
  %v2893 = vsel %vm248, %v2855, 0.0
  %2894 = vadd.xlane.f32.xlu0 %v2893
  %v2895 = vpop.xlane.xlu0 %2894
  %v2896 = vsel %vm248, %v2857, 0.0
  %2897 = vadd.xlane.f32.xlu0 %v2896
  %v2898 = vpop.xlane.xlu0 %2897
  %v2899 = vsel %vm248, %v2859, 0.0
  %2900 = vadd.xlane.f32.xlu0 %v2899
  %v2901 = vpop.xlane.xlu0 %2900
  %v2902 = vsel %vm248, %v2861, 0.0
  %2903 = vadd.xlane.f32.xlu0 %v2902
  %v2904 = vpop.xlane.xlu0 %2903
  %v2905 = vsel %vm248, %v2863, 0.0
  %2906 = vadd.xlane.f32.xlu0 %v2905
  %v2907 = vpop.xlane.xlu0 %2906
  %v2908 = vsel %vm248, %v2865, 0.0
  %2909 = vadd.xlane.f32.xlu0 %v2908
  %v2910 = vpop.xlane.xlu0 %2909
  %v2911 = vsel %vm248, %v2867, 0.0
  %2912 = vadd.xlane.f32.xlu0 %v2911
  %v2913 = vpop.xlane.xlu0 %2912
  %v2914 = vsel %vm248, %v2869, 0.0
  %2915 = vadd.xlane.f32.xlu0 %v2914
  %v2916 = vpop.xlane.xlu0 %2915
  %v2917 = vsel %vm248, %v2871, 0.0
  %2918 = vadd.xlane.f32.xlu0 %v2917
  %v2919 = vpop.xlane.xlu0 %2918
  %v2920 = vrcp.pop %v2874
  %v2921 = vmul.f32 %v2841, %v2920
  %v2922 = vrcp.pop %v2877
  %v2923 = vmul.f32 %v2843, %v2922
  %v2924 = vrcp.pop %v2880
  %v2925 = vmul.f32 %v2845, %v2924
  %v2926 = vrcp.pop %v2883
  %v2927 = vmul.f32 %v2847, %v2926
  %v2928 = vrcp.pop %v2886
  %v2929 = vmul.f32 %v2849, %v2928
  %v2930 = vrcp.pop %v2889
  %v2931 = vmul.f32 %v2851, %v2930
  %v2932 = vrcp.pop %v2892
  %v2933 = vmul.f32 %v2853, %v2932
  %v2934 = vrcp.pop %v2895
  %v2935 = vmul.f32 %v2855, %v2934
  %v2936 = vrcp.pop %v2898
  %v2937 = vmul.f32 %v2857, %v2936
  %v2938 = vrcp.pop %v2901
  %v2939 = vmul.f32 %v2859, %v2938
  %v2940 = vrcp.pop %v2904
  %v2941 = vmul.f32 %v2861, %v2940
  %v2942 = vrcp.pop %v2907
  %v2943 = vmul.f32 %v2863, %v2942
  %v2944 = vrcp.pop %v2910
  %v2945 = vmul.f32 %v2865, %v2944
  %v2946 = vrcp.pop %v2913
  %v2947 = vmul.f32 %v2867, %v2946
  %v2948 = vrcp.pop %v2916
  %v2949 = vmul.f32 %v2869, %v2948
  %v2950 = vrcp.pop %v2919
  %v2951 = vmul.f32 %v2871, %v2950
  %v2953 = vsel %vm248, %v2921, 0
  %v2956 = vsel %vm248, %v2923, 0
  %v2959 = vsel %vm248, %v2925, 0
  %v2962 = vsel %vm248, %v2927, 0
  %v2965 = vsel %vm248, %v2929, 0
  %v2968 = vsel %vm248, %v2931, 0
  %v2971 = vsel %vm248, %v2933, 0
  %v2974 = vsel %vm248, %v2935, 0
  %v2977 = vsel %vm248, %v2937, 0
  %v2980 = vsel %vm248, %v2939, 0
  %v2983 = vsel %vm248, %v2941, 0
  %v2986 = vsel %vm248, %v2943, 0
  %v2989 = vsel %vm248, %v2945, 0
  %v2992 = vsel %vm248, %v2947, 0
  %v2995 = vsel %vm248, %v2949, 0
  %v2998 = vsel %vm248, %v2951, 0
  %3000 = vmatprep.subr.mxu0 0.0
  %3001 = vmatpush1.msra.mxu0 0.0
  %3002 = vmatprep.subr.mxu0 0.0
  %3003 = vmatpush1.msra.mxu0 0.0
  %3004 = vmatprep.subr.mxu0 0.0
  %3005 = vmatpush1.msra.mxu0 0.0
  %3006 = vmatprep.subr.mxu0 0.0
  %3007 = vmatpush1.msra.mxu0 0.0
  %3008 = vmatprep.subr.mxu0 0.0
  %3009 = vmatpush1.msra.mxu0 0.0
  %3010 = vmatprep.subr.mxu0 0.0
  %3011 = vmatpush1.msra.mxu0 0.0
  %3012 = vmatprep.subr.mxu0 0.0
  %3013 = vmatpush1.msra.mxu0 0.0
  %3014 = vmatprep.subr.mxu0 0.0
  %3015 = vmatpush1.msra.mxu0 0.0
  %3016 = vmatprep.subr.mxu0 0.0
  %3017 = vmatpush1.msra.mxu0 0.0
  %3018 = vmatprep.subr.mxu0 0.0
  %3019 = vmatpush1.msra.mxu0 0.0
  %3020 = vmatprep.subr.mxu0 0.0
  %3021 = vmatpush1.msra.mxu0 0.0
  %3022 = vmatprep.subr.mxu0 0.0
  %3023 = vmatpush1.msra.mxu0 0.0
  %3024 = vmatprep.subr.mxu0 0.0
  %3025 = vmatpush1.msra.mxu0 %v2407
  %3026 = vmatprep.subr.mxu0 0.0
  %3027 = vmatpush1.msra.mxu0 %v2402
  %3028 = vmatprep.subr.mxu0 0.0
  %3029 = vmatpush1.msra.mxu0 %v2397
  %3030 = vmatprep.subr.mxu0 0.0
  %3031 = vmatpush1.msra.mxu0 %v2392
  %3032 = vmatprep.subr.mxu0 0.0
  %3033 = vmatpush2.msra.mxu0 0.0
  %3034 = vmatprep.subr.mxu0 0.0
  %3035 = vmatpush2.msra.mxu0 0.0
  %3036 = vmatprep.subr.mxu0 0.0
  %3037 = vmatpush2.msra.mxu0 0.0
  %3038 = vmatprep.subr.mxu0 0.0
  %3039 = vmatpush2.msra.mxu0 0.0
  %3040 = vmatprep.subr.mxu0 0.0
  %3041 = vmatpush2.msra.mxu0 0.0
  %3042 = vmatprep.subr.mxu0 0.0
  %3043 = vmatpush2.msra.mxu0 0.0
  %3044 = vmatprep.subr.mxu0 0.0
  %3045 = vmatpush2.msra.mxu0 0.0
  %3046 = vmatprep.subr.mxu0 0.0
  %3047 = vmatpush2.msra.mxu0 0.0
  %3048 = vmatprep.subr.mxu0 0.0
  %3049 = vmatpush2.msra.mxu0 0.0
  %3050 = vmatprep.subr.mxu0 0.0
  %3051 = vmatpush2.msra.mxu0 0.0
  %3052 = vmatprep.subr.mxu0 0.0
  %3053 = vmatpush2.msra.mxu0 0.0
  %3054 = vmatprep.subr.mxu0 0.0
  %3055 = vmatpush2.msra.mxu0 0.0
  %3056 = vmatprep.subr.mxu0 0.0
  %3057 = vmatpush2.msra.mxu0 0.0
  %3058 = vmatprep.subr.mxu0 0.0
  %3059 = vmatpush2.msra.mxu0 0.0
  %3060 = vmatprep.subr.mxu0 0.0
  %3061 = vmatpush2.msra.mxu0 0.0
  %3062 = vmatprep.subr.mxu0 0.0
  %3063 = vmatpush2.msra.mxu0 0.0
  %3064 = vmatprep.mubr.f32.mxu0 0.0
  %3065 = vmatmul.mubr.f32.gmra.mxu0 %v2953
  %v3066 = vpop.f32.mrf.mxu0
  %v3067 = vadd.f32 0.0, %v3066
  %v3068 = vpop.f32.mrf.mxu0
  %3069 = vmatprep.mubr.f32.mxu0 0.0
  %3070 = vmatmul.mubr.f32.gmra.mxu0 %v2956
  %v3071 = vpop.f32.mrf.mxu0
  %v3072 = vadd.f32 0.0, %v3071
  %v3073 = vpop.f32.mrf.mxu0
  %3074 = vmatprep.mubr.f32.mxu0 0.0
  %3075 = vmatmul.mubr.f32.gmra.mxu0 %v2959
  %v3076 = vpop.f32.mrf.mxu0
  %v3077 = vadd.f32 0.0, %v3076
  %v3078 = vpop.f32.mrf.mxu0
  %3079 = vmatprep.mubr.f32.mxu0 0.0
  %3080 = vmatmul.mubr.f32.gmra.mxu0 %v2962
  %v3081 = vpop.f32.mrf.mxu0
  %v3082 = vadd.f32 0.0, %v3081
  %v3083 = vpop.f32.mrf.mxu0
  %3084 = vmatprep.mubr.f32.mxu0 0.0
  %3085 = vmatmul.mubr.f32.gmra.mxu0 %v2965
  %v3086 = vpop.f32.mrf.mxu0
  %v3087 = vadd.f32 0.0, %v3086
  %v3088 = vpop.f32.mrf.mxu0
  %3089 = vmatprep.mubr.f32.mxu0 0.0
  %3090 = vmatmul.mubr.f32.gmra.mxu0 %v2968
  %v3091 = vpop.f32.mrf.mxu0
  %v3092 = vadd.f32 0.0, %v3091
  %v3093 = vpop.f32.mrf.mxu0
  %3094 = vmatprep.mubr.f32.mxu0 0.0
  %3095 = vmatmul.mubr.f32.gmra.mxu0 %v2971
  %v3096 = vpop.f32.mrf.mxu0
  %v3097 = vadd.f32 0.0, %v3096
  %v3098 = vpop.f32.mrf.mxu0
  %3099 = vmatprep.mubr.f32.mxu0 0.0
  %3100 = vmatmul.mubr.f32.gmra.mxu0 %v2974
  %v3101 = vpop.f32.mrf.mxu0
  %v3102 = vadd.f32 0.0, %v3101
  %v3103 = vpop.f32.mrf.mxu0
  %3104 = vmatprep.mubr.f32.mxu0 0.0
  %3105 = vmatmul.mubr.f32.gmra.mxu0 %v2977
  %v3106 = vpop.f32.mrf.mxu0
  %v3107 = vadd.f32 0.0, %v3106
  %v3108 = vpop.f32.mrf.mxu0
  %3109 = vmatprep.mubr.f32.mxu0 0.0
  %3110 = vmatmul.mubr.f32.gmra.mxu0 %v2980
  %v3111 = vpop.f32.mrf.mxu0
  %v3112 = vadd.f32 0.0, %v3111
  %v3113 = vpop.f32.mrf.mxu0
  %3114 = vmatprep.mubr.f32.mxu0 0.0
  %3115 = vmatmul.mubr.f32.gmra.mxu0 %v2983
  %v3116 = vpop.f32.mrf.mxu0
  %v3117 = vadd.f32 0.0, %v3116
  %v3118 = vpop.f32.mrf.mxu0
  %3119 = vmatprep.mubr.f32.mxu0 0.0
  %3120 = vmatmul.mubr.f32.gmra.mxu0 %v2986
  %v3121 = vpop.f32.mrf.mxu0
  %v3122 = vadd.f32 0.0, %v3121
  %v3123 = vpop.f32.mrf.mxu0
  %3124 = vmatprep.mubr.f32.mxu0 0.0
  %3125 = vmatmul.mubr.f32.gmra.mxu0 %v2989
  %v3126 = vpop.f32.mrf.mxu0
  %v3127 = vadd.f32 0.0, %v3126
  %v3128 = vpop.f32.mrf.mxu0
  %3129 = vmatprep.mubr.f32.mxu0 0.0
  %3130 = vmatmul.mubr.f32.gmra.mxu0 %v2992
  %v3131 = vpop.f32.mrf.mxu0
  %v3132 = vadd.f32 0.0, %v3131
  %v3133 = vpop.f32.mrf.mxu0
  %3134 = vmatprep.mubr.f32.mxu0 0.0
  %3135 = vmatmul.mubr.f32.gmra.mxu0 %v2995
  %v3136 = vpop.f32.mrf.mxu0
  %v3137 = vadd.f32 0.0, %v3136
  %v3138 = vpop.f32.mrf.mxu0
  %3139 = vmatprep.mubr.f32.mxu0 0.0
  %3140 = vmatmul.mubr.f32.gmra.mxu0 %v2998
  %v3141 = vpop.f32.mrf.mxu0
  %v3142 = vadd.f32 0.0, %v3141
  %v3143 = vpop.f32.mrf.mxu0
  %3144 = vdwg.mxu0
  %v3145 = vmul.f32 %v3067, %v214
  %v3146 = vmul.f32 %v3072, %v215
  %v3147 = vmul.f32 %v3077, %v216
  %v3148 = vmul.f32 %v3082, %v217
  %v3149 = vmul.f32 %v3087, %v218
  %v3150 = vmul.f32 %v3092, %v219
  %v3151 = vmul.f32 %v3097, %v220
  %v3152 = vmul.f32 %v3102, %v221
  %v3153 = vmul.f32 %v3107, %v222
  %v3154 = vmul.f32 %v3112, %v223
  %v3155 = vmul.f32 %v3117, %v224
  %v3156 = vmul.f32 %v3122, %v225
  %v3157 = vmul.f32 %v3127, %v226
  %v3158 = vmul.f32 %v3132, %v227
  %v3159 = vmul.f32 %v3137, %v228
  %v3160 = vmul.f32 %v3142, %v229
  %3161 = vmatprep.subr.mxu0 0.0
  %3162 = vmatpush1.msra.mxu0 %v3160
  %3163 = vmatprep.subr.mxu0 0.0
  %3164 = vmatpush1.msra.mxu0 %v3159
  %3165 = vmatprep.subr.mxu0 0.0
  %3166 = vmatpush1.msra.mxu0 %v3158
  %3167 = vmatprep.subr.mxu0 0.0
  %3168 = vmatpush1.msra.mxu0 %v3157
  %3169 = vmatprep.subr.mxu0 0.0
  %3170 = vmatpush1.msra.mxu0 %v3156
  %3171 = vmatprep.subr.mxu0 0.0
  %3172 = vmatpush1.msra.mxu0 %v3155
  %3173 = vmatprep.subr.mxu0 0.0
  %3174 = vmatpush1.msra.mxu0 %v3154
  %3175 = vmatprep.subr.mxu0 0.0
  %3176 = vmatpush1.msra.mxu0 %v3153
  %3177 = vmatprep.subr.mxu0 0.0
  %3178 = vmatpush1.msra.mxu0 %v3152
  %3179 = vmatprep.subr.mxu0 0.0
  %3180 = vmatpush1.msra.mxu0 %v3151
  %3181 = vmatprep.subr.mxu0 0.0
  %3182 = vmatpush1.msra.mxu0 %v3150
  %3183 = vmatprep.subr.mxu0 0.0
  %3184 = vmatpush1.msra.mxu0 %v3149
  %3185 = vmatprep.subr.mxu0 0.0
  %3186 = vmatpush1.msra.mxu0 %v3148
  %3187 = vmatprep.subr.mxu0 0.0
  %3188 = vmatpush1.msra.mxu0 %v3147
  %3189 = vmatprep.subr.mxu0 0.0
  %3190 = vmatpush1.msra.mxu0 %v3146
  %3191 = vmatprep.subr.mxu0 0.0
  %3192 = vmatpush1.msra.mxu0 %v3145
  %3193 = vmatprep.subr.mxu0 0.0
  %3194 = vmatpush2.msra.mxu0 0.0
  %3195 = vmatprep.subr.mxu0 0.0
  %3196 = vmatpush2.msra.mxu0 0.0
  %3197 = vmatprep.subr.mxu0 0.0
  %3198 = vmatpush2.msra.mxu0 0.0
  %3199 = vmatprep.subr.mxu0 0.0
  %3200 = vmatpush2.msra.mxu0 0.0
  %3201 = vmatprep.subr.mxu0 0.0
  %3202 = vmatpush2.msra.mxu0 0.0
  %3203 = vmatprep.subr.mxu0 0.0
  %3204 = vmatpush2.msra.mxu0 0.0
  %3205 = vmatprep.subr.mxu0 0.0
  %3206 = vmatpush2.msra.mxu0 0.0
  %3207 = vmatprep.subr.mxu0 0.0
  %3208 = vmatpush2.msra.mxu0 0.0
  %3209 = vmatprep.subr.mxu0 0.0
  %3210 = vmatpush2.msra.mxu0 0.0
  %3211 = vmatprep.subr.mxu0 0.0
  %3212 = vmatpush2.msra.mxu0 0.0
  %3213 = vmatprep.subr.mxu0 0.0
  %3214 = vmatpush2.msra.mxu0 0.0
  %3215 = vmatprep.subr.mxu0 0.0
  %3216 = vmatpush2.msra.mxu0 0.0
  %3217 = vmatprep.subr.mxu0 0.0
  %3218 = vmatpush2.msra.mxu0 0.0
  %3219 = vmatprep.subr.mxu0 0.0
  %3220 = vmatpush2.msra.mxu0 0.0
  %3221 = vmatprep.subr.mxu0 0.0
  %3222 = vmatpush2.msra.mxu0 0.0
  %3223 = vmatprep.subr.mxu0 0.0
  %3224 = vmatpush2.msra.mxu0 0.0
  %3225 = vmatprep.mubr.f32.mxu0 0.0
  %3226 = vmatmul.mubr.f32.gmra.mxu0 %v210
  %v3227 = vpop.f32.mrf.mxu0
  %v3228 = vadd.f32 0.0, %v3227
  %v3229 = vpop.f32.mrf.mxu0
  %3230 = vmatprep.mubr.f32.mxu0 0.0
  %3231 = vmatmul.mubr.f32.gmra.mxu0 %v211
  %v3232 = vpop.f32.mrf.mxu0
  %v3233 = vadd.f32 0.0, %v3232
  %v3234 = vpop.f32.mrf.mxu0
  %3235 = vmatprep.mubr.f32.mxu0 0.0
  %3236 = vmatmul.mubr.f32.gmra.mxu0 %v212
  %v3237 = vpop.f32.mrf.mxu0
  %v3238 = vadd.f32 0.0, %v3237
  %v3239 = vpop.f32.mrf.mxu0
  %3240 = vmatprep.mubr.f32.mxu0 0.0
  %3241 = vmatmul.mubr.f32.gmra.mxu0 %v213
  %v3242 = vpop.f32.mrf.mxu0
  %v3243 = vadd.f32 0.0, %v3242
  %v3244 = vpop.f32.mrf.mxu0
  %3245 = vdwg.mxu0
  %s3246 = scalar_lea.vmem %s20, 32
  %v3247 = vld [vmem:[%s3246] sm:$0xff]
  %v3248 = vld [vmem:[%s3246 + $0x8] sm:$0xff]
  %v3249 = vld [vmem:[%s3246 + $0x10] sm:$0xff]
  %v3250 = vld [vmem:[%s3246 + $0x18] sm:$0xff]
  %v3252 = vsel %vm248, %v3228, 0
  %v3255 = vsel %vm248, %v3233, 0
  %v3258 = vsel %vm248, %v3238, 0
  %v3261 = vsel %vm248, %v3243, 0
  %3263 = vmatprep.subr.mxu0 0.0
  %3264 = vmatpush1.msra.mxu0 0.0
  %3265 = vmatprep.subr.mxu0 0.0
  %3266 = vmatpush1.msra.mxu0 0.0
  %3267 = vmatprep.subr.mxu0 0.0
  %3268 = vmatpush1.msra.mxu0 0.0
  %3269 = vmatprep.subr.mxu0 0.0
  %3270 = vmatpush1.msra.mxu0 0.0
  %3271 = vmatprep.subr.mxu0 0.0
  %3272 = vmatpush1.msra.mxu0 0.0
  %3273 = vmatprep.subr.mxu0 0.0
  %3274 = vmatpush1.msra.mxu0 0.0
  %3275 = vmatprep.subr.mxu0 0.0
  %3276 = vmatpush1.msra.mxu0 0.0
  %3277 = vmatprep.subr.mxu0 0.0
  %3278 = vmatpush1.msra.mxu0 0.0
  %3279 = vmatprep.subr.mxu0 0.0
  %3280 = vmatpush1.msra.mxu0 0.0
  %3281 = vmatprep.subr.mxu0 0.0
  %3282 = vmatpush1.msra.mxu0 0.0
  %3283 = vmatprep.subr.mxu0 0.0
  %3284 = vmatpush1.msra.mxu0 0.0
  %3285 = vmatprep.subr.mxu0 0.0
  %3286 = vmatpush1.msra.mxu0 0.0
  %3287 = vmatprep.subr.mxu0 0.0
  %3288 = vmatpush1.msra.mxu0 %v3250
  %3289 = vmatprep.subr.mxu0 0.0
  %3290 = vmatpush1.msra.mxu0 %v3249
  %3291 = vmatprep.subr.mxu0 0.0
  %3292 = vmatpush1.msra.mxu0 %v3248
  %3293 = vmatprep.subr.mxu0 0.0
  %3294 = vmatpush1.msra.mxu0 %v3247
  %3295 = vmatprep.subr.mxu0 0.0
  %3296 = vmatpush2.msra.mxu0 0.0
  %3297 = vmatprep.subr.mxu0 0.0
  %3298 = vmatpush2.msra.mxu0 0.0
  %3299 = vmatprep.subr.mxu0 0.0
  %3300 = vmatpush2.msra.mxu0 0.0
  %3301 = vmatprep.subr.mxu0 0.0
  %3302 = vmatpush2.msra.mxu0 0.0
  %3303 = vmatprep.subr.mxu0 0.0
  %3304 = vmatpush2.msra.mxu0 0.0
  %3305 = vmatprep.subr.mxu0 0.0
  %3306 = vmatpush2.msra.mxu0 0.0
  %3307 = vmatprep.subr.mxu0 0.0
  %3308 = vmatpush2.msra.mxu0 0.0
  %3309 = vmatprep.subr.mxu0 0.0
  %3310 = vmatpush2.msra.mxu0 0.0
  %3311 = vmatprep.subr.mxu0 0.0
  %3312 = vmatpush2.msra.mxu0 0.0
  %3313 = vmatprep.subr.mxu0 0.0
  %3314 = vmatpush2.msra.mxu0 0.0
  %3315 = vmatprep.subr.mxu0 0.0
  %3316 = vmatpush2.msra.mxu0 0.0
  %3317 = vmatprep.subr.mxu0 0.0
  %3318 = vmatpush2.msra.mxu0 0.0
  %3319 = vmatprep.subr.mxu0 0.0
  %3320 = vmatpush2.msra.mxu0 0.0
  %3321 = vmatprep.subr.mxu0 0.0
  %3322 = vmatpush2.msra.mxu0 0.0
  %3323 = vmatprep.subr.mxu0 0.0
  %3324 = vmatpush2.msra.mxu0 0.0
  %3325 = vmatprep.subr.mxu0 0.0
  %3326 = vmatpush2.msra.mxu0 0.0
  %3327 = vmatprep.mubr.f32.mxu0 0.0
  %3328 = vmatmul.mubr.f32.gmra.mxu0 %v3252
  %v3329 = vpop.f32.mrf.mxu0
  %v3330 = vadd.f32 0.0, %v3329
  %v3331 = vpop.f32.mrf.mxu0
  %3332 = vmatprep.mubr.f32.mxu0 0.0
  %3333 = vmatmul.mubr.f32.gmra.mxu0 %v3255
  %v3334 = vpop.f32.mrf.mxu0
  %v3335 = vadd.f32 0.0, %v3334
  %v3336 = vpop.f32.mrf.mxu0
  %3337 = vmatprep.mubr.f32.mxu0 0.0
  %3338 = vmatmul.mubr.f32.gmra.mxu0 %v3258
  %v3339 = vpop.f32.mrf.mxu0
  %v3340 = vadd.f32 0.0, %v3339
  %v3341 = vpop.f32.mrf.mxu0
  %3342 = vmatprep.mubr.f32.mxu0 0.0
  %3343 = vmatmul.mubr.f32.gmra.mxu0 %v3261
  %v3344 = vpop.f32.mrf.mxu0
  %v3345 = vadd.f32 0.0, %v3344
  %v3346 = vpop.f32.mrf.mxu0
  %3347 = vdwg.mxu0
  %v3348 = vadd.f32 %v2024, %v3330
  %v3349 = vadd.f32 %v2025, %v3335
  %v3350 = vadd.f32 %v2026, %v3340
  %v3351 = vadd.f32 %v2027, %v3345
  %s3352 = scalar_lea.vmem %s21, 1
  %v3353 = vld [vmem:[%s3352] sm:$0x1]
  %v3355 = vlaneseq
  %v3356 = vshrl.u32 %v3355, 7
  %v3357 = vsub.s32 0, %v3356
  %v3358 = vrot.slane %v3353, %v3357
  %v3360 = vadd.f32 %v3348, %v3358
  %v3361 = vadd.f32 %v3349, %v3358
  %v3362 = vadd.f32 %v3350, %v3358
  %v3363 = vadd.f32 %v3351, %v3358
  %s3364 = scalar_lea.vmem %s22, 1
  %v3365 = vld [vmem:[%s3364] sm:$0x1]
  %s3366 = scalar_lea.vmem %s23, 1
  %v3367 = vld [vmem:[%s3366] sm:$0x1]
  %v3368 = vsel %vm248, %v3360, 0.0
  %3369 = vadd.xlane.f32.xlu0 %v3368
  %v3370 = vpop.xlane.xlu0 %3369
  %v3371 = vsel %vm248, %v3361, 0.0
  %3372 = vadd.xlane.f32.xlu0 %v3371
  %v3373 = vpop.xlane.xlu0 %3372
  %v3374 = vsel %vm248, %v3362, 0.0
  %3375 = vadd.xlane.f32.xlu0 %v3374
  %v3376 = vpop.xlane.xlu0 %3375
  %v3377 = vsel %vm248, %v3363, 0.0
  %3378 = vadd.xlane.f32.xlu0 %v3377
  %v3379 = vpop.xlane.xlu0 %3378
  %v3380 = vmul.f32 %v3370, %v261
  %v3381 = vmul.f32 %v3373, %v261
  %v3382 = vmul.f32 %v3376, %v261
  %v3383 = vmul.f32 %v3379, %v261
  %v3384 = vsub.f32 %v3360, %v3380
  %v3385 = vsub.f32 %v3361, %v3381
  %v3386 = vsub.f32 %v3362, %v3382
  %v3387 = vsub.f32 %v3363, %v3383
  %v3388 = vmul.f32 %v3384, %v3384
  %v3389 = vmul.f32 %v3385, %v3385
  %v3390 = vmul.f32 %v3386, %v3386
  %v3391 = vmul.f32 %v3387, %v3387
  %v3392 = vsel %vm248, %v3388, 0.0
  %3393 = vadd.xlane.f32.xlu0 %v3392
  %v3394 = vpop.xlane.xlu0 %3393
  %v3395 = vsel %vm248, %v3389, 0.0
  %3396 = vadd.xlane.f32.xlu0 %v3395
  %v3397 = vpop.xlane.xlu0 %3396
  %v3398 = vsel %vm248, %v3390, 0.0
  %3399 = vadd.xlane.f32.xlu0 %v3398
  %v3400 = vpop.xlane.xlu0 %3399
  %v3401 = vsel %vm248, %v3391, 0.0
  %3402 = vadd.xlane.f32.xlu0 %v3401
  %v3403 = vpop.xlane.xlu0 %3402
  %v3404 = vmul.f32 %v3394, %v261
  %v3405 = vmul.f32 %v3397, %v261
  %v3406 = vmul.f32 %v3400, %v261
  %v3407 = vmul.f32 %v3403, %v261
  %v3408 = vadd.f32 %v3404, 1e-05
  %v3409 = vadd.f32 %v3405, 1e-05
  %v3410 = vadd.f32 %v3406, 1e-05
  %v3411 = vadd.f32 %v3407, 1e-05
  %v3412 = vrsqrt.pop %v3408
  %v3413 = vrsqrt.pop %v3409
  %v3414 = vrsqrt.pop %v3410
  %v3415 = vrsqrt.pop %v3411
  %v3416 = vmul.f32 %v3384, %v3412
  %v3417 = vmul.f32 %v3385, %v3413
  %v3418 = vmul.f32 %v3386, %v3414
  %v3419 = vmul.f32 %v3387, %v3415
  %v3421 = vlaneseq
  %v3422 = vshrl.u32 %v3421, 7
  %v3423 = vsub.s32 0, %v3422
  %v3424 = vrot.slane %v3365, %v3423
  %v3426 = vmul.f32 %v3416, %v3424
  %v3427 = vmul.f32 %v3417, %v3424
  %v3428 = vmul.f32 %v3418, %v3424
  %v3429 = vmul.f32 %v3419, %v3424
  %v3431 = vlaneseq
  %v3432 = vshrl.u32 %v3431, 7
  %v3433 = vsub.s32 0, %v3432
  %v3434 = vrot.slane %v3367, %v3433
  %v3436 = vadd.f32 %v3426, %v3434
  %v3437 = vadd.f32 %v3427, %v3434
  %v3438 = vadd.f32 %v3428, %v3434
  %v3439 = vadd.f32 %v3429, %v3434
  %s3440 = scalar_lea.vmem %s24, 32
  %v3441 = vld [vmem:[%s3440] sm:$0xff]
  %v3442 = vld [vmem:[%s3440 + $0x8] sm:$0xff]
  %v3443 = vld [vmem:[%s3440 + $0x10] sm:$0xff]
  %v3444 = vld [vmem:[%s3440 + $0x18] sm:$0xff]
  %s3445 = scalar_lea.vmem %s25, 1
  %v3446 = vld [vmem:[%s3445] sm:$0x1]
  %v3448 = vlaneseq
  %v3449 = vshrl.u32 %v3448, 7
  %v3450 = vsub.s32 0, %v3449
  %v3451 = vrot.slane %v3446, %v3450
  %v3454 = vsel %vm248, %v3436, 0
  %v3457 = vsel %vm248, %v3437, 0
  %v3460 = vsel %vm248, %v3438, 0
  %v3463 = vsel %vm248, %v3439, 0
  %3465 = vmatprep.subr.mxu0 0.0
  %3466 = vmatpush1.msra.mxu0 0.0
  %3467 = vmatprep.subr.mxu0 0.0
  %3468 = vmatpush1.msra.mxu0 0.0
  %3469 = vmatprep.subr.mxu0 0.0
  %3470 = vmatpush1.msra.mxu0 0.0
  %3471 = vmatprep.subr.mxu0 0.0
  %3472 = vmatpush1.msra.mxu0 0.0
  %3473 = vmatprep.subr.mxu0 0.0
  %3474 = vmatpush1.msra.mxu0 0.0
  %3475 = vmatprep.subr.mxu0 0.0
  %3476 = vmatpush1.msra.mxu0 0.0
  %3477 = vmatprep.subr.mxu0 0.0
  %3478 = vmatpush1.msra.mxu0 0.0
  %3479 = vmatprep.subr.mxu0 0.0
  %3480 = vmatpush1.msra.mxu0 0.0
  %3481 = vmatprep.subr.mxu0 0.0
  %3482 = vmatpush1.msra.mxu0 0.0
  %3483 = vmatprep.subr.mxu0 0.0
  %3484 = vmatpush1.msra.mxu0 0.0
  %3485 = vmatprep.subr.mxu0 0.0
  %3486 = vmatpush1.msra.mxu0 0.0
  %3487 = vmatprep.subr.mxu0 0.0
  %3488 = vmatpush1.msra.mxu0 0.0
  %3489 = vmatprep.subr.mxu0 0.0
  %3490 = vmatpush1.msra.mxu0 %v3444
  %3491 = vmatprep.subr.mxu0 0.0
  %3492 = vmatpush1.msra.mxu0 %v3443
  %3493 = vmatprep.subr.mxu0 0.0
  %3494 = vmatpush1.msra.mxu0 %v3442
  %3495 = vmatprep.subr.mxu0 0.0
  %3496 = vmatpush1.msra.mxu0 %v3441
  %3497 = vmatprep.subr.mxu0 0.0
  %3498 = vmatpush2.msra.mxu0 0.0
  %3499 = vmatprep.subr.mxu0 0.0
  %3500 = vmatpush2.msra.mxu0 0.0
  %3501 = vmatprep.subr.mxu0 0.0
  %3502 = vmatpush2.msra.mxu0 0.0
  %3503 = vmatprep.subr.mxu0 0.0
  %3504 = vmatpush2.msra.mxu0 0.0
  %3505 = vmatprep.subr.mxu0 0.0
  %3506 = vmatpush2.msra.mxu0 0.0
  %3507 = vmatprep.subr.mxu0 0.0
  %3508 = vmatpush2.msra.mxu0 0.0
  %3509 = vmatprep.subr.mxu0 0.0
  %3510 = vmatpush2.msra.mxu0 0.0
  %3511 = vmatprep.subr.mxu0 0.0
  %3512 = vmatpush2.msra.mxu0 0.0
  %3513 = vmatprep.subr.mxu0 0.0
  %3514 = vmatpush2.msra.mxu0 0.0
  %3515 = vmatprep.subr.mxu0 0.0
  %3516 = vmatpush2.msra.mxu0 0.0
  %3517 = vmatprep.subr.mxu0 0.0
  %3518 = vmatpush2.msra.mxu0 0.0
  %3519 = vmatprep.subr.mxu0 0.0
  %3520 = vmatpush2.msra.mxu0 0.0
  %3521 = vmatprep.subr.mxu0 0.0
  %3522 = vmatpush2.msra.mxu0 0.0
  %3523 = vmatprep.subr.mxu0 0.0
  %3524 = vmatpush2.msra.mxu0 0.0
  %3525 = vmatprep.subr.mxu0 0.0
  %3526 = vmatpush2.msra.mxu0 0.0
  %3527 = vmatprep.subr.mxu0 0.0
  %3528 = vmatpush2.msra.mxu0 0.0
  %3529 = vmatprep.mubr.f32.mxu0 0.0
  %3530 = vmatmul.mubr.f32.gmra.mxu0 %v3454
  %v3531 = vpop.f32.mrf.mxu0
  %v3532 = vadd.f32 %v3451, %v3531
  %v3533 = vpop.f32.mrf.mxu0
  %3534 = vmatprep.mubr.f32.mxu0 0.0
  %3535 = vmatmul.mubr.f32.gmra.mxu0 %v3457
  %v3536 = vpop.f32.mrf.mxu0
  %v3537 = vadd.f32 %v3451, %v3536
  %v3538 = vpop.f32.mrf.mxu0
  %3539 = vmatprep.mubr.f32.mxu0 0.0
  %3540 = vmatmul.mubr.f32.gmra.mxu0 %v3460
  %v3541 = vpop.f32.mrf.mxu0
  %v3542 = vadd.f32 %v3451, %v3541
  %v3543 = vpop.f32.mrf.mxu0
  %3544 = vmatprep.mubr.f32.mxu0 0.0
  %3545 = vmatmul.mubr.f32.gmra.mxu0 %v3463
  %v3546 = vpop.f32.mrf.mxu0
  %v3547 = vadd.f32 %v3451, %v3546
  %v3548 = vpop.f32.mrf.mxu0
  %3549 = vdwg.mxu0
  %v3550 = vmul.f32 %v3532, 0.5
  %v3551 = vmul.f32 %v3537, 0.5
  %v3552 = vmul.f32 %v3542, 0.5
  %v3553 = vmul.f32 %v3547, 0.5
  %v3554 = vmul.f32 %v3532, 0.70710677
  %v3555 = vmul.f32 %v3537, 0.70710677
  %v3556 = vmul.f32 %v3542, 0.70710677
  %v3557 = vmul.f32 %v3547, 0.70710677
  %vm3558 = vcmp.lt.f32.partialorder %v3554, 0.0
  %vm3559 = vcmp.lt.f32.partialorder %v3555, 0.0
  %vm3560 = vcmp.lt.f32.partialorder %v3556, 0.0
  %vm3561 = vcmp.lt.f32.partialorder %v3557, 0.0
  %v3562 = vsel %vm3558, -1.0, 1.0
  %v3563 = vsel %vm3559, -1.0, 1.0
  %v3564 = vsel %vm3560, -1.0, 1.0
  %v3565 = vsel %vm3561, -1.0, 1.0
  %v3566 = vand.u32 2147483647, %v3554
  %v3567 = vand.u32 2147483647, %v3555
  %v3568 = vand.u32 2147483647, %v3556
  %v3569 = vand.u32 2147483647, %v3557
  %v3570 = vmul.f32 %v3566, 0.3275911
  %v3571 = vmul.f32 %v3567, 0.3275911
  %v3572 = vmul.f32 %v3568, 0.3275911
  %v3573 = vmul.f32 %v3569, 0.3275911
  %v3574 = vadd.f32 %v3570, 1.0
  %v3575 = vadd.f32 %v3571, 1.0
  %v3576 = vadd.f32 %v3572, 1.0
  %v3577 = vadd.f32 %v3573, 1.0
  %v3578 = vrcp.pop %v3574
  %v3579 = vmul.f32 1.0, %v3578
  %v3580 = vrcp.pop %v3575
  %v3581 = vmul.f32 1.0, %v3580
  %v3582 = vrcp.pop %v3576
  %v3583 = vmul.f32 1.0, %v3582
  %v3584 = vrcp.pop %v3577
  %v3585 = vmul.f32 1.0, %v3584
  %v3586 = vmul.f32 %v3579, 1.0614054
  %v3587 = vmul.f32 %v3581, 1.0614054
  %v3588 = vmul.f32 %v3583, 1.0614054
  %v3589 = vmul.f32 %v3585, 1.0614054
  %v3590 = vadd.f32 %v3586, -1.4531521
  %v3591 = vadd.f32 %v3587, -1.4531521
  %v3592 = vadd.f32 %v3588, -1.4531521
  %v3593 = vadd.f32 %v3589, -1.4531521
  %v3594 = vmul.f32 %v3590, %v3579
  %v3595 = vmul.f32 %v3591, %v3581
  %v3596 = vmul.f32 %v3592, %v3583
  %v3597 = vmul.f32 %v3593, %v3585
  %v3598 = vadd.f32 %v3594, 1.4214138
  %v3599 = vadd.f32 %v3595, 1.4214138
  %v3600 = vadd.f32 %v3596, 1.4214138
  %v3601 = vadd.f32 %v3597, 1.4214138
  %v3602 = vmul.f32 %v3598, %v3579
  %v3603 = vmul.f32 %v3599, %v3581
  %v3604 = vmul.f32 %v3600, %v3583
  %v3605 = vmul.f32 %v3601, %v3585
  %v3606 = vadd.f32 %v3602, -0.28449672
  %v3607 = vadd.f32 %v3603, -0.28449672
  %v3608 = vadd.f32 %v3604, -0.28449672
  %v3609 = vadd.f32 %v3605, -0.28449672
  %v3610 = vmul.f32 %v3606, %v3579
  %v3611 = vmul.f32 %v3607, %v3581
  %v3612 = vmul.f32 %v3608, %v3583
  %v3613 = vmul.f32 %v3609, %v3585
  %v3614 = vadd.f32 %v3610, 0.2548296
  %v3615 = vadd.f32 %v3611, 0.2548296
  %v3616 = vadd.f32 %v3612, 0.2548296
  %v3617 = vadd.f32 %v3613, 0.2548296
  %v3618 = vmul.f32 %v3614, %v3579
  %v3619 = vmul.f32 %v3615, %v3581
  %v3620 = vmul.f32 %v3616, %v3583
  %v3621 = vmul.f32 %v3617, %v3585
  %v3622 = vsub.f32 0.0, %v3566
  %v3623 = vsub.f32 0.0, %v3567
  %v3624 = vsub.f32 0.0, %v3568
  %v3625 = vsub.f32 0.0, %v3569
  %v3626 = vmul.f32 %v3622, %v3566
  %v3627 = vmul.f32 %v3623, %v3567
  %v3628 = vmul.f32 %v3624, %v3568
  %v3629 = vmul.f32 %v3625, %v3569
  %v3630 = vmul.f32 %v3626, 1.442695
  %v3631 = vpow.pop %v3630
  %v3632 = vmul.f32 %v3627, 1.442695
  %v3633 = vpow.pop %v3632
  %v3634 = vmul.f32 %v3628, 1.442695
  %v3635 = vpow.pop %v3634
  %v3636 = vmul.f32 %v3629, 1.442695
  %v3637 = vpow.pop %v3636
  %v3638 = vmul.f32 %v3618, %v3631
  %v3639 = vmul.f32 %v3619, %v3633
  %v3640 = vmul.f32 %v3620, %v3635
  %v3641 = vmul.f32 %v3621, %v3637
  %v3642 = vsub.f32 1.0, %v3638
  %v3643 = vsub.f32 1.0, %v3639
  %v3644 = vsub.f32 1.0, %v3640
  %v3645 = vsub.f32 1.0, %v3641
  %v3646 = vmul.f32 %v3562, %v3642
  %v3647 = vmul.f32 %v3563, %v3643
  %v3648 = vmul.f32 %v3564, %v3644
  %v3649 = vmul.f32 %v3565, %v3645
  %v3650 = vadd.f32 %v3646, 1.0
  %v3651 = vadd.f32 %v3647, 1.0
  %v3652 = vadd.f32 %v3648, 1.0
  %v3653 = vadd.f32 %v3649, 1.0
  %v3654 = vmul.f32 %v3550, %v3650
  %v3655 = vmul.f32 %v3551, %v3651
  %v3656 = vmul.f32 %v3552, %v3652
  %v3657 = vmul.f32 %v3553, %v3653
  %s3658 = scalar_lea.vmem %s26, 128
  %v3659 = vld [vmem:[%s3658] sm:$0xff]
  %v3660 = vld [vmem:[%s3658 + $0x8] sm:$0xff]
  %v3661 = vld [vmem:[%s3658 + $0x10] sm:$0xff]
  %v3662 = vld [vmem:[%s3658 + $0x18] sm:$0xff]
  %v3663 = vld [vmem:[%s3658 + $0x20] sm:$0xff]
  %v3664 = vld [vmem:[%s3658 + $0x28] sm:$0xff]
  %v3665 = vld [vmem:[%s3658 + $0x30] sm:$0xff]
  %v3666 = vld [vmem:[%s3658 + $0x38] sm:$0xff]
  %v3667 = vld [vmem:[%s3658 + $0x40] sm:$0xff]
  %v3668 = vld [vmem:[%s3658 + $0x48] sm:$0xff]
  %v3669 = vld [vmem:[%s3658 + $0x50] sm:$0xff]
  %v3670 = vld [vmem:[%s3658 + $0x58] sm:$0xff]
  %v3671 = vld [vmem:[%s3658 + $0x60] sm:$0xff]
  %v3672 = vld [vmem:[%s3658 + $0x68] sm:$0xff]
  %v3673 = vld [vmem:[%s3658 + $0x70] sm:$0xff]
  %v3674 = vld [vmem:[%s3658 + $0x78] sm:$0xff]
  %3675 = vmatprep.subr.mxu0 0.0
  %3676 = vmatpush1.msra.mxu0 %v3674
  %3677 = vmatprep.subr.mxu0 0.0
  %3678 = vmatpush1.msra.mxu0 %v3673
  %3679 = vmatprep.subr.mxu0 0.0
  %3680 = vmatpush1.msra.mxu0 %v3672
  %3681 = vmatprep.subr.mxu0 0.0
  %3682 = vmatpush1.msra.mxu0 %v3671
  %3683 = vmatprep.subr.mxu0 0.0
  %3684 = vmatpush1.msra.mxu0 %v3670
  %3685 = vmatprep.subr.mxu0 0.0
  %3686 = vmatpush1.msra.mxu0 %v3669
  %3687 = vmatprep.subr.mxu0 0.0
  %3688 = vmatpush1.msra.mxu0 %v3668
  %3689 = vmatprep.subr.mxu0 0.0
  %3690 = vmatpush1.msra.mxu0 %v3667
  %3691 = vmatprep.subr.mxu0 0.0
  %3692 = vmatpush1.msra.mxu0 %v3666
  %3693 = vmatprep.subr.mxu0 0.0
  %3694 = vmatpush1.msra.mxu0 %v3665
  %3695 = vmatprep.subr.mxu0 0.0
  %3696 = vmatpush1.msra.mxu0 %v3664
  %3697 = vmatprep.subr.mxu0 0.0
  %3698 = vmatpush1.msra.mxu0 %v3663
  %3699 = vmatprep.subr.mxu0 0.0
  %3700 = vmatpush1.msra.mxu0 %v3662
  %3701 = vmatprep.subr.mxu0 0.0
  %3702 = vmatpush1.msra.mxu0 %v3661
  %3703 = vmatprep.subr.mxu0 0.0
  %3704 = vmatpush1.msra.mxu0 %v3660
  %3705 = vmatprep.subr.mxu0 0.0
  %3706 = vmatpush1.msra.mxu0 %v3659
  %3707 = vmatprep.subr.mxu0 0.0
  %3708 = vmatpush2.msra.mxu0 0.0
  %3709 = vmatprep.subr.mxu0 0.0
  %3710 = vmatpush2.msra.mxu0 0.0
  %3711 = vmatprep.subr.mxu0 0.0
  %3712 = vmatpush2.msra.mxu0 0.0
  %3713 = vmatprep.subr.mxu0 0.0
  %3714 = vmatpush2.msra.mxu0 0.0
  %3715 = vmatprep.subr.mxu0 0.0
  %3716 = vmatpush2.msra.mxu0 0.0
  %3717 = vmatprep.subr.mxu0 0.0
  %3718 = vmatpush2.msra.mxu0 0.0
  %3719 = vmatprep.subr.mxu0 0.0
  %3720 = vmatpush2.msra.mxu0 0.0
  %3721 = vmatprep.subr.mxu0 0.0
  %3722 = vmatpush2.msra.mxu0 0.0
  %3723 = vmatprep.subr.mxu0 0.0
  %3724 = vmatpush2.msra.mxu0 0.0
  %3725 = vmatprep.subr.mxu0 0.0
  %3726 = vmatpush2.msra.mxu0 0.0
  %3727 = vmatprep.subr.mxu0 0.0
  %3728 = vmatpush2.msra.mxu0 0.0
  %3729 = vmatprep.subr.mxu0 0.0
  %3730 = vmatpush2.msra.mxu0 0.0
  %3731 = vmatprep.subr.mxu0 0.0
  %3732 = vmatpush2.msra.mxu0 0.0
  %3733 = vmatprep.subr.mxu0 0.0
  %3734 = vmatpush2.msra.mxu0 0.0
  %3735 = vmatprep.subr.mxu0 0.0
  %3736 = vmatpush2.msra.mxu0 0.0
  %3737 = vmatprep.subr.mxu0 0.0
  %3738 = vmatpush2.msra.mxu0 0.0
  %3739 = vmatprep.mubr.f32.mxu0 0.0
  %3740 = vmatmul.mubr.f32.gmra.mxu0 %v3654
  %v3741 = vpop.f32.mrf.mxu0
  %v3742 = vadd.f32 0.0, %v3741
  %v3743 = vpop.f32.mrf.mxu0
  %3744 = vmatprep.mubr.f32.mxu0 0.0
  %3745 = vmatmul.mubr.f32.gmra.mxu0 %v3655
  %v3746 = vpop.f32.mrf.mxu0
  %v3747 = vadd.f32 0.0, %v3746
  %v3748 = vpop.f32.mrf.mxu0
  %3749 = vmatprep.mubr.f32.mxu0 0.0
  %3750 = vmatmul.mubr.f32.gmra.mxu0 %v3656
  %v3751 = vpop.f32.mrf.mxu0
  %v3752 = vadd.f32 0.0, %v3751
  %v3753 = vpop.f32.mrf.mxu0
  %3754 = vmatprep.mubr.f32.mxu0 0.0
  %3755 = vmatmul.mubr.f32.gmra.mxu0 %v3657
  %v3756 = vpop.f32.mrf.mxu0
  %v3757 = vadd.f32 0.0, %v3756
  %v3758 = vpop.f32.mrf.mxu0
  %3759 = vdwg.mxu0
  %v3760 = vadd.f32 %v3360, %v3742
  %v3761 = vadd.f32 %v3361, %v3747
  %v3762 = vadd.f32 %v3362, %v3752
  %v3763 = vadd.f32 %v3363, %v3757
  %s3764 = scalar_lea.vmem %s27, 1
  %v3765 = vld [vmem:[%s3764] sm:$0x1]
  %v3767 = vlaneseq
  %v3768 = vshrl.u32 %v3767, 7
  %v3769 = vsub.s32 0, %v3768
  %v3770 = vrot.slane %v3765, %v3769
  %v3772 = vadd.f32 %v3760, %v3770
  %v3773 = vadd.f32 %v3761, %v3770
  %v3774 = vadd.f32 %v3762, %v3770
  %v3775 = vadd.f32 %v3763, %v3770
  %v3776 = vld [vmem:[%s6] sm:$0xff]
  %v3777 = vld [vmem:[%s6 + $0x8] sm:$0xff]
  %v3779 = vsel %vm248, %v3776, 0
  %v3782 = vsel %vm248, %v3777, 0
  %3784 = vmatprep.subr.mxu0 0.0
  %3785 = vmatpush1.msra.mxu0 0.0
  %3786 = vmatprep.subr.mxu0 0.0
  %3787 = vmatpush1.msra.mxu0 0.0
  %3788 = vmatprep.subr.mxu0 0.0
  %3789 = vmatpush1.msra.mxu0 0.0
  %3790 = vmatprep.subr.mxu0 0.0
  %3791 = vmatpush1.msra.mxu0 0.0
  %3792 = vmatprep.subr.mxu0 0.0
  %3793 = vmatpush1.msra.mxu0 0.0
  %3794 = vmatprep.subr.mxu0 0.0
  %3795 = vmatpush1.msra.mxu0 0.0
  %3796 = vmatprep.subr.mxu0 0.0
  %3797 = vmatpush1.msra.mxu0 0.0
  %3798 = vmatprep.subr.mxu0 0.0
  %3799 = vmatpush1.msra.mxu0 0.0
  %3800 = vmatprep.subr.mxu0 0.0
  %3801 = vmatpush1.msra.mxu0 0.0
  %3802 = vmatprep.subr.mxu0 0.0
  %3803 = vmatpush1.msra.mxu0 0.0
  %3804 = vmatprep.subr.mxu0 0.0
  %3805 = vmatpush1.msra.mxu0 0.0
  %3806 = vmatprep.subr.mxu0 0.0
  %3807 = vmatpush1.msra.mxu0 0.0
  %3808 = vmatprep.subr.mxu0 0.0
  %3809 = vmatpush1.msra.mxu0 %v3775
  %3810 = vmatprep.subr.mxu0 0.0
  %3811 = vmatpush1.msra.mxu0 %v3774
  %3812 = vmatprep.subr.mxu0 0.0
  %3813 = vmatpush1.msra.mxu0 %v3773
  %3814 = vmatprep.subr.mxu0 0.0
  %3815 = vmatpush1.msra.mxu0 %v3772
  %3816 = vmatprep.subr.mxu0 0.0
  %3817 = vmatpush2.msra.mxu0 0.0
  %3818 = vmatprep.subr.mxu0 0.0
  %3819 = vmatpush2.msra.mxu0 0.0
  %3820 = vmatprep.subr.mxu0 0.0
  %3821 = vmatpush2.msra.mxu0 0.0
  %3822 = vmatprep.subr.mxu0 0.0
  %3823 = vmatpush2.msra.mxu0 0.0
  %3824 = vmatprep.subr.mxu0 0.0
  %3825 = vmatpush2.msra.mxu0 0.0
  %3826 = vmatprep.subr.mxu0 0.0
  %3827 = vmatpush2.msra.mxu0 0.0
  %3828 = vmatprep.subr.mxu0 0.0
  %3829 = vmatpush2.msra.mxu0 0.0
  %3830 = vmatprep.subr.mxu0 0.0
  %3831 = vmatpush2.msra.mxu0 0.0
  %3832 = vmatprep.subr.mxu0 0.0
  %3833 = vmatpush2.msra.mxu0 0.0
  %3834 = vmatprep.subr.mxu0 0.0
  %3835 = vmatpush2.msra.mxu0 0.0
  %3836 = vmatprep.subr.mxu0 0.0
  %3837 = vmatpush2.msra.mxu0 0.0
  %3838 = vmatprep.subr.mxu0 0.0
  %3839 = vmatpush2.msra.mxu0 0.0
  %3840 = vmatprep.subr.mxu0 0.0
  %3841 = vmatpush2.msra.mxu0 0.0
  %3842 = vmatprep.subr.mxu0 0.0
  %3843 = vmatpush2.msra.mxu0 0.0
  %3844 = vmatprep.subr.mxu0 0.0
  %3845 = vmatpush2.msra.mxu0 0.0
  %3846 = vmatprep.subr.mxu0 0.0
  %3847 = vmatpush2.msra.mxu0 0.0
  %3848 = vmatprep.mubr.f32.mxu0 0.0
  %3849 = vmatmul.mubr.f32.gmra.mxu0 %v3779
  %v3850 = vpop.f32.mrf.mxu0
  %v3851 = vadd.f32 0.0, %v3850
  %v3852 = vpop.f32.mrf.mxu0
  %3853 = vmatprep.mubr.f32.mxu0 0.0
  %3854 = vmatmul.mubr.f32.gmra.mxu0 %v3782
  %v3855 = vpop.f32.mrf.mxu0
  %v3856 = vadd.f32 0.0, %v3855
  %v3857 = vpop.f32.mrf.mxu0
  %3858 = vdwg.mxu0
  %v3859 = vld [vmem:[%s7] sm:$0xff]
  %v3860 = vld [vmem:[%s7 + $0x8] sm:$0xff]
  %v3862 = vsel %vm248, %v3859, 0
  %v3865 = vsel %vm248, %v3860, 0
  %3867 = vmatprep.subr.mxu0 0.0
  %3868 = vmatpush1.msra.mxu0 0.0
  %3869 = vmatprep.subr.mxu0 0.0
  %3870 = vmatpush1.msra.mxu0 0.0
  %3871 = vmatprep.subr.mxu0 0.0
  %3872 = vmatpush1.msra.mxu0 0.0
  %3873 = vmatprep.subr.mxu0 0.0
  %3874 = vmatpush1.msra.mxu0 0.0
  %3875 = vmatprep.subr.mxu0 0.0
  %3876 = vmatpush1.msra.mxu0 0.0
  %3877 = vmatprep.subr.mxu0 0.0
  %3878 = vmatpush1.msra.mxu0 0.0
  %3879 = vmatprep.subr.mxu0 0.0
  %3880 = vmatpush1.msra.mxu0 0.0
  %3881 = vmatprep.subr.mxu0 0.0
  %3882 = vmatpush1.msra.mxu0 0.0
  %3883 = vmatprep.subr.mxu0 0.0
  %3884 = vmatpush1.msra.mxu0 0.0
  %3885 = vmatprep.subr.mxu0 0.0
  %3886 = vmatpush1.msra.mxu0 0.0
  %3887 = vmatprep.subr.mxu0 0.0
  %3888 = vmatpush1.msra.mxu0 0.0
  %3889 = vmatprep.subr.mxu0 0.0
  %3890 = vmatpush1.msra.mxu0 0.0
  %3891 = vmatprep.subr.mxu0 0.0
  %3892 = vmatpush1.msra.mxu0 %v3775
  %3893 = vmatprep.subr.mxu0 0.0
  %3894 = vmatpush1.msra.mxu0 %v3774
  %3895 = vmatprep.subr.mxu0 0.0
  %3896 = vmatpush1.msra.mxu0 %v3773
  %3897 = vmatprep.subr.mxu0 0.0
  %3898 = vmatpush1.msra.mxu0 %v3772
  %3899 = vmatprep.subr.mxu0 0.0
  %3900 = vmatpush2.msra.mxu0 0.0
  %3901 = vmatprep.subr.mxu0 0.0
  %3902 = vmatpush2.msra.mxu0 0.0
  %3903 = vmatprep.subr.mxu0 0.0
  %3904 = vmatpush2.msra.mxu0 0.0
  %3905 = vmatprep.subr.mxu0 0.0
  %3906 = vmatpush2.msra.mxu0 0.0
  %3907 = vmatprep.subr.mxu0 0.0
  %3908 = vmatpush2.msra.mxu0 0.0
  %3909 = vmatprep.subr.mxu0 0.0
  %3910 = vmatpush2.msra.mxu0 0.0
  %3911 = vmatprep.subr.mxu0 0.0
  %3912 = vmatpush2.msra.mxu0 0.0
  %3913 = vmatprep.subr.mxu0 0.0
  %3914 = vmatpush2.msra.mxu0 0.0
  %3915 = vmatprep.subr.mxu0 0.0
  %3916 = vmatpush2.msra.mxu0 0.0
  %3917 = vmatprep.subr.mxu0 0.0
  %3918 = vmatpush2.msra.mxu0 0.0
  %3919 = vmatprep.subr.mxu0 0.0
  %3920 = vmatpush2.msra.mxu0 0.0
  %3921 = vmatprep.subr.mxu0 0.0
  %3922 = vmatpush2.msra.mxu0 0.0
  %3923 = vmatprep.subr.mxu0 0.0
  %3924 = vmatpush2.msra.mxu0 0.0
  %3925 = vmatprep.subr.mxu0 0.0
  %3926 = vmatpush2.msra.mxu0 0.0
  %3927 = vmatprep.subr.mxu0 0.0
  %3928 = vmatpush2.msra.mxu0 0.0
  %3929 = vmatprep.subr.mxu0 0.0
  %3930 = vmatpush2.msra.mxu0 0.0
  %3931 = vmatprep.mubr.f32.mxu0 0.0
  %3932 = vmatmul.mubr.f32.gmra.mxu0 %v3862
  %v3933 = vpop.f32.mrf.mxu0
  %v3934 = vadd.f32 0.0, %v3933
  %v3935 = vpop.f32.mrf.mxu0
  %3936 = vmatprep.mubr.f32.mxu0 0.0
  %3937 = vmatmul.mubr.f32.gmra.mxu0 %v3865
  %v3938 = vpop.f32.mrf.mxu0
  %v3939 = vadd.f32 0.0, %v3938
  %v3940 = vpop.f32.mrf.mxu0
  %3941 = vdwg.mxu0
  %v3942 = vld [vmem:[%s8] sm:$0xff]
  %v3943 = vld [vmem:[%s8 + $0x8] sm:$0xff]
  %v3944 = vld [vmem:[%s8 + $0x10] sm:$0xff]
  %v3945 = vld [vmem:[%s8 + $0x18] sm:$0xff]
  %v3946 = vld [vmem:[%s9] sm:$0x1]
  %v3948 = vlaneseq
  %v3949 = vshrl.u32 %v3948, 7
  %v3950 = vsub.s32 0, %v3949
  %v3951 = vrot.slane %v3946, %v3950
  %v3954 = vsel %vm248, %v3934, 0
  %v3957 = vsel %vm248, %v3939, 0
  %3959 = vmatprep.subr.mxu0 0.0
  %3960 = vmatpush1.msra.mxu0 0.0
  %3961 = vmatprep.subr.mxu0 0.0
  %3962 = vmatpush1.msra.mxu0 0.0
  %3963 = vmatprep.subr.mxu0 0.0
  %3964 = vmatpush1.msra.mxu0 0.0
  %3965 = vmatprep.subr.mxu0 0.0
  %3966 = vmatpush1.msra.mxu0 0.0
  %3967 = vmatprep.subr.mxu0 0.0
  %3968 = vmatpush1.msra.mxu0 0.0
  %3969 = vmatprep.subr.mxu0 0.0
  %3970 = vmatpush1.msra.mxu0 0.0
  %3971 = vmatprep.subr.mxu0 0.0
  %3972 = vmatpush1.msra.mxu0 0.0
  %3973 = vmatprep.subr.mxu0 0.0
  %3974 = vmatpush1.msra.mxu0 0.0
  %3975 = vmatprep.subr.mxu0 0.0
  %3976 = vmatpush1.msra.mxu0 0.0
  %3977 = vmatprep.subr.mxu0 0.0
  %3978 = vmatpush1.msra.mxu0 0.0
  %3979 = vmatprep.subr.mxu0 0.0
  %3980 = vmatpush1.msra.mxu0 0.0
  %3981 = vmatprep.subr.mxu0 0.0
  %3982 = vmatpush1.msra.mxu0 0.0
  %3983 = vmatprep.subr.mxu0 0.0
  %3984 = vmatpush1.msra.mxu0 %v3945
  %3985 = vmatprep.subr.mxu0 0.0
  %3986 = vmatpush1.msra.mxu0 %v3944
  %3987 = vmatprep.subr.mxu0 0.0
  %3988 = vmatpush1.msra.mxu0 %v3943
  %3989 = vmatprep.subr.mxu0 0.0
  %3990 = vmatpush1.msra.mxu0 %v3942
  %3991 = vmatprep.subr.mxu0 0.0
  %3992 = vmatpush2.msra.mxu0 0.0
  %3993 = vmatprep.subr.mxu0 0.0
  %3994 = vmatpush2.msra.mxu0 0.0
  %3995 = vmatprep.subr.mxu0 0.0
  %3996 = vmatpush2.msra.mxu0 0.0
  %3997 = vmatprep.subr.mxu0 0.0
  %3998 = vmatpush2.msra.mxu0 0.0
  %3999 = vmatprep.subr.mxu0 0.0
  %4000 = vmatpush2.msra.mxu0 0.0
  %4001 = vmatprep.subr.mxu0 0.0
  %4002 = vmatpush2.msra.mxu0 0.0
  %4003 = vmatprep.subr.mxu0 0.0
  %4004 = vmatpush2.msra.mxu0 0.0
  %4005 = vmatprep.subr.mxu0 0.0
  %4006 = vmatpush2.msra.mxu0 0.0
  %4007 = vmatprep.subr.mxu0 0.0
  %4008 = vmatpush2.msra.mxu0 0.0
  %4009 = vmatprep.subr.mxu0 0.0
  %4010 = vmatpush2.msra.mxu0 0.0
  %4011 = vmatprep.subr.mxu0 0.0
  %4012 = vmatpush2.msra.mxu0 0.0
  %4013 = vmatprep.subr.mxu0 0.0
  %4014 = vmatpush2.msra.mxu0 0.0
  %4015 = vmatprep.subr.mxu0 0.0
  %4016 = vmatpush2.msra.mxu0 0.0
  %4017 = vmatprep.subr.mxu0 0.0
  %4018 = vmatpush2.msra.mxu0 0.0
  %4019 = vmatprep.subr.mxu0 0.0
  %4020 = vmatpush2.msra.mxu0 0.0
  %4021 = vmatprep.subr.mxu0 0.0
  %4022 = vmatpush2.msra.mxu0 0.0
  %4023 = vmatprep.mubr.f32.mxu0 0.0
  %4024 = vmatmul.mubr.f32.gmra.mxu0 %v3954
  %v4025 = vpop.f32.mrf.mxu0
  %v4026 = vadd.f32 %v3951, %v4025
  %v4027 = vpop.f32.mrf.mxu0
  %4028 = vmatprep.mubr.f32.mxu0 0.0
  %4029 = vmatmul.mubr.f32.gmra.mxu0 %v3957
  %v4030 = vpop.f32.mrf.mxu0
  %v4031 = vadd.f32 %v3951, %v4030
  %v4032 = vpop.f32.mrf.mxu0
  %4033 = vdwg.mxu0
  %v4034 = vmul.f32 %v4026, 0.5
  %v4035 = vmul.f32 %v4031, 0.5
  %v4036 = vmul.f32 %v4026, 0.70710677
  %v4037 = vmul.f32 %v4031, 0.70710677
  %vm4038 = vcmp.lt.f32.partialorder %v4036, 0.0
  %vm4039 = vcmp.lt.f32.partialorder %v4037, 0.0
  %v4040 = vsel %vm4038, -1.0, 1.0
  %v4041 = vsel %vm4039, -1.0, 1.0
  %v4042 = vand.u32 2147483647, %v4036
  %v4043 = vand.u32 2147483647, %v4037
  %v4044 = vmul.f32 %v4042, 0.3275911
  %v4045 = vmul.f32 %v4043, 0.3275911
  %v4046 = vadd.f32 %v4044, 1.0
  %v4047 = vadd.f32 %v4045, 1.0
  %v4048 = vrcp.pop %v4046
  %v4049 = vmul.f32 1.0, %v4048
  %v4050 = vrcp.pop %v4047
  %v4051 = vmul.f32 1.0, %v4050
  %v4052 = vmul.f32 %v4049, 1.0614054
  %v4053 = vmul.f32 %v4051, 1.0614054
  %v4054 = vadd.f32 %v4052, -1.4531521
  %v4055 = vadd.f32 %v4053, -1.4531521
  %v4056 = vmul.f32 %v4054, %v4049
  %v4057 = vmul.f32 %v4055, %v4051
  %v4058 = vadd.f32 %v4056, 1.4214138
  %v4059 = vadd.f32 %v4057, 1.4214138
  %v4060 = vmul.f32 %v4058, %v4049
  %v4061 = vmul.f32 %v4059, %v4051
  %v4062 = vadd.f32 %v4060, -0.28449672
  %v4063 = vadd.f32 %v4061, -0.28449672
  %v4064 = vmul.f32 %v4062, %v4049
  %v4065 = vmul.f32 %v4063, %v4051
  %v4066 = vadd.f32 %v4064, 0.2548296
  %v4067 = vadd.f32 %v4065, 0.2548296
  %v4068 = vmul.f32 %v4066, %v4049
  %v4069 = vmul.f32 %v4067, %v4051
  %v4070 = vsub.f32 0.0, %v4042
  %v4071 = vsub.f32 0.0, %v4043
  %v4072 = vmul.f32 %v4070, %v4042
  %v4073 = vmul.f32 %v4071, %v4043
  %v4074 = vmul.f32 %v4072, 1.442695
  %v4075 = vpow.pop %v4074
  %v4076 = vmul.f32 %v4073, 1.442695
  %v4077 = vpow.pop %v4076
  %v4078 = vmul.f32 %v4068, %v4075
  %v4079 = vmul.f32 %v4069, %v4077
  %v4080 = vsub.f32 1.0, %v4078
  %v4081 = vsub.f32 1.0, %v4079
  %v4082 = vmul.f32 %v4040, %v4080
  %v4083 = vmul.f32 %v4041, %v4081
  %v4084 = vadd.f32 %v4082, 1.0
  %v4085 = vadd.f32 %v4083, 1.0
  %v4086 = vmul.f32 %v4034, %v4084
  %v4087 = vmul.f32 %v4035, %v4085
  %v4088 = vld [vmem:[%s10] sm:$0xff]
  %v4089 = vld [vmem:[%s10 + $0x8] sm:$0xff]
  %v4090 = vld [vmem:[%s10 + $0x10] sm:$0xff]
  %v4091 = vld [vmem:[%s10 + $0x18] sm:$0xff]
  %v4092 = vld [vmem:[%s11] sm:$0xff]
  %v4093 = vld [vmem:[%s11 + $0x8] sm:$0xff]
  %v4094 = vld [vmem:[%s11 + $0x10] sm:$0xff]
  %v4095 = vld [vmem:[%s11 + $0x18] sm:$0xff]
  %v4097 = vsel %vm248, %v3851, 0
  %v4100 = vsel %vm248, %v3856, 0
  %4102 = vmatprep.subr.mxu0 0.0
  %4103 = vmatpush1.msra.mxu0 0.0
  %4104 = vmatprep.subr.mxu0 0.0
  %4105 = vmatpush1.msra.mxu0 0.0
  %4106 = vmatprep.subr.mxu0 0.0
  %4107 = vmatpush1.msra.mxu0 0.0
  %4108 = vmatprep.subr.mxu0 0.0
  %4109 = vmatpush1.msra.mxu0 0.0
  %4110 = vmatprep.subr.mxu0 0.0
  %4111 = vmatpush1.msra.mxu0 0.0
  %4112 = vmatprep.subr.mxu0 0.0
  %4113 = vmatpush1.msra.mxu0 0.0
  %4114 = vmatprep.subr.mxu0 0.0
  %4115 = vmatpush1.msra.mxu0 0.0
  %4116 = vmatprep.subr.mxu0 0.0
  %4117 = vmatpush1.msra.mxu0 0.0
  %4118 = vmatprep.subr.mxu0 0.0
  %4119 = vmatpush1.msra.mxu0 0.0
  %4120 = vmatprep.subr.mxu0 0.0
  %4121 = vmatpush1.msra.mxu0 0.0
  %4122 = vmatprep.subr.mxu0 0.0
  %4123 = vmatpush1.msra.mxu0 0.0
  %4124 = vmatprep.subr.mxu0 0.0
  %4125 = vmatpush1.msra.mxu0 0.0
  %4126 = vmatprep.subr.mxu0 0.0
  %4127 = vmatpush1.msra.mxu0 %v4095
  %4128 = vmatprep.subr.mxu0 0.0
  %4129 = vmatpush1.msra.mxu0 %v4094
  %4130 = vmatprep.subr.mxu0 0.0
  %4131 = vmatpush1.msra.mxu0 %v4093
  %4132 = vmatprep.subr.mxu0 0.0
  %4133 = vmatpush1.msra.mxu0 %v4092
  %4134 = vmatprep.subr.mxu0 0.0
  %4135 = vmatpush2.msra.mxu0 0.0
  %4136 = vmatprep.subr.mxu0 0.0
  %4137 = vmatpush2.msra.mxu0 0.0
  %4138 = vmatprep.subr.mxu0 0.0
  %4139 = vmatpush2.msra.mxu0 0.0
  %4140 = vmatprep.subr.mxu0 0.0
  %4141 = vmatpush2.msra.mxu0 0.0
  %4142 = vmatprep.subr.mxu0 0.0
  %4143 = vmatpush2.msra.mxu0 0.0
  %4144 = vmatprep.subr.mxu0 0.0
  %4145 = vmatpush2.msra.mxu0 0.0
  %4146 = vmatprep.subr.mxu0 0.0
  %4147 = vmatpush2.msra.mxu0 0.0
  %4148 = vmatprep.subr.mxu0 0.0
  %4149 = vmatpush2.msra.mxu0 0.0
  %4150 = vmatprep.subr.mxu0 0.0
  %4151 = vmatpush2.msra.mxu0 0.0
  %4152 = vmatprep.subr.mxu0 0.0
  %4153 = vmatpush2.msra.mxu0 0.0
  %4154 = vmatprep.subr.mxu0 0.0
  %4155 = vmatpush2.msra.mxu0 0.0
  %4156 = vmatprep.subr.mxu0 0.0
  %4157 = vmatpush2.msra.mxu0 0.0
  %4158 = vmatprep.subr.mxu0 0.0
  %4159 = vmatpush2.msra.mxu0 0.0
  %4160 = vmatprep.subr.mxu0 0.0
  %4161 = vmatpush2.msra.mxu0 0.0
  %4162 = vmatprep.subr.mxu0 0.0
  %4163 = vmatpush2.msra.mxu0 0.0
  %4164 = vmatprep.subr.mxu0 0.0
  %4165 = vmatpush2.msra.mxu0 0.0
  %4166 = vmatprep.mubr.f32.mxu0 0.0
  %4167 = vmatmul.mubr.f32.gmra.mxu0 %v4097
  %v4168 = vpop.f32.mrf.mxu0
  %v4169 = vadd.f32 0.0, %v4168
  %v4170 = vpop.f32.mrf.mxu0
  %4171 = vmatprep.mubr.f32.mxu0 0.0
  %4172 = vmatmul.mubr.f32.gmra.mxu0 %v4100
  %v4173 = vpop.f32.mrf.mxu0
  %v4174 = vadd.f32 0.0, %v4173
  %v4175 = vpop.f32.mrf.mxu0
  %4176 = vdwg.mxu0
  %v4178 = vsel %vm248, %v4086, 0
  %v4181 = vsel %vm248, %v4087, 0
  %4183 = vmatprep.subr.mxu0 0.0
  %4184 = vmatpush1.msra.mxu0 0.0
  %4185 = vmatprep.subr.mxu0 0.0
  %4186 = vmatpush1.msra.mxu0 0.0
  %4187 = vmatprep.subr.mxu0 0.0
  %4188 = vmatpush1.msra.mxu0 0.0
  %4189 = vmatprep.subr.mxu0 0.0
  %4190 = vmatpush1.msra.mxu0 0.0
  %4191 = vmatprep.subr.mxu0 0.0
  %4192 = vmatpush1.msra.mxu0 0.0
  %4193 = vmatprep.subr.mxu0 0.0
  %4194 = vmatpush1.msra.mxu0 0.0
  %4195 = vmatprep.subr.mxu0 0.0
  %4196 = vmatpush1.msra.mxu0 0.0
  %4197 = vmatprep.subr.mxu0 0.0
  %4198 = vmatpush1.msra.mxu0 0.0
  %4199 = vmatprep.subr.mxu0 0.0
  %4200 = vmatpush1.msra.mxu0 0.0
  %4201 = vmatprep.subr.mxu0 0.0
  %4202 = vmatpush1.msra.mxu0 0.0
  %4203 = vmatprep.subr.mxu0 0.0
  %4204 = vmatpush1.msra.mxu0 0.0
  %4205 = vmatprep.subr.mxu0 0.0
  %4206 = vmatpush1.msra.mxu0 0.0
  %4207 = vmatprep.subr.mxu0 0.0
  %4208 = vmatpush1.msra.mxu0 %v4091
  %4209 = vmatprep.subr.mxu0 0.0
  %4210 = vmatpush1.msra.mxu0 %v4090
  %4211 = vmatprep.subr.mxu0 0.0
  %4212 = vmatpush1.msra.mxu0 %v4089
  %4213 = vmatprep.subr.mxu0 0.0
  %4214 = vmatpush1.msra.mxu0 %v4088
  %4215 = vmatprep.subr.mxu0 0.0
  %4216 = vmatpush2.msra.mxu0 0.0
  %4217 = vmatprep.subr.mxu0 0.0
  %4218 = vmatpush2.msra.mxu0 0.0
  %4219 = vmatprep.subr.mxu0 0.0
  %4220 = vmatpush2.msra.mxu0 0.0
  %4221 = vmatprep.subr.mxu0 0.0
  %4222 = vmatpush2.msra.mxu0 0.0
  %4223 = vmatprep.subr.mxu0 0.0
  %4224 = vmatpush2.msra.mxu0 0.0
  %4225 = vmatprep.subr.mxu0 0.0
  %4226 = vmatpush2.msra.mxu0 0.0
  %4227 = vmatprep.subr.mxu0 0.0
  %4228 = vmatpush2.msra.mxu0 0.0
  %4229 = vmatprep.subr.mxu0 0.0
  %4230 = vmatpush2.msra.mxu0 0.0
  %4231 = vmatprep.subr.mxu0 0.0
  %4232 = vmatpush2.msra.mxu0 0.0
  %4233 = vmatprep.subr.mxu0 0.0
  %4234 = vmatpush2.msra.mxu0 0.0
  %4235 = vmatprep.subr.mxu0 0.0
  %4236 = vmatpush2.msra.mxu0 0.0
  %4237 = vmatprep.subr.mxu0 0.0
  %4238 = vmatpush2.msra.mxu0 0.0
  %4239 = vmatprep.subr.mxu0 0.0
  %4240 = vmatpush2.msra.mxu0 0.0
  %4241 = vmatprep.subr.mxu0 0.0
  %4242 = vmatpush2.msra.mxu0 0.0
  %4243 = vmatprep.subr.mxu0 0.0
  %4244 = vmatpush2.msra.mxu0 0.0
  %4245 = vmatprep.subr.mxu0 0.0
  %4246 = vmatpush2.msra.mxu0 0.0
  %4247 = vmatprep.mubr.f32.mxu0 0.0
  %4248 = vmatmul.mubr.f32.gmra.mxu0 %v4178
  %v4249 = vpop.f32.mrf.mxu0
  %v4250 = vadd.f32 %v4169, %v4249
  %v4251 = vpop.f32.mrf.mxu0
  %4252 = vmatprep.mubr.f32.mxu0 0.0
  %4253 = vmatmul.mubr.f32.gmra.mxu0 %v4181
  %v4254 = vpop.f32.mrf.mxu0
  %v4255 = vadd.f32 %v4174, %v4254
  %v4256 = vpop.f32.mrf.mxu0
  %4257 = vdwg.mxu0
  %4258 = vst [vmem:[%s28] sm:$0xff] %v4250
  %4259 = vst [vmem:[%s28 + $0x8] sm:$0xff] %v4255
  // Predicated region
  $region114: #{msbert_forward.1} parent=0 // pred_check
    _
  $region115: #{msbert_forward.1} parent=0 // pred_check_branch
    %4261 = sbr.rel (0) target = $region117
  $region116: #{msbert_forward.1} parent=0 // pred_region
    _
  $region117: #{msbert_forward.1} parent=0 // pred_fallthru
    _
  // Predicated region
  $region118: #{msbert_forward.1} parent=0 // pred_check
    _
  $region119: #{msbert_forward.1} parent=0 // pred_check_branch
    %4263 = sbr.rel (0) target = $region121
  $region120: #{msbert_forward.1} parent=0 // pred_region
    _
  $region121: #{msbert_forward.1} parent=0 // pred_fallthru
    _

</llo_original>
